<compile_context>
chip_gen: v6e
topology: v6e:2x2x1
jax: 0.10.0
libtpu: 0.0.40
codegen_flags: <defaults>
</compile_context>

<pallas_src>
import jax
import jax.numpy as jnp
from jax.experimental import pallas as pl
from jax.experimental.pallas import tpu as pltpu

NUM_LAYERS = 13
HIDDEN = 768
NUM_CLASS = 2
PROJ_K = 8                  # lane-padded projection width: cols 0:NUM_CLASS = fc, SUM_COL = row sum
SUM_COL = NUM_CLASS
MAX_BATCH_TILE = 128        # pass-1 batch tile; block fits every generation's scoped VMEM


def _proj_kernel(ht_ref, wk_ref, p_ref):
    """Pass 1: per-(layer, row) fc projection + exact row sum.

    ht_ref: [13, TB, H]       bf16/f32 CLS hidden states for one batch tile
    wk_ref: [H, PROJ_K]       f32, cols 0:NUM_CLASS = fc weight, rest zero
    p_ref : [13, TB, PROJ_K]  f32, cols 0:NUM_CLASS = fc proj, col SUM_COL = sum_h
    """
    wk = wk_ref[...]
    tb = ht_ref.shape[1]
    # Hoisted out of the layer loop (JAX does not CSE broadcasts).
    col = jax.lax.broadcasted_iota(jnp.int32, (tb, PROJ_K), 1)
    is_sum_col = col == SUM_COL
    for l in range(NUM_LAYERS):                                   # static unroll (13)
        x = ht_ref[l].astype(jnp.float32)                         # [TB, H]
        proj = jnp.dot(x, wk, preferred_element_type=jnp.float32)  # MXU, [TB, PROJ_K]
        row_sum = jnp.sum(x, axis=-1, keepdims=True)              # exact f32, [TB, 1]
        p_ref[l] = jnp.where(is_sum_col, row_sum, proj)


def _mix_kernel(p_ref, lw_ref, b_ref, out_ref):
    """Pass 2: softmax over layer logits + attention-weighted mix of projections.

    p_ref  : [13, Bp, PROJ_K] f32 (pass-1 output)
    lw_ref : [13, 1]          f32 per-layer mixing weights
    b_ref  : [1, PROJ_K]      f32 lane-padded fc bias
    out_ref: [Bp, PROJ_K]     f32 (cols 0:NUM_CLASS valid)
    """
    p = p_ref[...]
    row_sums = p[:, :, SUM_COL:SUM_COL + 1]                       # [13, Bp, 1]
    s = jnp.sum(jnp.sum(row_sums, axis=2), axis=1, keepdims=True)  # [13, 1]
    logits = lw_ref[...] * s                                      # [13, 1]
    m = jnp.max(logits)
    e = jnp.exp(logits - m)
    atten = e * pl.reciprocal(jnp.sum(e), approx=True)            # softmax, [13, 1]
    mixed = jnp.sum(p * atten[:, :, None], axis=0)                # [Bp, PROJ_K]
    # 5 eval-mode dropouts are identity, so the 5-way average collapses to fc(feature).
    out_ref[...] = mixed + b_ref[...]


def neuralnet_head(ht_cls, weights, fc_w, fc_b):
    """ht_cls: [13, B, H] (bf16 preferred, f32 ok); weights: [13, 1]; fc_w: [H, C]; fc_b: [1, C]."""
    num_layers, batch, hidden = ht_cls.shape
    num_class = fc_w.shape[1]
    assert num_layers == NUM_LAYERS and hidden == HIDDEN and num_class == NUM_CLASS

    # Lane-pad fc weight/bias so the tiny C=2 matmul is one [H, 8] MXU op and no
    # [*, 2]-lane tensors are ever stored.
    wk = jnp.zeros((hidden, PROJ_K), jnp.float32).at[:, :num_class].set(fc_w.astype(jnp.float32))
    bias = jnp.zeros((1, PROJ_K), jnp.float32).at[:, :num_class].set(
        fc_b.reshape(1, num_class).astype(jnp.float32))

    # Batch-tiled grid: software pipelining + VMEM O(tile) (v5e 16 MiB default scoped
    # limit, v7x 64 MiB physical VMEM are both respected).
    tb = min(batch, MAX_BATCH_TILE)
    pad = (-batch) % tb
    if pad:  # rare fallback so the tile divides the batch; padded rows are zero
        ht_cls = jnp.pad(ht_cls, ((0, 0), (0, pad), (0, 0)))
    batch_p = batch + pad
    num_tiles = batch_p // tb

    in_bytes = ht_cls.size * ht_cls.dtype.itemsize
    p_bytes = num_layers * batch_p * PROJ_K * 4

    proj = pl.pallas_call(
        _proj_kernel,
        out_shape=jax.ShapeDtypeStruct((num_layers, batch_p, PROJ_K), jnp.float32),
        grid_spec=pltpu.PrefetchScalarGridSpec(
            num_scalar_prefetch=0,
            grid=(num_tiles,),
            in_specs=[
                pl.BlockSpec((num_layers, tb, hidden), lambda i: (0, i, 0)),
                pl.BlockSpec((hidden, PROJ_K), lambda i: (0, 0)),
            ],
            out_specs=pl.BlockSpec((num_layers, tb, PROJ_K), lambda i: (0, i, 0)),
        ),
        compiler_params=pltpu.CompilerParams(
            dimension_semantics=("parallel",),      # independent batch tiles (megacore-friendly)
            vmem_limit_bytes=32 * 1024 * 1024,
        ),
        cost_estimate=pl.CostEstimate(
            flops=2 * num_layers * batch_p * hidden * PROJ_K,
            transcendentals=0,
            bytes_accessed=in_bytes + p_bytes + wk.size * 4,
        ),
    )(ht_cls, wk)

    vmem = pl.BlockSpec(memory_space=pltpu.MemorySpace.VMEM)
    out_pad = pl.pallas_call(
        _mix_kernel,
        out_shape=jax.ShapeDtypeStruct((batch_p, PROJ_K), jnp.float32),
        in_specs=[vmem, vmem, vmem],
        out_specs=vmem,
    )(proj, weights.astype(jnp.float32), bias)

    return out_pad[:batch, :num_class]


def reference_head(ht_cls, weights, fc_w, fc_b):
    logits = jnp.sum(ht_cls * weights[:, :, None], axis=(1, 2))   # [13]
    atten = jax.nn.softmax(logits)
    feature = jnp.sum(ht_cls * atten[:, None, None], axis=0)      # [B, H]
    return feature @ fc_w + fc_b.reshape(1, -1)


if __name__ == "__main__":
    key = jax.random.PRNGKey(0)
    k_hs, k_w, k_fw, k_fb = jax.random.split(key, 4)

    batch, seq = 2, 8
    # Synthesized BERT outputs: 13 layers of [B, seq, HIDDEN]; CLS token per layer.
    all_hidden_states = jax.random.normal(
        k_hs, (NUM_LAYERS, batch, seq, HIDDEN), dtype=jnp.float32)
    ht_cls = all_hidden_states[:, :, 0, :]                         # [13, B, 768]
    # Feed the kernel bf16 activations: the only large operand -> halves HBM bytes.
    ht_cls_bf16 = ht_cls.astype(jnp.bfloat16)

    weights = jax.random.uniform(k_w, (NUM_LAYERS, 1), dtype=jnp.float32)   # torch.rand(13, 1)
    fc_w = jax.random.normal(k_fw, (HIDDEN, NUM_CLASS), dtype=jnp.float32) * 0.02
    fc_b = jax.random.normal(k_fb, (1, NUM_CLASS), dtype=jnp.float32) * 0.02

    out = neuralnet_head(ht_cls_bf16, weights, fc_w, fc_b)
    out = jax.block_until_ready(out)

    # Reference computed in f32 on the same bf16-rounded activations.
    ref = reference_head(ht_cls_bf16.astype(jnp.float32), weights, fc_w, fc_b)
    assert out.shape == (batch, NUM_CLASS)
    assert jnp.allclose(out, ref, atol=2e-3, rtol=2e-3), (out, ref)

    print("KERNEL_OK")
</pallas_src>

<mosaic_0001>
module attributes {stable_mosaic.version = 11 : i64} {
  func.func @_proj_kernel(%arg0: i32, %arg1: memref<13x2x768xbf16, #tpu.memory_space<vmem>>, %arg2: memref<768x8xf32, #tpu.memory_space<vmem>>, %arg3: memref<13x2x8xf32, #tpu.memory_space<vmem>>) attributes {dimension_semantics = [#tpu.dimension_semantics<parallel>], iteration_bounds = array<i64: 1>, scalar_prefetch = 0 : i64, scratch_operands = 0 : i64, tpu.core_type = #tpu.core_type<tc>, window_params = [{transform_indices = @transform_0, window_bounds = array<i64: 13, 2, 768>}, {pipeline_mode = #tpu.pipeline_mode<synchronous>, transform_indices = @transform_1, window_bounds = array<i64: 768, 8>}, {transform_indices = @transform_2, window_bounds = array<i64: 13, 2, 8>}]} {
    %c0 = arith.constant 0 : index
    %c0_0 = arith.constant 0 : index
    %0 = vector.load %arg2[%c0, %c0_0] : memref<768x8xf32, #tpu.memory_space<vmem>>, vector<768x8xf32>
    %1 = tpu.iota {dimensions = array<i32: 1>} : vector<2x8xi32>
    %c2_i32 = arith.constant 2 : i32
    %2 = vector.broadcast %c2_i32 : i32 to vector<2x8xi32>
    %3 = arith.cmpi eq, %1, %2 : vector<2x8xi32>
    %c0_1 = arith.constant 0 : index
    %c0_2 = arith.constant 0 : index
    %c0_3 = arith.constant 0 : index
    %4 = vector.load %arg1[%c0_1, %c0_2, %c0_3] : memref<13x2x768xbf16, #tpu.memory_space<vmem>>, vector<1x2x768xbf16>
    %5 = vector.shape_cast %4 : vector<1x2x768xbf16> to vector<2x768xbf16>
    %6 = arith.extf %5 : vector<2x768xbf16> to vector<2x768xf32>
    %cst = arith.constant dense<0.000000e+00> : vector<2x8xf32>
    %7 = tpu.matmul %6, %0, %cst {dimension_numbers = #tpu.dot_dimension_numbers<[1], [0], [0], [1], [0, 0, 1, 1], [], []>} : vector<2x768xf32>, vector<768x8xf32>, vector<2x8xf32> -> vector<2x8xf32>
    %cst_4 = arith.constant dense<0.000000e+00> : vector<2xf32>
    %8 = vector.multi_reduction <add>, %6, %cst_4 [1] : vector<2x768xf32> to vector<2xf32>
    %9 = vector.shape_cast %8 : vector<2xf32> to vector<2x1xf32>
    %10 = vector.shape_cast %9 : vector<2x1xf32> to vector<2x1xf32>
    %11 = vector.broadcast %10 : vector<2x1xf32> to vector<2x8xf32>
    %12 = arith.select %3, %11, %7 : vector<2x8xi1>, vector<2x8xf32>
    %c0_5 = arith.constant 0 : index
    %c0_6 = arith.constant 0 : index
    %c0_7 = arith.constant 0 : index
    %13 = vector.load %arg3[%c0_5, %c0_6, %c0_7] : memref<13x2x8xf32, #tpu.memory_space<vmem>>, vector<1x2x8xf32>
    %14 = vector.shape_cast %13 : vector<1x2x8xf32> to vector<2x8xf32>
    %15 = vector.shape_cast %12 : vector<2x8xf32> to vector<1x2x8xf32>
    tpu.vector_store %arg3[%c0_5, %c0_6, %c0_7], %15 {strides = array<i32>} : memref<13x2x8xf32, #tpu.memory_space<vmem>>, vector<1x2x8xf32>,
    %c1 = arith.constant 1 : index
    %c0_8 = arith.constant 0 : index
    %c0_9 = arith.constant 0 : index
    %16 = vector.load %arg1[%c1, %c0_8, %c0_9] : memref<13x2x768xbf16, #tpu.memory_space<vmem>>, vector<1x2x768xbf16>
    %17 = vector.shape_cast %16 : vector<1x2x768xbf16> to vector<2x768xbf16>
    %18 = arith.extf %17 : vector<2x768xbf16> to vector<2x768xf32>
    %cst_10 = arith.constant dense<0.000000e+00> : vector<2x8xf32>
    %19 = tpu.matmul %18, %0, %cst_10 {dimension_numbers = #tpu.dot_dimension_numbers<[1], [0], [0], [1], [0, 0, 1, 1], [], []>} : vector<2x768xf32>, vector<768x8xf32>, vector<2x8xf32> -> vector<2x8xf32>
    %cst_11 = arith.constant dense<0.000000e+00> : vector<2xf32>
    %20 = vector.multi_reduction <add>, %18, %cst_11 [1] : vector<2x768xf32> to vector<2xf32>
    %21 = vector.shape_cast %20 : vector<2xf32> to vector<2x1xf32>
    %22 = vector.shape_cast %21 : vector<2x1xf32> to vector<2x1xf32>
    %23 = vector.broadcast %22 : vector<2x1xf32> to vector<2x8xf32>
    %24 = arith.select %3, %23, %19 : vector<2x8xi1>, vector<2x8xf32>
    %c1_12 = arith.constant 1 : index
    %c0_13 = arith.constant 0 : index
    %c0_14 = arith.constant 0 : index
    %25 = vector.load %arg3[%c1_12, %c0_13, %c0_14] : memref<13x2x8xf32, #tpu.memory_space<vmem>>, vector<1x2x8xf32>
    %26 = vector.shape_cast %25 : vector<1x2x8xf32> to vector<2x8xf32>
    %27 = vector.shape_cast %24 : vector<2x8xf32> to vector<1x2x8xf32>
    tpu.vector_store %arg3[%c1_12, %c0_13, %c0_14], %27 {strides = array<i32>} : memref<13x2x8xf32, #tpu.memory_space<vmem>>, vector<1x2x8xf32>,
    %c2 = arith.constant 2 : index
    %c0_15 = arith.constant 0 : index
    %c0_16 = arith.constant 0 : index
    %28 = vector.load %arg1[%c2, %c0_15, %c0_16] : memref<13x2x768xbf16, #tpu.memory_space<vmem>>, vector<1x2x768xbf16>
    %29 = vector.shape_cast %28 : vector<1x2x768xbf16> to vector<2x768xbf16>
    %30 = arith.extf %29 : vector<2x768xbf16> to vector<2x768xf32>
    %cst_17 = arith.constant dense<0.000000e+00> : vector<2x8xf32>
    %31 = tpu.matmul %30, %0, %cst_17 {dimension_numbers = #tpu.dot_dimension_numbers<[1], [0], [0], [1], [0, 0, 1, 1], [], []>} : vector<2x768xf32>, vector<768x8xf32>, vector<2x8xf32> -> vector<2x8xf32>
    %cst_18 = arith.constant dense<0.000000e+00> : vector<2xf32>
    %32 = vector.multi_reduction <add>, %30, %cst_18 [1] : vector<2x768xf32> to vector<2xf32>
    %33 = vector.shape_cast %32 : vector<2xf32> to vector<2x1xf32>
    %34 = vector.shape_cast %33 : vector<2x1xf32> to vector<2x1xf32>
    %35 = vector.broadcast %34 : vector<2x1xf32> to vector<2x8xf32>
    %36 = arith.select %3, %35, %31 : vector<2x8xi1>, vector<2x8xf32>
    %c2_19 = arith.constant 2 : index
    %c0_20 = arith.constant 0 : index
    %c0_21 = arith.constant 0 : index
    %37 = vector.load %arg3[%c2_19, %c0_20, %c0_21] : memref<13x2x8xf32, #tpu.memory_space<vmem>>, vector<1x2x8xf32>
    %38 = vector.shape_cast %37 : vector<1x2x8xf32> to vector<2x8xf32>
    %39 = vector.shape_cast %36 : vector<2x8xf32> to vector<1x2x8xf32>
    tpu.vector_store %arg3[%c2_19, %c0_20, %c0_21], %39 {strides = array<i32>} : memref<13x2x8xf32, #tpu.memory_space<vmem>>, vector<1x2x8xf32>,
    %c3 = arith.constant 3 : index
    %c0_22 = arith.constant 0 : index
    %c0_23 = arith.constant 0 : index
    %40 = vector.load %arg1[%c3, %c0_22, %c0_23] : memref<13x2x768xbf16, #tpu.memory_space<vmem>>, vector<1x2x768xbf16>
    %41 = vector.shape_cast %40 : vector<1x2x768xbf16> to vector<2x768xbf16>
    %42 = arith.extf %41 : vector<2x768xbf16> to vector<2x768xf32>
    %cst_24 = arith.constant dense<0.000000e+00> : vector<2x8xf32>
    %43 = tpu.matmul %42, %0, %cst_24 {dimension_numbers = #tpu.dot_dimension_numbers<[1], [0], [0], [1], [0, 0, 1, 1], [], []>} : vector<2x768xf32>, vector<768x8xf32>, vector<2x8xf32> -> vector<2x8xf32>
    %cst_25 = arith.constant dense<0.000000e+00> : vector<2xf32>
    %44 = vector.multi_reduction <add>, %42, %cst_25 [1] : vector<2x768xf32> to vector<2xf32>
    %45 = vector.shape_cast %44 : vector<2xf32> to vector<2x1xf32>
    %46 = vector.shape_cast %45 : vector<2x1xf32> to vector<2x1xf32>
    %47 = vector.broadcast %46 : vector<2x1xf32> to vector<2x8xf32>
    %48 = arith.select %3, %47, %43 : vector<2x8xi1>, vector<2x8xf32>
    %c3_26 = arith.constant 3 : index
    %c0_27 = arith.constant 0 : index
    %c0_28 = arith.constant 0 : index
    %49 = vector.load %arg3[%c3_26, %c0_27, %c0_28] : memref<13x2x8xf32, #tpu.memory_space<vmem>>, vector<1x2x8xf32>
    %50 = vector.shape_cast %49 : vector<1x2x8xf32> to vector<2x8xf32>
    %51 = vector.shape_cast %48 : vector<2x8xf32> to vector<1x2x8xf32>
    tpu.vector_store %arg3[%c3_26, %c0_27, %c0_28], %51 {strides = array<i32>} : memref<13x2x8xf32, #tpu.memory_space<vmem>>, vector<1x2x8xf32>,
    %c4 = arith.constant 4 : index
    %c0_29 = arith.constant 0 : index
    %c0_30 = arith.constant 0 : index
    %52 = vector.load %arg1[%c4, %c0_29, %c0_30] : memref<13x2x768xbf16, #tpu.memory_space<vmem>>, vector<1x2x768xbf16>
    %53 = vector.shape_cast %52 : vector<1x2x768xbf16> to vector<2x768xbf16>
    %54 = arith.extf %53 : vector<2x768xbf16> to vector<2x768xf32>
    %cst_31 = arith.constant dense<0.000000e+00> : vector<2x8xf32>
    %55 = tpu.matmul %54, %0, %cst_31 {dimension_numbers = #tpu.dot_dimension_numbers<[1], [0], [0], [1], [0, 0, 1, 1], [], []>} : vector<2x768xf32>, vector<768x8xf32>, vector<2x8xf32> -> vector<2x8xf32>
    %cst_32 = arith.constant dense<0.000000e+00> : vector<2xf32>
    %56 = vector.multi_reduction <add>, %54, %cst_32 [1] : vector<2x768xf32> to vector<2xf32>
    %57 = vector.shape_cast %56 : vector<2xf32> to vector<2x1xf32>
    %58 = vector.shape_cast %57 : vector<2x1xf32> to vector<2x1xf32>
    %59 = vector.broadcast %58 : vector<2x1xf32> to vector<2x8xf32>
    %60 = arith.select %3, %59, %55 : vector<2x8xi1>, vector<2x8xf32>
    %c4_33 = arith.constant 4 : index
    %c0_34 = arith.constant 0 : index
    %c0_35 = arith.constant 0 : index
    %61 = vector.load %arg3[%c4_33, %c0_34, %c0_35] : memref<13x2x8xf32, #tpu.memory_space<vmem>>, vector<1x2x8xf32>
    %62 = vector.shape_cast %61 : vector<1x2x8xf32> to vector<2x8xf32>
    %63 = vector.shape_cast %60 : vector<2x8xf32> to vector<1x2x8xf32>
    tpu.vector_store %arg3[%c4_33, %c0_34, %c0_35], %63 {strides = array<i32>} : memref<13x2x8xf32, #tpu.memory_space<vmem>>, vector<1x2x8xf32>,
    %c5 = arith.constant 5 : index
    %c0_36 = arith.constant 0 : index
    %c0_37 = arith.constant 0 : index
    %64 = vector.load %arg1[%c5, %c0_36, %c0_37] : memref<13x2x768xbf16, #tpu.memory_space<vmem>>, vector<1x2x768xbf16>
    %65 = vector.shape_cast %64 : vector<1x2x768xbf16> to vector<2x768xbf16>
    %66 = arith.extf %65 : vector<2x768xbf16> to vector<2x768xf32>
    %cst_38 = arith.constant dense<0.000000e+00> : vector<2x8xf32>
    %67 = tpu.matmul %66, %0, %cst_38 {dimension_numbers = #tpu.dot_dimension_numbers<[1], [0], [0], [1], [0, 0, 1, 1], [], []>} : vector<2x768xf32>, vector<768x8xf32>, vector<2x8xf32> -> vector<2x8xf32>
    %cst_39 = arith.constant dense<0.000000e+00> : vector<2xf32>
    %68 = vector.multi_reduction <add>, %66, %cst_39 [1] : vector<2x768xf32> to vector<2xf32>
    %69 = vector.shape_cast %68 : vector<2xf32> to vector<2x1xf32>
    %70 = vector.shape_cast %69 : vector<2x1xf32> to vector<2x1xf32>
    %71 = vector.broadcast %70 : vector<2x1xf32> to vector<2x8xf32>
    %72 = arith.select %3, %71, %67 : vector<2x8xi1>, vector<2x8xf32>
    %c5_40 = arith.constant 5 : index
    %c0_41 = arith.constant 0 : index
    %c0_42 = arith.constant 0 : index
    %73 = vector.load %arg3[%c5_40, %c0_41, %c0_42] : memref<13x2x8xf32, #tpu.memory_space<vmem>>, vector<1x2x8xf32>
    %74 = vector.shape_cast %73 : vector<1x2x8xf32> to vector<2x8xf32>
    %75 = vector.shape_cast %72 : vector<2x8xf32> to vector<1x2x8xf32>
    tpu.vector_store %arg3[%c5_40, %c0_41, %c0_42], %75 {strides = array<i32>} : memref<13x2x8xf32, #tpu.memory_space<vmem>>, vector<1x2x8xf32>,
    %c6 = arith.constant 6 : index
    %c0_43 = arith.constant 0 : index
    %c0_44 = arith.constant 0 : index
    %76 = vector.load %arg1[%c6, %c0_43, %c0_44] : memref<13x2x768xbf16, #tpu.memory_space<vmem>>, vector<1x2x768xbf16>
    %77 = vector.shape_cast %76 : vector<1x2x768xbf16> to vector<2x768xbf16>
    %78 = arith.extf %77 : vector<2x768xbf16> to vector<2x768xf32>
    %cst_45 = arith.constant dense<0.000000e+00> : vector<2x8xf32>
    %79 = tpu.matmul %78, %0, %cst_45 {dimension_numbers = #tpu.dot_dimension_numbers<[1], [0], [0], [1], [0, 0, 1, 1], [], []>} : vector<2x768xf32>, vector<768x8xf32>, vector<2x8xf32> -> vector<2x8xf32>
    %cst_46 = arith.constant dense<0.000000e+00> : vector<2xf32>
    %80 = vector.multi_reduction <add>, %78, %cst_46 [1] : vector<2x768xf32> to vector<2xf32>
    %81 = vector.shape_cast %80 : vector<2xf32> to vector<2x1xf32>
    %82 = vector.shape_cast %81 : vector<2x1xf32> to vector<2x1xf32>
    %83 = vector.broadcast %82 : vector<2x1xf32> to vector<2x8xf32>
    %84 = arith.select %3, %83, %79 : vector<2x8xi1>, vector<2x8xf32>
    %c6_47 = arith.constant 6 : index
    %c0_48 = arith.constant 0 : index
    %c0_49 = arith.constant 0 : index
    %85 = vector.load %arg3[%c6_47, %c0_48, %c0_49] : memref<13x2x8xf32, #tpu.memory_space<vmem>>, vector<1x2x8xf32>
    %86 = vector.shape_cast %85 : vector<1x2x8xf32> to vector<2x8xf32>
    %87 = vector.shape_cast %84 : vector<2x8xf32> to vector<1x2x8xf32>
    tpu.vector_store %arg3[%c6_47, %c0_48, %c0_49], %87 {strides = array<i32>} : memref<13x2x8xf32, #tpu.memory_space<vmem>>, vector<1x2x8xf32>,
    %c7 = arith.constant 7 : index
    %c0_50 = arith.constant 0 : index
    %c0_51 = arith.constant 0 : index
    %88 = vector.load %arg1[%c7, %c0_50, %c0_51] : memref<13x2x768xbf16, #tpu.memory_space<vmem>>, vector<1x2x768xbf16>
    %89 = vector.shape_cast %88 : vector<1x2x768xbf16> to vector<2x768xbf16>
    %90 = arith.extf %89 : vector<2x768xbf16> to vector<2x768xf32>
    %cst_52 = arith.constant dense<0.000000e+00> : vector<2x8xf32>
    %91 = tpu.matmul %90, %0, %cst_52 {dimension_numbers = #tpu.dot_dimension_numbers<[1], [0], [0], [1], [0, 0, 1, 1], [], []>} : vector<2x768xf32>, vector<768x8xf32>, vector<2x8xf32> -> vector<2x8xf32>
    %cst_53 = arith.constant dense<0.000000e+00> : vector<2xf32>
    %92 = vector.multi_reduction <add>, %90, %cst_53 [1] : vector<2x768xf32> to vector<2xf32>
    %93 = vector.shape_cast %92 : vector<2xf32> to vector<2x1xf32>
    %94 = vector.shape_cast %93 : vector<2x1xf32> to vector<2x1xf32>
    %95 = vector.broadcast %94 : vector<2x1xf32> to vector<2x8xf32>
    %96 = arith.select %3, %95, %91 : vector<2x8xi1>, vector<2x8xf32>
    %c7_54 = arith.constant 7 : index
    %c0_55 = arith.constant 0 : index
    %c0_56 = arith.constant 0 : index
    %97 = vector.load %arg3[%c7_54, %c0_55, %c0_56] : memref<13x2x8xf32, #tpu.memory_space<vmem>>, vector<1x2x8xf32>
    %98 = vector.shape_cast %97 : vector<1x2x8xf32> to vector<2x8xf32>
    %99 = vector.shape_cast %96 : vector<2x8xf32> to vector<1x2x8xf32>
    tpu.vector_store %arg3[%c7_54, %c0_55, %c0_56], %99 {strides = array<i32>} : memref<13x2x8xf32, #tpu.memory_space<vmem>>, vector<1x2x8xf32>,
    %c8 = arith.constant 8 : index
    %c0_57 = arith.constant 0 : index
    %c0_58 = arith.constant 0 : index
    %100 = vector.load %arg1[%c8, %c0_57, %c0_58] : memref<13x2x768xbf16, #tpu.memory_space<vmem>>, vector<1x2x768xbf16>
    %101 = vector.shape_cast %100 : vector<1x2x768xbf16> to vector<2x768xbf16>
    %102 = arith.extf %101 : vector<2x768xbf16> to vector<2x768xf32>
    %cst_59 = arith.constant dense<0.000000e+00> : vector<2x8xf32>
    %103 = tpu.matmul %102, %0, %cst_59 {dimension_numbers = #tpu.dot_dimension_numbers<[1], [0], [0], [1], [0, 0, 1, 1], [], []>} : vector<2x768xf32>, vector<768x8xf32>, vector<2x8xf32> -> vector<2x8xf32>
    %cst_60 = arith.constant dense<0.000000e+00> : vector<2xf32>
    %104 = vector.multi_reduction <add>, %102, %cst_60 [1] : vector<2x768xf32> to vector<2xf32>
    %105 = vector.shape_cast %104 : vector<2xf32> to vector<2x1xf32>
    %106 = vector.shape_cast %105 : vector<2x1xf32> to vector<2x1xf32>
    %107 = vector.broadcast %106 : vector<2x1xf32> to vector<2x8xf32>
    %108 = arith.select %3, %107, %103 : vector<2x8xi1>, vector<2x8xf32>
    %c8_61 = arith.constant 8 : index
    %c0_62 = arith.constant 0 : index
    %c0_63 = arith.constant 0 : index
    %109 = vector.load %arg3[%c8_61, %c0_62, %c0_63] : memref<13x2x8xf32, #tpu.memory_space<vmem>>, vector<1x2x8xf32>
    %110 = vector.shape_cast %109 : vector<1x2x8xf32> to vector<2x8xf32>
    %111 = vector.shape_cast %108 : vector<2x8xf32> to vector<1x2x8xf32>
    tpu.vector_store %arg3[%c8_61, %c0_62, %c0_63], %111 {strides = array<i32>} : memref<13x2x8xf32, #tpu.memory_space<vmem>>, vector<1x2x8xf32>,
    %c9 = arith.constant 9 : index
    %c0_64 = arith.constant 0 : index
    %c0_65 = arith.constant 0 : index
    %112 = vector.load %arg1[%c9, %c0_64, %c0_65] : memref<13x2x768xbf16, #tpu.memory_space<vmem>>, vector<1x2x768xbf16>
    %113 = vector.shape_cast %112 : vector<1x2x768xbf16> to vector<2x768xbf16>
    %114 = arith.extf %113 : vector<2x768xbf16> to vector<2x768xf32>
    %cst_66 = arith.constant dense<0.000000e+00> : vector<2x8xf32>
    %115 = tpu.matmul %114, %0, %cst_66 {dimension_numbers = #tpu.dot_dimension_numbers<[1], [0], [0], [1], [0, 0, 1, 1], [], []>} : vector<2x768xf32>, vector<768x8xf32>, vector<2x8xf32> -> vector<2x8xf32>
    %cst_67 = arith.constant dense<0.000000e+00> : vector<2xf32>
    %116 = vector.multi_reduction <add>, %114, %cst_67 [1] : vector<2x768xf32> to vector<2xf32>
    %117 = vector.shape_cast %116 : vector<2xf32> to vector<2x1xf32>
    %118 = vector.shape_cast %117 : vector<2x1xf32> to vector<2x1xf32>
    %119 = vector.broadcast %118 : vector<2x1xf32> to vector<2x8xf32>
    %120 = arith.select %3, %119, %115 : vector<2x8xi1>, vector<2x8xf32>
    %c9_68 = arith.constant 9 : index
    %c0_69 = arith.constant 0 : index
    %c0_70 = arith.constant 0 : index
    %121 = vector.load %arg3[%c9_68, %c0_69, %c0_70] : memref<13x2x8xf32, #tpu.memory_space<vmem>>, vector<1x2x8xf32>
    %122 = vector.shape_cast %121 : vector<1x2x8xf32> to vector<2x8xf32>
    %123 = vector.shape_cast %120 : vector<2x8xf32> to vector<1x2x8xf32>
    tpu.vector_store %arg3[%c9_68, %c0_69, %c0_70], %123 {strides = array<i32>} : memref<13x2x8xf32, #tpu.memory_space<vmem>>, vector<1x2x8xf32>,
    %c10 = arith.constant 10 : index
    %c0_71 = arith.constant 0 : index
    %c0_72 = arith.constant 0 : index
    %124 = vector.load %arg1[%c10, %c0_71, %c0_72] : memref<13x2x768xbf16, #tpu.memory_space<vmem>>, vector<1x2x768xbf16>
    %125 = vector.shape_cast %124 : vector<1x2x768xbf16> to vector<2x768xbf16>
    %126 = arith.extf %125 : vector<2x768xbf16> to vector<2x768xf32>
    %cst_73 = arith.constant dense<0.000000e+00> : vector<2x8xf32>
    %127 = tpu.matmul %126, %0, %cst_73 {dimension_numbers = #tpu.dot_dimension_numbers<[1], [0], [0], [1], [0, 0, 1, 1], [], []>} : vector<2x768xf32>, vector<768x8xf32>, vector<2x8xf32> -> vector<2x8xf32>
    %cst_74 = arith.constant dense<0.000000e+00> : vector<2xf32>
    %128 = vector.multi_reduction <add>, %126, %cst_74 [1] : vector<2x768xf32> to vector<2xf32>
    %129 = vector.shape_cast %128 : vector<2xf32> to vector<2x1xf32>
    %130 = vector.shape_cast %129 : vector<2x1xf32> to vector<2x1xf32>
    %131 = vector.broadcast %130 : vector<2x1xf32> to vector<2x8xf32>
    %132 = arith.select %3, %131, %127 : vector<2x8xi1>, vector<2x8xf32>
    %c10_75 = arith.constant 10 : index
    %c0_76 = arith.constant 0 : index
    %c0_77 = arith.constant 0 : index
    %133 = vector.load %arg3[%c10_75, %c0_76, %c0_77] : memref<13x2x8xf32, #tpu.memory_space<vmem>>, vector<1x2x8xf32>
    %134 = vector.shape_cast %133 : vector<1x2x8xf32> to vector<2x8xf32>
    %135 = vector.shape_cast %132 : vector<2x8xf32> to vector<1x2x8xf32>
    tpu.vector_store %arg3[%c10_75, %c0_76, %c0_77], %135 {strides = array<i32>} : memref<13x2x8xf32, #tpu.memory_space<vmem>>, vector<1x2x8xf32>,
    %c11 = arith.constant 11 : index
    %c0_78 = arith.constant 0 : index
    %c0_79 = arith.constant 0 : index
    %136 = vector.load %arg1[%c11, %c0_78, %c0_79] : memref<13x2x768xbf16, #tpu.memory_space<vmem>>, vector<1x2x768xbf16>
    %137 = vector.shape_cast %136 : vector<1x2x768xbf16> to vector<2x768xbf16>
    %138 = arith.extf %137 : vector<2x768xbf16> to vector<2x768xf32>
    %cst_80 = arith.constant dense<0.000000e+00> : vector<2x8xf32>
    %139 = tpu.matmul %138, %0, %cst_80 {dimension_numbers = #tpu.dot_dimension_numbers<[1], [0], [0], [1], [0, 0, 1, 1], [], []>} : vector<2x768xf32>, vector<768x8xf32>, vector<2x8xf32> -> vector<2x8xf32>
    %cst_81 = arith.constant dense<0.000000e+00> : vector<2xf32>
    %140 = vector.multi_reduction <add>, %138, %cst_81 [1] : vector<2x768xf32> to vector<2xf32>
    %141 = vector.shape_cast %140 : vector<2xf32> to vector<2x1xf32>
    %142 = vector.shape_cast %141 : vector<2x1xf32> to vector<2x1xf32>
    %143 = vector.broadcast %142 : vector<2x1xf32> to vector<2x8xf32>
    %144 = arith.select %3, %143, %139 : vector<2x8xi1>, vector<2x8xf32>
    %c11_82 = arith.constant 11 : index
    %c0_83 = arith.constant 0 : index
    %c0_84 = arith.constant 0 : index
    %145 = vector.load %arg3[%c11_82, %c0_83, %c0_84] : memref<13x2x8xf32, #tpu.memory_space<vmem>>, vector<1x2x8xf32>
    %146 = vector.shape_cast %145 : vector<1x2x8xf32> to vector<2x8xf32>
    %147 = vector.shape_cast %144 : vector<2x8xf32> to vector<1x2x8xf32>
    tpu.vector_store %arg3[%c11_82, %c0_83, %c0_84], %147 {strides = array<i32>} : memref<13x2x8xf32, #tpu.memory_space<vmem>>, vector<1x2x8xf32>,
    %c12 = arith.constant 12 : index
    %c0_85 = arith.constant 0 : index
    %c0_86 = arith.constant 0 : index
    %148 = vector.load %arg1[%c12, %c0_85, %c0_86] : memref<13x2x768xbf16, #tpu.memory_space<vmem>>, vector<1x2x768xbf16>
    %149 = vector.shape_cast %148 : vector<1x2x768xbf16> to vector<2x768xbf16>
    %150 = arith.extf %149 : vector<2x768xbf16> to vector<2x768xf32>
    %cst_87 = arith.constant dense<0.000000e+00> : vector<2x8xf32>
    %151 = tpu.matmul %150, %0, %cst_87 {dimension_numbers = #tpu.dot_dimension_numbers<[1], [0], [0], [1], [0, 0, 1, 1], [], []>} : vector<2x768xf32>, vector<768x8xf32>, vector<2x8xf32> -> vector<2x8xf32>
    %cst_88 = arith.constant dense<0.000000e+00> : vector<2xf32>
    %152 = vector.multi_reduction <add>, %150, %cst_88 [1] : vector<2x768xf32> to vector<2xf32>
    %153 = vector.shape_cast %152 : vector<2xf32> to vector<2x1xf32>
    %154 = vector.shape_cast %153 : vector<2x1xf32> to vector<2x1xf32>
    %155 = vector.broadcast %154 : vector<2x1xf32> to vector<2x8xf32>
    %156 = arith.select %3, %155, %151 : vector<2x8xi1>, vector<2x8xf32>
    %c12_89 = arith.constant 12 : index
    %c0_90 = arith.constant 0 : index
    %c0_91 = arith.constant 0 : index
    %157 = vector.load %arg3[%c12_89, %c0_90, %c0_91] : memref<13x2x8xf32, #tpu.memory_space<vmem>>, vector<1x2x8xf32>
    %158 = vector.shape_cast %157 : vector<1x2x8xf32> to vector<2x8xf32>
    %159 = vector.shape_cast %156 : vector<2x8xf32> to vector<1x2x8xf32>
    tpu.vector_store %arg3[%c12_89, %c0_90, %c0_91], %159 {strides = array<i32>} : memref<13x2x8xf32, #tpu.memory_space<vmem>>, vector<1x2x8xf32>,
    return
  }
  func.func @transform_0(%arg0: i32) -> (i32, i32, i32) {
    %c0_i32 = arith.constant 0 : i32
    %c0_i32_0 = arith.constant 0 : i32
    %c0_i32_1 = arith.constant 0 : i32
    return %c0_i32, %arg0, %c0_i32_0 : i32, i32, i32
  }
  func.func @transform_1(%arg0: i32) -> (i32, i32) {
    %c0_i32 = arith.constant 0 : i32
    %c0_i32_0 = arith.constant 0 : i32
    %c0_i32_1 = arith.constant 0 : i32
    return %c0_i32, %c0_i32_0 : i32, i32
  }
  func.func @transform_2(%arg0: i32) -> (i32, i32, i32) {
    %c0_i32 = arith.constant 0 : i32
    %c0_i32_0 = arith.constant 0 : i32
    %c0_i32_1 = arith.constant 0 : i32
    return %c0_i32, %arg0, %c0_i32_0 : i32, i32, i32
  }
}

</mosaic_0001>

<llo_original>
// kernel: tpu_custom_call.1
$region0: #{tpu_custom_call.1}
  #allocation0 [shape = 'u32[]', space=smem, size = 0x4, offset = 0x4, fixed_abs, tag = 'smem constant byte address 0x4 - core index']
  #allocation1 [shape = 'u32[144,128]{1,0:T(1,128)}', space=vmem, size = 0x12000, scoped, tag = 'internal scratch']
  %s0 = inlined_call_operand.vmem [shape: bf16[13,2,768], index: 0, kind: input, shape index: {}]
  %s1 = inlined_call_operand.vmem [shape: f32[768,8], index: 1, kind: input, shape index: {}]
  %s2 = inlined_call_operand.vmem [shape: f32[13,2,8], index: 2, kind: output, shape index: {}]
  %s3 = sld [smem:[#allocation0]]
  $region18: #{tpu_custom_call.1} parent=0
    _
  %s5 = ssub.s32 1, %s3
  %s6 = scalar_select 0, %s5, %s3
  // Predicated region
  $region2: #{tpu_custom_call.1} parent=0 // pred_check
    _
  $region3: #{tpu_custom_call.1} parent=0 // pred_check_branch
    %8 = sbr.rel (0) target = $region5
  $region4: #{tpu_custom_call.1} parent=0 // pred_region
    _
  $region5: #{tpu_custom_call.1} parent=0 // pred_fallthru
    _
  // Predicated region
  $region6: #{tpu_custom_call.1} parent=0 // pred_check
    _
  $region7: #{tpu_custom_call.1} parent=0 // pred_check_branch
    %10 = sbr.rel (0) target = $region9
  $region8: #{tpu_custom_call.1} parent=0 // pred_region
    _
  $region9: #{tpu_custom_call.1} parent=0 // pred_fallthru
    _
  %v11 = vld [vmem:[%s1] sm:$0xff]
  %v12 = vld [vmem:[%s1 + $0x8] sm:$0xff]
  %v13 = vld [vmem:[%s1 + $0x10] sm:$0xff]
  %v14 = vld [vmem:[%s1 + $0x18] sm:$0xff]
  %v15 = vld [vmem:[%s1 + $0x20] sm:$0xff]
  %v16 = vld [vmem:[%s1 + $0x28] sm:$0xff]
  %v17 = vld [vmem:[%s1 + $0x30] sm:$0xff]
  %v18 = vld [vmem:[%s1 + $0x38] sm:$0xff]
  %v19 = vld [vmem:[%s1 + $0x40] sm:$0xff]
  %v20 = vld [vmem:[%s1 + $0x48] sm:$0xff]
  %v21 = vld [vmem:[%s1 + $0x50] sm:$0xff]
  %v22 = vld [vmem:[%s1 + $0x58] sm:$0xff]
  %v23 = vld [vmem:[%s1 + $0x60] sm:$0xff]
  %v24 = vld [vmem:[%s1 + $0x68] sm:$0xff]
  %v25 = vld [vmem:[%s1 + $0x70] sm:$0xff]
  %v26 = vld [vmem:[%s1 + $0x78] sm:$0xff]
  %v27 = vld [vmem:[%s1 + $0x80] sm:$0xff]
  %v28 = vld [vmem:[%s1 + $0x88] sm:$0xff]
  %v29 = vld [vmem:[%s1 + $0x90] sm:$0xff]
  %v30 = vld [vmem:[%s1 + $0x98] sm:$0xff]
  %v31 = vld [vmem:[%s1 + $0xa0] sm:$0xff]
  %v32 = vld [vmem:[%s1 + $0xa8] sm:$0xff]
  %v33 = vld [vmem:[%s1 + $0xb0] sm:$0xff]
  %v34 = vld [vmem:[%s1 + $0xb8] sm:$0xff]
  %v35 = vld [vmem:[%s1 + $0xc0] sm:$0xff]
  %v36 = vld [vmem:[%s1 + $0xc8] sm:$0xff]
  %v37 = vld [vmem:[%s1 + $0xd0] sm:$0xff]
  %v38 = vld [vmem:[%s1 + $0xd8] sm:$0xff]
  %v39 = vld [vmem:[%s1 + $0xe0] sm:$0xff]
  %v40 = vld [vmem:[%s1 + $0xe8] sm:$0xff]
  %v41 = vld [vmem:[%s1 + $0xf0] sm:$0xff]
  %v42 = vld [vmem:[%s1 + $0xf8] sm:$0xff]
  %v43 = vld [vmem:[%s1 + $0x100] sm:$0xff]
  %v44 = vld [vmem:[%s1 + $0x108] sm:$0xff]
  %v45 = vld [vmem:[%s1 + $0x110] sm:$0xff]
  %v46 = vld [vmem:[%s1 + $0x118] sm:$0xff]
  %v47 = vld [vmem:[%s1 + $0x120] sm:$0xff]
  %v48 = vld [vmem:[%s1 + $0x128] sm:$0xff]
  %v49 = vld [vmem:[%s1 + $0x130] sm:$0xff]
  %v50 = vld [vmem:[%s1 + $0x138] sm:$0xff]
  %v51 = vld [vmem:[%s1 + $0x140] sm:$0xff]
  %v52 = vld [vmem:[%s1 + $0x148] sm:$0xff]
  %v53 = vld [vmem:[%s1 + $0x150] sm:$0xff]
  %v54 = vld [vmem:[%s1 + $0x158] sm:$0xff]
  %v55 = vld [vmem:[%s1 + $0x160] sm:$0xff]
  %v56 = vld [vmem:[%s1 + $0x168] sm:$0xff]
  %v57 = vld [vmem:[%s1 + $0x170] sm:$0xff]
  %v58 = vld [vmem:[%s1 + $0x178] sm:$0xff]
  %v59 = vld [vmem:[%s1 + $0x180] sm:$0xff]
  %v60 = vld [vmem:[%s1 + $0x188] sm:$0xff]
  %v61 = vld [vmem:[%s1 + $0x190] sm:$0xff]
  %v62 = vld [vmem:[%s1 + $0x198] sm:$0xff]
  %v63 = vld [vmem:[%s1 + $0x1a0] sm:$0xff]
  %v64 = vld [vmem:[%s1 + $0x1a8] sm:$0xff]
  %v65 = vld [vmem:[%s1 + $0x1b0] sm:$0xff]
  %v66 = vld [vmem:[%s1 + $0x1b8] sm:$0xff]
  %v67 = vld [vmem:[%s1 + $0x1c0] sm:$0xff]
  %v68 = vld [vmem:[%s1 + $0x1c8] sm:$0xff]
  %v69 = vld [vmem:[%s1 + $0x1d0] sm:$0xff]
  %v70 = vld [vmem:[%s1 + $0x1d8] sm:$0xff]
  %v71 = vld [vmem:[%s1 + $0x1e0] sm:$0xff]
  %v72 = vld [vmem:[%s1 + $0x1e8] sm:$0xff]
  %v73 = vld [vmem:[%s1 + $0x1f0] sm:$0xff]
  %v74 = vld [vmem:[%s1 + $0x1f8] sm:$0xff]
  %v75 = vld [vmem:[%s1 + $0x200] sm:$0xff]
  %v76 = vld [vmem:[%s1 + $0x208] sm:$0xff]
  %v77 = vld [vmem:[%s1 + $0x210] sm:$0xff]
  %v78 = vld [vmem:[%s1 + $0x218] sm:$0xff]
  %v79 = vld [vmem:[%s1 + $0x220] sm:$0xff]
  %v80 = vld [vmem:[%s1 + $0x228] sm:$0xff]
  %v81 = vld [vmem:[%s1 + $0x230] sm:$0xff]
  %v82 = vld [vmem:[%s1 + $0x238] sm:$0xff]
  %v83 = vld [vmem:[%s1 + $0x240] sm:$0xff]
  %v84 = vld [vmem:[%s1 + $0x248] sm:$0xff]
  %v85 = vld [vmem:[%s1 + $0x250] sm:$0xff]
  %v86 = vld [vmem:[%s1 + $0x258] sm:$0xff]
  %v87 = vld [vmem:[%s1 + $0x260] sm:$0xff]
  %v88 = vld [vmem:[%s1 + $0x268] sm:$0xff]
  %v89 = vld [vmem:[%s1 + $0x270] sm:$0xff]
  %v90 = vld [vmem:[%s1 + $0x278] sm:$0xff]
  %v91 = vld [vmem:[%s1 + $0x280] sm:$0xff]
  %v92 = vld [vmem:[%s1 + $0x288] sm:$0xff]
  %v93 = vld [vmem:[%s1 + $0x290] sm:$0xff]
  %v94 = vld [vmem:[%s1 + $0x298] sm:$0xff]
  %v95 = vld [vmem:[%s1 + $0x2a0] sm:$0xff]
  %v96 = vld [vmem:[%s1 + $0x2a8] sm:$0xff]
  %v97 = vld [vmem:[%s1 + $0x2b0] sm:$0xff]
  %v98 = vld [vmem:[%s1 + $0x2b8] sm:$0xff]
  %v99 = vld [vmem:[%s1 + $0x2c0] sm:$0xff]
  %v100 = vld [vmem:[%s1 + $0x2c8] sm:$0xff]
  %v101 = vld [vmem:[%s1 + $0x2d0] sm:$0xff]
  %v102 = vld [vmem:[%s1 + $0x2d8] sm:$0xff]
  %v103 = vld [vmem:[%s1 + $0x2e0] sm:$0xff]
  %v104 = vld [vmem:[%s1 + $0x2e8] sm:$0xff]
  %v105 = vld [vmem:[%s1 + $0x2f0] sm:$0xff]
  %v106 = vld [vmem:[%s1 + $0x2f8] sm:$0xff]
  %v107 = vlaneseq
  %v108 = vand.u32 %v107, 127
  %vm109 = vcmp.eq.s32.totalorder %v108, 2
  %v110 = vld [vmem:[%s0] sm:$0x3f]
  %v111 = vunpack.c.l.bf16 %v110
  %v112 = vunpack.c.h.bf16 %v110
  %v115 = vcombine.high %v111, %v111
  %v117 = vunpack.c.l.s4 1983009808
  %v118 = vunpack.c.0.s8 %v117
  %v119 = vlaneseq
  %v120 = vshrl.u32 %v119, 7
  %v121 = vsub.s32 %v118, %v120
  %v122 = vrot.slane %v111, %v121
  %v124 = vunpack.c.l.s4 1983009808
  %v125 = vunpack.c.0.s8 %v124
  %v126 = vlaneseq
  %v127 = vshrl.u32 %v126, 7
  %v128 = vsub.s32 %v125, %v127
  %v129 = vrot.slane %v115, %v128
  %v130 = vcombine.high %v122, %v122
  %v131 = vcombine.high %v129, %v129
  %v133 = vunpack.c.l.s4 1983009808
  %v134 = vunpack.c.0.s8 %v133
  %v135 = vlaneseq
  %v136 = vshrl.u32 %v135, 7
  %v137 = vsub.s32 %v134, %v136
  %v138 = vrot.slane %v112, %v137
  %v139 = vcombine.high %v138, %v138
  %146 = vmatprep.subr.mxu0 0.0
  %147 = vmatpush1.msra.mxu0 %v26
  %148 = vmatprep.subr.mxu0 0.0
  %149 = vmatpush1.msra.mxu0 %v25
  %150 = vmatprep.subr.mxu0 0.0
  %151 = vmatpush1.msra.mxu0 %v24
  %152 = vmatprep.subr.mxu0 0.0
  %153 = vmatpush1.msra.mxu0 %v23
  %154 = vmatprep.subr.mxu0 0.0
  %155 = vmatpush1.msra.mxu0 %v22
  %156 = vmatprep.subr.mxu0 0.0
  %157 = vmatpush1.msra.mxu0 %v21
  %158 = vmatprep.subr.mxu0 0.0
  %159 = vmatpush1.msra.mxu0 %v20
  %160 = vmatprep.subr.mxu0 0.0
  %161 = vmatpush1.msra.mxu0 %v19
  %162 = vmatprep.subr.mxu0 0.0
  %163 = vmatpush1.msra.mxu0 %v18
  %164 = vmatprep.subr.mxu0 0.0
  %165 = vmatpush1.msra.mxu0 %v17
  %166 = vmatprep.subr.mxu0 0.0
  %167 = vmatpush1.msra.mxu0 %v16
  %168 = vmatprep.subr.mxu0 0.0
  %169 = vmatpush1.msra.mxu0 %v15
  %170 = vmatprep.subr.mxu0 0.0
  %171 = vmatpush1.msra.mxu0 %v14
  %172 = vmatprep.subr.mxu0 0.0
  %173 = vmatpush1.msra.mxu0 %v13
  %174 = vmatprep.subr.mxu0 0.0
  %175 = vmatpush1.msra.mxu0 %v12
  %176 = vmatprep.subr.mxu0 0.0
  %177 = vmatpush1.msra.mxu0 %v11
  %178 = vmatprep.subr.mxu0 0.0
  %179 = vmatpush2.msra.mxu0 %v42
  %180 = vmatprep.subr.mxu0 0.0
  %181 = vmatpush2.msra.mxu0 %v41
  %182 = vmatprep.subr.mxu0 0.0
  %183 = vmatpush2.msra.mxu0 %v40
  %184 = vmatprep.subr.mxu0 0.0
  %185 = vmatpush2.msra.mxu0 %v39
  %186 = vmatprep.subr.mxu0 0.0
  %187 = vmatpush2.msra.mxu0 %v38
  %188 = vmatprep.subr.mxu0 0.0
  %189 = vmatpush2.msra.mxu0 %v37
  %190 = vmatprep.subr.mxu0 0.0
  %191 = vmatpush2.msra.mxu0 %v36
  %192 = vmatprep.subr.mxu0 0.0
  %193 = vmatpush2.msra.mxu0 %v35
  %194 = vmatprep.subr.mxu0 0.0
  %195 = vmatpush2.msra.mxu0 %v34
  %196 = vmatprep.subr.mxu0 0.0
  %197 = vmatpush2.msra.mxu0 %v33
  %198 = vmatprep.subr.mxu0 0.0
  %199 = vmatpush2.msra.mxu0 %v32
  %200 = vmatprep.subr.mxu0 0.0
  %201 = vmatpush2.msra.mxu0 %v31
  %202 = vmatprep.subr.mxu0 0.0
  %203 = vmatpush2.msra.mxu0 %v30
  %204 = vmatprep.subr.mxu0 0.0
  %205 = vmatpush2.msra.mxu0 %v29
  %206 = vmatprep.subr.mxu0 0.0
  %207 = vmatpush2.msra.mxu0 %v28
  %208 = vmatprep.subr.mxu0 0.0
  %209 = vmatpush2.msra.mxu0 %v27
  %210 = vmatprep.mubr.f32.mxu0 %v130
  %211 = vmatmul.mubr.f32.gmra.mxu0 %v122
  %v212 = vpop.f32.mrf.mxu0
  %v213 = vadd.f32 0.0, %v212
  %v214 = vpop.f32.mrf.mxu0
  %215 = vdwg.mxu0
  %216 = vmatprep.subr.mxu0 0.0
  %217 = vmatpush1.msra.mxu0 %v58
  %218 = vmatprep.subr.mxu0 0.0
  %219 = vmatpush1.msra.mxu0 %v57
  %220 = vmatprep.subr.mxu0 0.0
  %221 = vmatpush1.msra.mxu0 %v56
  %222 = vmatprep.subr.mxu0 0.0
  %223 = vmatpush1.msra.mxu0 %v55
  %224 = vmatprep.subr.mxu0 0.0
  %225 = vmatpush1.msra.mxu0 %v54
  %226 = vmatprep.subr.mxu0 0.0
  %227 = vmatpush1.msra.mxu0 %v53
  %228 = vmatprep.subr.mxu0 0.0
  %229 = vmatpush1.msra.mxu0 %v52
  %230 = vmatprep.subr.mxu0 0.0
  %231 = vmatpush1.msra.mxu0 %v51
  %232 = vmatprep.subr.mxu0 0.0
  %233 = vmatpush1.msra.mxu0 %v50
  %234 = vmatprep.subr.mxu0 0.0
  %235 = vmatpush1.msra.mxu0 %v49
  %236 = vmatprep.subr.mxu0 0.0
  %237 = vmatpush1.msra.mxu0 %v48
  %238 = vmatprep.subr.mxu0 0.0
  %239 = vmatpush1.msra.mxu0 %v47
  %240 = vmatprep.subr.mxu0 0.0
  %241 = vmatpush1.msra.mxu0 %v46
  %242 = vmatprep.subr.mxu0 0.0
  %243 = vmatpush1.msra.mxu0 %v45
  %244 = vmatprep.subr.mxu0 0.0
  %245 = vmatpush1.msra.mxu0 %v44
  %246 = vmatprep.subr.mxu0 0.0
  %247 = vmatpush1.msra.mxu0 %v43
  %248 = vmatprep.subr.mxu0 0.0
  %249 = vmatpush2.msra.mxu0 %v74
  %250 = vmatprep.subr.mxu0 0.0
  %251 = vmatpush2.msra.mxu0 %v73
  %252 = vmatprep.subr.mxu0 0.0
  %253 = vmatpush2.msra.mxu0 %v72
  %254 = vmatprep.subr.mxu0 0.0
  %255 = vmatpush2.msra.mxu0 %v71
  %256 = vmatprep.subr.mxu0 0.0
  %257 = vmatpush2.msra.mxu0 %v70
  %258 = vmatprep.subr.mxu0 0.0
  %259 = vmatpush2.msra.mxu0 %v69
  %260 = vmatprep.subr.mxu0 0.0
  %261 = vmatpush2.msra.mxu0 %v68
  %262 = vmatprep.subr.mxu0 0.0
  %263 = vmatpush2.msra.mxu0 %v67
  %264 = vmatprep.subr.mxu0 0.0
  %265 = vmatpush2.msra.mxu0 %v66
  %266 = vmatprep.subr.mxu0 0.0
  %267 = vmatpush2.msra.mxu0 %v65
  %268 = vmatprep.subr.mxu0 0.0
  %269 = vmatpush2.msra.mxu0 %v64
  %270 = vmatprep.subr.mxu0 0.0
  %271 = vmatpush2.msra.mxu0 %v63
  %272 = vmatprep.subr.mxu0 0.0
  %273 = vmatpush2.msra.mxu0 %v62
  %274 = vmatprep.subr.mxu0 0.0
  %275 = vmatpush2.msra.mxu0 %v61
  %276 = vmatprep.subr.mxu0 0.0
  %277 = vmatpush2.msra.mxu0 %v60
  %278 = vmatprep.subr.mxu0 0.0
  %279 = vmatpush2.msra.mxu0 %v59
  %280 = vmatprep.mubr.f32.mxu0 %v131
  %281 = vmatmul.mubr.f32.gmra.mxu0 %v129
  %v282 = vpop.f32.mrf.mxu0
  %v283 = vadd.f32 %v213, %v282
  %v284 = vpop.f32.mrf.mxu0
  %285 = vdwg.mxu0
  %286 = vmatprep.subr.mxu0 0.0
  %287 = vmatpush1.msra.mxu0 %v90
  %288 = vmatprep.subr.mxu0 0.0
  %289 = vmatpush1.msra.mxu0 %v89
  %290 = vmatprep.subr.mxu0 0.0
  %291 = vmatpush1.msra.mxu0 %v88
  %292 = vmatprep.subr.mxu0 0.0
  %293 = vmatpush1.msra.mxu0 %v87
  %294 = vmatprep.subr.mxu0 0.0
  %295 = vmatpush1.msra.mxu0 %v86
  %296 = vmatprep.subr.mxu0 0.0
  %297 = vmatpush1.msra.mxu0 %v85
  %298 = vmatprep.subr.mxu0 0.0
  %299 = vmatpush1.msra.mxu0 %v84
  %300 = vmatprep.subr.mxu0 0.0
  %301 = vmatpush1.msra.mxu0 %v83
  %302 = vmatprep.subr.mxu0 0.0
  %303 = vmatpush1.msra.mxu0 %v82
  %304 = vmatprep.subr.mxu0 0.0
  %305 = vmatpush1.msra.mxu0 %v81
  %306 = vmatprep.subr.mxu0 0.0
  %307 = vmatpush1.msra.mxu0 %v80
  %308 = vmatprep.subr.mxu0 0.0
  %309 = vmatpush1.msra.mxu0 %v79
  %310 = vmatprep.subr.mxu0 0.0
  %311 = vmatpush1.msra.mxu0 %v78
  %312 = vmatprep.subr.mxu0 0.0
  %313 = vmatpush1.msra.mxu0 %v77
  %314 = vmatprep.subr.mxu0 0.0
  %315 = vmatpush1.msra.mxu0 %v76
  %316 = vmatprep.subr.mxu0 0.0
  %317 = vmatpush1.msra.mxu0 %v75
  %318 = vmatprep.subr.mxu0 0.0
  %319 = vmatpush2.msra.mxu0 %v106
  %320 = vmatprep.subr.mxu0 0.0
  %321 = vmatpush2.msra.mxu0 %v105
  %322 = vmatprep.subr.mxu0 0.0
  %323 = vmatpush2.msra.mxu0 %v104
  %324 = vmatprep.subr.mxu0 0.0
  %325 = vmatpush2.msra.mxu0 %v103
  %326 = vmatprep.subr.mxu0 0.0
  %327 = vmatpush2.msra.mxu0 %v102
  %328 = vmatprep.subr.mxu0 0.0
  %329 = vmatpush2.msra.mxu0 %v101
  %330 = vmatprep.subr.mxu0 0.0
  %331 = vmatpush2.msra.mxu0 %v100
  %332 = vmatprep.subr.mxu0 0.0
  %333 = vmatpush2.msra.mxu0 %v99
  %334 = vmatprep.subr.mxu0 0.0
  %335 = vmatpush2.msra.mxu0 %v98
  %336 = vmatprep.subr.mxu0 0.0
  %337 = vmatpush2.msra.mxu0 %v97
  %338 = vmatprep.subr.mxu0 0.0
  %339 = vmatpush2.msra.mxu0 %v96
  %340 = vmatprep.subr.mxu0 0.0
  %341 = vmatpush2.msra.mxu0 %v95
  %342 = vmatprep.subr.mxu0 0.0
  %343 = vmatpush2.msra.mxu0 %v94
  %344 = vmatprep.subr.mxu0 0.0
  %345 = vmatpush2.msra.mxu0 %v93
  %346 = vmatprep.subr.mxu0 0.0
  %347 = vmatpush2.msra.mxu0 %v92
  %348 = vmatprep.subr.mxu0 0.0
  %349 = vmatpush2.msra.mxu0 %v91
  %350 = vmatprep.mubr.f32.mxu0 %v139
  %351 = vmatmul.mubr.f32.gmra.mxu0 %v138
  %v352 = vpop.f32.mrf.mxu0
  %v353 = vadd.f32 %v283, %v352
  %v354 = vpop.f32.mrf.mxu0
  %355 = vdwg.mxu0
  %vm356 = vcmask 1041408
  %v357 = vsel %vm356, %v122, 0.0
  %v358 = vsel %vm356, %v130, 0.0
  %v359 = vadd.f32 %v357, %v358
  %v360 = vsel %vm356, %v129, 0.0
  %v361 = vadd.f32 %v359, %v360
  %v362 = vsel %vm356, %v131, 0.0
  %v363 = vadd.f32 %v361, %v362
  %v364 = vsel %vm356, %v138, 0.0
  %v365 = vadd.f32 %v363, %v364
  %v366 = vsel %vm356, %v139, 0.0
  %v367 = vadd.f32 %v365, %v366
  %368 = vadd.xlane.f32.xlu0 %v367
  %v369 = vpop.xlane.xlu0 %368
  %v370 = vsel %vm109, %v369, %v353
  %vm371 = vcmask 58368
  %372 = vst.msk [vmem:[%s2] sm:$0x3] %vm371, %v370
  %s373 = scalar_lea.vmem %s0, 6
  %v374 = vld [vmem:[%s373] sm:$0x3f]
  %v375 = vunpack.c.l.bf16 %v374
  %v376 = vunpack.c.h.bf16 %v374
  %v379 = vcombine.high %v375, %v375
  %v381 = vunpack.c.l.s4 1983009808
  %v382 = vunpack.c.0.s8 %v381
  %v383 = vlaneseq
  %v384 = vshrl.u32 %v383, 7
  %v385 = vsub.s32 %v382, %v384
  %v386 = vrot.slane %v375, %v385
  %v388 = vunpack.c.l.s4 1983009808
  %v389 = vunpack.c.0.s8 %v388
  %v390 = vlaneseq
  %v391 = vshrl.u32 %v390, 7
  %v392 = vsub.s32 %v389, %v391
  %v393 = vrot.slane %v379, %v392
  %v394 = vcombine.high %v386, %v386
  %v395 = vcombine.high %v393, %v393
  %v397 = vunpack.c.l.s4 1983009808
  %v398 = vunpack.c.0.s8 %v397
  %v399 = vlaneseq
  %v400 = vshrl.u32 %v399, 7
  %v401 = vsub.s32 %v398, %v400
  %v402 = vrot.slane %v376, %v401
  %v403 = vcombine.high %v402, %v402
  %410 = vmatprep.subr.mxu0 0.0
  %411 = vmatpush1.msra.mxu0 %v26
  %412 = vmatprep.subr.mxu0 0.0
  %413 = vmatpush1.msra.mxu0 %v25
  %414 = vmatprep.subr.mxu0 0.0
  %415 = vmatpush1.msra.mxu0 %v24
  %416 = vmatprep.subr.mxu0 0.0
  %417 = vmatpush1.msra.mxu0 %v23
  %418 = vmatprep.subr.mxu0 0.0
  %419 = vmatpush1.msra.mxu0 %v22
  %420 = vmatprep.subr.mxu0 0.0
  %421 = vmatpush1.msra.mxu0 %v21
  %422 = vmatprep.subr.mxu0 0.0
  %423 = vmatpush1.msra.mxu0 %v20
  %424 = vmatprep.subr.mxu0 0.0
  %425 = vmatpush1.msra.mxu0 %v19
  %426 = vmatprep.subr.mxu0 0.0
  %427 = vmatpush1.msra.mxu0 %v18
  %428 = vmatprep.subr.mxu0 0.0
  %429 = vmatpush1.msra.mxu0 %v17
  %430 = vmatprep.subr.mxu0 0.0
  %431 = vmatpush1.msra.mxu0 %v16
  %432 = vmatprep.subr.mxu0 0.0
  %433 = vmatpush1.msra.mxu0 %v15
  %434 = vmatprep.subr.mxu0 0.0
  %435 = vmatpush1.msra.mxu0 %v14
  %436 = vmatprep.subr.mxu0 0.0
  %437 = vmatpush1.msra.mxu0 %v13
  %438 = vmatprep.subr.mxu0 0.0
  %439 = vmatpush1.msra.mxu0 %v12
  %440 = vmatprep.subr.mxu0 0.0
  %441 = vmatpush1.msra.mxu0 %v11
  %442 = vmatprep.subr.mxu0 0.0
  %443 = vmatpush2.msra.mxu0 %v42
  %444 = vmatprep.subr.mxu0 0.0
  %445 = vmatpush2.msra.mxu0 %v41
  %446 = vmatprep.subr.mxu0 0.0
  %447 = vmatpush2.msra.mxu0 %v40
  %448 = vmatprep.subr.mxu0 0.0
  %449 = vmatpush2.msra.mxu0 %v39
  %450 = vmatprep.subr.mxu0 0.0
  %451 = vmatpush2.msra.mxu0 %v38
  %452 = vmatprep.subr.mxu0 0.0
  %453 = vmatpush2.msra.mxu0 %v37
  %454 = vmatprep.subr.mxu0 0.0
  %455 = vmatpush2.msra.mxu0 %v36
  %456 = vmatprep.subr.mxu0 0.0
  %457 = vmatpush2.msra.mxu0 %v35
  %458 = vmatprep.subr.mxu0 0.0
  %459 = vmatpush2.msra.mxu0 %v34
  %460 = vmatprep.subr.mxu0 0.0
  %461 = vmatpush2.msra.mxu0 %v33
  %462 = vmatprep.subr.mxu0 0.0
  %463 = vmatpush2.msra.mxu0 %v32
  %464 = vmatprep.subr.mxu0 0.0
  %465 = vmatpush2.msra.mxu0 %v31
  %466 = vmatprep.subr.mxu0 0.0
  %467 = vmatpush2.msra.mxu0 %v30
  %468 = vmatprep.subr.mxu0 0.0
  %469 = vmatpush2.msra.mxu0 %v29
  %470 = vmatprep.subr.mxu0 0.0
  %471 = vmatpush2.msra.mxu0 %v28
  %472 = vmatprep.subr.mxu0 0.0
  %473 = vmatpush2.msra.mxu0 %v27
  %474 = vmatprep.mubr.f32.mxu0 %v394
  %475 = vmatmul.mubr.f32.gmra.mxu0 %v386
  %v476 = vpop.f32.mrf.mxu0
  %v477 = vadd.f32 0.0, %v476
  %v478 = vpop.f32.mrf.mxu0
  %479 = vdwg.mxu0
  %480 = vmatprep.subr.mxu0 0.0
  %481 = vmatpush1.msra.mxu0 %v58
  %482 = vmatprep.subr.mxu0 0.0
  %483 = vmatpush1.msra.mxu0 %v57
  %484 = vmatprep.subr.mxu0 0.0
  %485 = vmatpush1.msra.mxu0 %v56
  %486 = vmatprep.subr.mxu0 0.0
  %487 = vmatpush1.msra.mxu0 %v55
  %488 = vmatprep.subr.mxu0 0.0
  %489 = vmatpush1.msra.mxu0 %v54
  %490 = vmatprep.subr.mxu0 0.0
  %491 = vmatpush1.msra.mxu0 %v53
  %492 = vmatprep.subr.mxu0 0.0
  %493 = vmatpush1.msra.mxu0 %v52
  %494 = vmatprep.subr.mxu0 0.0
  %495 = vmatpush1.msra.mxu0 %v51
  %496 = vmatprep.subr.mxu0 0.0
  %497 = vmatpush1.msra.mxu0 %v50
  %498 = vmatprep.subr.mxu0 0.0
  %499 = vmatpush1.msra.mxu0 %v49
  %500 = vmatprep.subr.mxu0 0.0
  %501 = vmatpush1.msra.mxu0 %v48
  %502 = vmatprep.subr.mxu0 0.0
  %503 = vmatpush1.msra.mxu0 %v47
  %504 = vmatprep.subr.mxu0 0.0
  %505 = vmatpush1.msra.mxu0 %v46
  %506 = vmatprep.subr.mxu0 0.0
  %507 = vmatpush1.msra.mxu0 %v45
  %508 = vmatprep.subr.mxu0 0.0
  %509 = vmatpush1.msra.mxu0 %v44
  %510 = vmatprep.subr.mxu0 0.0
  %511 = vmatpush1.msra.mxu0 %v43
  %512 = vmatprep.subr.mxu0 0.0
  %513 = vmatpush2.msra.mxu0 %v74
  %514 = vmatprep.subr.mxu0 0.0
  %515 = vmatpush2.msra.mxu0 %v73
  %516 = vmatprep.subr.mxu0 0.0
  %517 = vmatpush2.msra.mxu0 %v72
  %518 = vmatprep.subr.mxu0 0.0
  %519 = vmatpush2.msra.mxu0 %v71
  %520 = vmatprep.subr.mxu0 0.0
  %521 = vmatpush2.msra.mxu0 %v70
  %522 = vmatprep.subr.mxu0 0.0
  %523 = vmatpush2.msra.mxu0 %v69
  %524 = vmatprep.subr.mxu0 0.0
  %525 = vmatpush2.msra.mxu0 %v68
  %526 = vmatprep.subr.mxu0 0.0
  %527 = vmatpush2.msra.mxu0 %v67
  %528 = vmatprep.subr.mxu0 0.0
  %529 = vmatpush2.msra.mxu0 %v66
  %530 = vmatprep.subr.mxu0 0.0
  %531 = vmatpush2.msra.mxu0 %v65
  %532 = vmatprep.subr.mxu0 0.0
  %533 = vmatpush2.msra.mxu0 %v64
  %534 = vmatprep.subr.mxu0 0.0
  %535 = vmatpush2.msra.mxu0 %v63
  %536 = vmatprep.subr.mxu0 0.0
  %537 = vmatpush2.msra.mxu0 %v62
  %538 = vmatprep.subr.mxu0 0.0
  %539 = vmatpush2.msra.mxu0 %v61
  %540 = vmatprep.subr.mxu0 0.0
  %541 = vmatpush2.msra.mxu0 %v60
  %542 = vmatprep.subr.mxu0 0.0
  %543 = vmatpush2.msra.mxu0 %v59
  %544 = vmatprep.mubr.f32.mxu0 %v395
  %545 = vmatmul.mubr.f32.gmra.mxu0 %v393
  %v546 = vpop.f32.mrf.mxu0
  %v547 = vadd.f32 %v477, %v546
  %v548 = vpop.f32.mrf.mxu0
  %549 = vdwg.mxu0
  %550 = vmatprep.subr.mxu0 0.0
  %551 = vmatpush1.msra.mxu0 %v90
  %552 = vmatprep.subr.mxu0 0.0
  %553 = vmatpush1.msra.mxu0 %v89
  %554 = vmatprep.subr.mxu0 0.0
  %555 = vmatpush1.msra.mxu0 %v88
  %556 = vmatprep.subr.mxu0 0.0
  %557 = vmatpush1.msra.mxu0 %v87
  %558 = vmatprep.subr.mxu0 0.0
  %559 = vmatpush1.msra.mxu0 %v86
  %560 = vmatprep.subr.mxu0 0.0
  %561 = vmatpush1.msra.mxu0 %v85
  %562 = vmatprep.subr.mxu0 0.0
  %563 = vmatpush1.msra.mxu0 %v84
  %564 = vmatprep.subr.mxu0 0.0
  %565 = vmatpush1.msra.mxu0 %v83
  %566 = vmatprep.subr.mxu0 0.0
  %567 = vmatpush1.msra.mxu0 %v82
  %568 = vmatprep.subr.mxu0 0.0
  %569 = vmatpush1.msra.mxu0 %v81
  %570 = vmatprep.subr.mxu0 0.0
  %571 = vmatpush1.msra.mxu0 %v80
  %572 = vmatprep.subr.mxu0 0.0
  %573 = vmatpush1.msra.mxu0 %v79
  %574 = vmatprep.subr.mxu0 0.0
  %575 = vmatpush1.msra.mxu0 %v78
  %576 = vmatprep.subr.mxu0 0.0
  %577 = vmatpush1.msra.mxu0 %v77
  %578 = vmatprep.subr.mxu0 0.0
  %579 = vmatpush1.msra.mxu0 %v76
  %580 = vmatprep.subr.mxu0 0.0
  %581 = vmatpush1.msra.mxu0 %v75
  %582 = vmatprep.subr.mxu0 0.0
  %583 = vmatpush2.msra.mxu0 %v106
  %584 = vmatprep.subr.mxu0 0.0
  %585 = vmatpush2.msra.mxu0 %v105
  %586 = vmatprep.subr.mxu0 0.0
  %587 = vmatpush2.msra.mxu0 %v104
  %588 = vmatprep.subr.mxu0 0.0
  %589 = vmatpush2.msra.mxu0 %v103
  %590 = vmatprep.subr.mxu0 0.0
  %591 = vmatpush2.msra.mxu0 %v102
  %592 = vmatprep.subr.mxu0 0.0
  %593 = vmatpush2.msra.mxu0 %v101
  %594 = vmatprep.subr.mxu0 0.0
  %595 = vmatpush2.msra.mxu0 %v100
  %596 = vmatprep.subr.mxu0 0.0
  %597 = vmatpush2.msra.mxu0 %v99
  %598 = vmatprep.subr.mxu0 0.0
  %599 = vmatpush2.msra.mxu0 %v98
  %600 = vmatprep.subr.mxu0 0.0
  %601 = vmatpush2.msra.mxu0 %v97
  %602 = vmatprep.subr.mxu0 0.0
  %603 = vmatpush2.msra.mxu0 %v96
  %604 = vmatprep.subr.mxu0 0.0
  %605 = vmatpush2.msra.mxu0 %v95
  %606 = vmatprep.subr.mxu0 0.0
  %607 = vmatpush2.msra.mxu0 %v94
  %608 = vmatprep.subr.mxu0 0.0
  %609 = vmatpush2.msra.mxu0 %v93
  %610 = vmatprep.subr.mxu0 0.0
  %611 = vmatpush2.msra.mxu0 %v92
  %612 = vmatprep.subr.mxu0 0.0
  %613 = vmatpush2.msra.mxu0 %v91
  %614 = vmatprep.mubr.f32.mxu0 %v403
  %615 = vmatmul.mubr.f32.gmra.mxu0 %v402
  %v616 = vpop.f32.mrf.mxu0
  %v617 = vadd.f32 %v547, %v616
  %v618 = vpop.f32.mrf.mxu0
  %619 = vdwg.mxu0
  %v620 = vsel %vm356, %v386, 0.0
  %v621 = vsel %vm356, %v394, 0.0
  %v622 = vadd.f32 %v620, %v621
  %v623 = vsel %vm356, %v393, 0.0
  %v624 = vadd.f32 %v622, %v623
  %v625 = vsel %vm356, %v395, 0.0
  %v626 = vadd.f32 %v624, %v625
  %v627 = vsel %vm356, %v402, 0.0
  %v628 = vadd.f32 %v626, %v627
  %v629 = vsel %vm356, %v403, 0.0
  %v630 = vadd.f32 %v628, %v629
  %631 = vadd.xlane.f32.xlu0 %v630
  %v632 = vpop.xlane.xlu0 %631
  %v633 = vsel %vm109, %v632, %v617
  %s634 = scalar_lea.vmem %s2, 2
  %635 = vst.msk [vmem:[%s634] sm:$0x3] %vm371, %v633
  %s636 = scalar_lea.vmem %s0, 12
  %v637 = vld [vmem:[%s636] sm:$0x3f]
  %v638 = vunpack.c.l.bf16 %v637
  %v639 = vunpack.c.h.bf16 %v637
  %v642 = vcombine.high %v638, %v638
  %v644 = vunpack.c.l.s4 1983009808
  %v645 = vunpack.c.0.s8 %v644
  %v646 = vlaneseq
  %v647 = vshrl.u32 %v646, 7
  %v648 = vsub.s32 %v645, %v647
  %v649 = vrot.slane %v638, %v648
  %v651 = vunpack.c.l.s4 1983009808
  %v652 = vunpack.c.0.s8 %v651
  %v653 = vlaneseq
  %v654 = vshrl.u32 %v653, 7
  %v655 = vsub.s32 %v652, %v654
  %v656 = vrot.slane %v642, %v655
  %v657 = vcombine.high %v649, %v649
  %v658 = vcombine.high %v656, %v656
  %v660 = vunpack.c.l.s4 1983009808
  %v661 = vunpack.c.0.s8 %v660
  %v662 = vlaneseq
  %v663 = vshrl.u32 %v662, 7
  %v664 = vsub.s32 %v661, %v663
  %v665 = vrot.slane %v639, %v664
  %v666 = vcombine.high %v665, %v665
  %673 = vmatprep.subr.mxu0 0.0
  %674 = vmatpush1.msra.mxu0 %v26
  %675 = vmatprep.subr.mxu0 0.0
  %676 = vmatpush1.msra.mxu0 %v25
  %677 = vmatprep.subr.mxu0 0.0
  %678 = vmatpush1.msra.mxu0 %v24
  %679 = vmatprep.subr.mxu0 0.0
  %680 = vmatpush1.msra.mxu0 %v23
  %681 = vmatprep.subr.mxu0 0.0
  %682 = vmatpush1.msra.mxu0 %v22
  %683 = vmatprep.subr.mxu0 0.0
  %684 = vmatpush1.msra.mxu0 %v21
  %685 = vmatprep.subr.mxu0 0.0
  %686 = vmatpush1.msra.mxu0 %v20
  %687 = vmatprep.subr.mxu0 0.0
  %688 = vmatpush1.msra.mxu0 %v19
  %689 = vmatprep.subr.mxu0 0.0
  %690 = vmatpush1.msra.mxu0 %v18
  %691 = vmatprep.subr.mxu0 0.0
  %692 = vmatpush1.msra.mxu0 %v17
  %693 = vmatprep.subr.mxu0 0.0
  %694 = vmatpush1.msra.mxu0 %v16
  %695 = vmatprep.subr.mxu0 0.0
  %696 = vmatpush1.msra.mxu0 %v15
  %697 = vmatprep.subr.mxu0 0.0
  %698 = vmatpush1.msra.mxu0 %v14
  %699 = vmatprep.subr.mxu0 0.0
  %700 = vmatpush1.msra.mxu0 %v13
  %701 = vmatprep.subr.mxu0 0.0
  %702 = vmatpush1.msra.mxu0 %v12
  %703 = vmatprep.subr.mxu0 0.0
  %704 = vmatpush1.msra.mxu0 %v11
  %705 = vmatprep.subr.mxu0 0.0
  %706 = vmatpush2.msra.mxu0 %v42
  %707 = vmatprep.subr.mxu0 0.0
  %708 = vmatpush2.msra.mxu0 %v41
  %709 = vmatprep.subr.mxu0 0.0
  %710 = vmatpush2.msra.mxu0 %v40
  %711 = vmatprep.subr.mxu0 0.0
  %712 = vmatpush2.msra.mxu0 %v39
  %713 = vmatprep.subr.mxu0 0.0
  %714 = vmatpush2.msra.mxu0 %v38
  %715 = vmatprep.subr.mxu0 0.0
  %716 = vmatpush2.msra.mxu0 %v37
  %717 = vmatprep.subr.mxu0 0.0
  %718 = vmatpush2.msra.mxu0 %v36
  %719 = vmatprep.subr.mxu0 0.0
  %720 = vmatpush2.msra.mxu0 %v35
  %721 = vmatprep.subr.mxu0 0.0
  %722 = vmatpush2.msra.mxu0 %v34
  %723 = vmatprep.subr.mxu0 0.0
  %724 = vmatpush2.msra.mxu0 %v33
  %725 = vmatprep.subr.mxu0 0.0
  %726 = vmatpush2.msra.mxu0 %v32
  %727 = vmatprep.subr.mxu0 0.0
  %728 = vmatpush2.msra.mxu0 %v31
  %729 = vmatprep.subr.mxu0 0.0
  %730 = vmatpush2.msra.mxu0 %v30
  %731 = vmatprep.subr.mxu0 0.0
  %732 = vmatpush2.msra.mxu0 %v29
  %733 = vmatprep.subr.mxu0 0.0
  %734 = vmatpush2.msra.mxu0 %v28
  %735 = vmatprep.subr.mxu0 0.0
  %736 = vmatpush2.msra.mxu0 %v27
  %737 = vmatprep.mubr.f32.mxu0 %v657
  %738 = vmatmul.mubr.f32.gmra.mxu0 %v649
  %v739 = vpop.f32.mrf.mxu0
  %v740 = vadd.f32 0.0, %v739
  %v741 = vpop.f32.mrf.mxu0
  %742 = vdwg.mxu0
  %743 = vmatprep.subr.mxu0 0.0
  %744 = vmatpush1.msra.mxu0 %v58
  %745 = vmatprep.subr.mxu0 0.0
  %746 = vmatpush1.msra.mxu0 %v57
  %747 = vmatprep.subr.mxu0 0.0
  %748 = vmatpush1.msra.mxu0 %v56
  %749 = vmatprep.subr.mxu0 0.0
  %750 = vmatpush1.msra.mxu0 %v55
  %751 = vmatprep.subr.mxu0 0.0
  %752 = vmatpush1.msra.mxu0 %v54
  %753 = vmatprep.subr.mxu0 0.0
  %754 = vmatpush1.msra.mxu0 %v53
  %755 = vmatprep.subr.mxu0 0.0
  %756 = vmatpush1.msra.mxu0 %v52
  %757 = vmatprep.subr.mxu0 0.0
  %758 = vmatpush1.msra.mxu0 %v51
  %759 = vmatprep.subr.mxu0 0.0
  %760 = vmatpush1.msra.mxu0 %v50
  %761 = vmatprep.subr.mxu0 0.0
  %762 = vmatpush1.msra.mxu0 %v49
  %763 = vmatprep.subr.mxu0 0.0
  %764 = vmatpush1.msra.mxu0 %v48
  %765 = vmatprep.subr.mxu0 0.0
  %766 = vmatpush1.msra.mxu0 %v47
  %767 = vmatprep.subr.mxu0 0.0
  %768 = vmatpush1.msra.mxu0 %v46
  %769 = vmatprep.subr.mxu0 0.0
  %770 = vmatpush1.msra.mxu0 %v45
  %771 = vmatprep.subr.mxu0 0.0
  %772 = vmatpush1.msra.mxu0 %v44
  %773 = vmatprep.subr.mxu0 0.0
  %774 = vmatpush1.msra.mxu0 %v43
  %775 = vmatprep.subr.mxu0 0.0
  %776 = vmatpush2.msra.mxu0 %v74
  %777 = vmatprep.subr.mxu0 0.0
  %778 = vmatpush2.msra.mxu0 %v73
  %779 = vmatprep.subr.mxu0 0.0
  %780 = vmatpush2.msra.mxu0 %v72
  %781 = vmatprep.subr.mxu0 0.0
  %782 = vmatpush2.msra.mxu0 %v71
  %783 = vmatprep.subr.mxu0 0.0
  %784 = vmatpush2.msra.mxu0 %v70
  %785 = vmatprep.subr.mxu0 0.0
  %786 = vmatpush2.msra.mxu0 %v69
  %787 = vmatprep.subr.mxu0 0.0
  %788 = vmatpush2.msra.mxu0 %v68
  %789 = vmatprep.subr.mxu0 0.0
  %790 = vmatpush2.msra.mxu0 %v67
  %791 = vmatprep.subr.mxu0 0.0
  %792 = vmatpush2.msra.mxu0 %v66
  %793 = vmatprep.subr.mxu0 0.0
  %794 = vmatpush2.msra.mxu0 %v65
  %795 = vmatprep.subr.mxu0 0.0
  %796 = vmatpush2.msra.mxu0 %v64
  %797 = vmatprep.subr.mxu0 0.0
  %798 = vmatpush2.msra.mxu0 %v63
  %799 = vmatprep.subr.mxu0 0.0
  %800 = vmatpush2.msra.mxu0 %v62
  %801 = vmatprep.subr.mxu0 0.0
  %802 = vmatpush2.msra.mxu0 %v61
  %803 = vmatprep.subr.mxu0 0.0
  %804 = vmatpush2.msra.mxu0 %v60
  %805 = vmatprep.subr.mxu0 0.0
  %806 = vmatpush2.msra.mxu0 %v59
  %807 = vmatprep.mubr.f32.mxu0 %v658
  %808 = vmatmul.mubr.f32.gmra.mxu0 %v656
  %v809 = vpop.f32.mrf.mxu0
  %v810 = vadd.f32 %v740, %v809
  %v811 = vpop.f32.mrf.mxu0
  %812 = vdwg.mxu0
  %813 = vmatprep.subr.mxu0 0.0
  %814 = vmatpush1.msra.mxu0 %v90
  %815 = vmatprep.subr.mxu0 0.0
  %816 = vmatpush1.msra.mxu0 %v89
  %817 = vmatprep.subr.mxu0 0.0
  %818 = vmatpush1.msra.mxu0 %v88
  %819 = vmatprep.subr.mxu0 0.0
  %820 = vmatpush1.msra.mxu0 %v87
  %821 = vmatprep.subr.mxu0 0.0
  %822 = vmatpush1.msra.mxu0 %v86
  %823 = vmatprep.subr.mxu0 0.0
  %824 = vmatpush1.msra.mxu0 %v85
  %825 = vmatprep.subr.mxu0 0.0
  %826 = vmatpush1.msra.mxu0 %v84
  %827 = vmatprep.subr.mxu0 0.0
  %828 = vmatpush1.msra.mxu0 %v83
  %829 = vmatprep.subr.mxu0 0.0
  %830 = vmatpush1.msra.mxu0 %v82
  %831 = vmatprep.subr.mxu0 0.0
  %832 = vmatpush1.msra.mxu0 %v81
  %833 = vmatprep.subr.mxu0 0.0
  %834 = vmatpush1.msra.mxu0 %v80
  %835 = vmatprep.subr.mxu0 0.0
  %836 = vmatpush1.msra.mxu0 %v79
  %837 = vmatprep.subr.mxu0 0.0
  %838 = vmatpush1.msra.mxu0 %v78
  %839 = vmatprep.subr.mxu0 0.0
  %840 = vmatpush1.msra.mxu0 %v77
  %841 = vmatprep.subr.mxu0 0.0
  %842 = vmatpush1.msra.mxu0 %v76
  %843 = vmatprep.subr.mxu0 0.0
  %844 = vmatpush1.msra.mxu0 %v75
  %845 = vmatprep.subr.mxu0 0.0
  %846 = vmatpush2.msra.mxu0 %v106
  %847 = vmatprep.subr.mxu0 0.0
  %848 = vmatpush2.msra.mxu0 %v105
  %849 = vmatprep.subr.mxu0 0.0
  %850 = vmatpush2.msra.mxu0 %v104
  %851 = vmatprep.subr.mxu0 0.0
  %852 = vmatpush2.msra.mxu0 %v103
  %853 = vmatprep.subr.mxu0 0.0
  %854 = vmatpush2.msra.mxu0 %v102
  %855 = vmatprep.subr.mxu0 0.0
  %856 = vmatpush2.msra.mxu0 %v101
  %857 = vmatprep.subr.mxu0 0.0
  %858 = vmatpush2.msra.mxu0 %v100
  %859 = vmatprep.subr.mxu0 0.0
  %860 = vmatpush2.msra.mxu0 %v99
  %861 = vmatprep.subr.mxu0 0.0
  %862 = vmatpush2.msra.mxu0 %v98
  %863 = vmatprep.subr.mxu0 0.0
  %864 = vmatpush2.msra.mxu0 %v97
  %865 = vmatprep.subr.mxu0 0.0
  %866 = vmatpush2.msra.mxu0 %v96
  %867 = vmatprep.subr.mxu0 0.0
  %868 = vmatpush2.msra.mxu0 %v95
  %869 = vmatprep.subr.mxu0 0.0
  %870 = vmatpush2.msra.mxu0 %v94
  %871 = vmatprep.subr.mxu0 0.0
  %872 = vmatpush2.msra.mxu0 %v93
  %873 = vmatprep.subr.mxu0 0.0
  %874 = vmatpush2.msra.mxu0 %v92
  %875 = vmatprep.subr.mxu0 0.0
  %876 = vmatpush2.msra.mxu0 %v91
  %877 = vmatprep.mubr.f32.mxu0 %v666
  %878 = vmatmul.mubr.f32.gmra.mxu0 %v665
  %v879 = vpop.f32.mrf.mxu0
  %v880 = vadd.f32 %v810, %v879
  %v881 = vpop.f32.mrf.mxu0
  %882 = vdwg.mxu0
  %v883 = vsel %vm356, %v649, 0.0
  %v884 = vsel %vm356, %v657, 0.0
  %v885 = vadd.f32 %v883, %v884
  %v886 = vsel %vm356, %v656, 0.0
  %v887 = vadd.f32 %v885, %v886
  %v888 = vsel %vm356, %v658, 0.0
  %v889 = vadd.f32 %v887, %v888
  %v890 = vsel %vm356, %v665, 0.0
  %v891 = vadd.f32 %v889, %v890
  %v892 = vsel %vm356, %v666, 0.0
  %v893 = vadd.f32 %v891, %v892
  %894 = vadd.xlane.f32.xlu0 %v893
  %v895 = vpop.xlane.xlu0 %894
  %v896 = vsel %vm109, %v895, %v880
  %s897 = scalar_lea.vmem %s2, 4
  %898 = vst.msk [vmem:[%s897] sm:$0x3] %vm371, %v896
  %s899 = scalar_lea.vmem %s0, 18
  %v900 = vld [vmem:[%s899] sm:$0x3f]
  %v901 = vunpack.c.l.bf16 %v900
  %v902 = vunpack.c.h.bf16 %v900
  %v905 = vcombine.high %v901, %v901
  %v907 = vunpack.c.l.s4 1983009808
  %v908 = vunpack.c.0.s8 %v907
  %v909 = vlaneseq
  %v910 = vshrl.u32 %v909, 7
  %v911 = vsub.s32 %v908, %v910
  %v912 = vrot.slane %v901, %v911
  %v914 = vunpack.c.l.s4 1983009808
  %v915 = vunpack.c.0.s8 %v914
  %v916 = vlaneseq
  %v917 = vshrl.u32 %v916, 7
  %v918 = vsub.s32 %v915, %v917
  %v919 = vrot.slane %v905, %v918
  %v920 = vcombine.high %v912, %v912
  %v921 = vcombine.high %v919, %v919
  %v923 = vunpack.c.l.s4 1983009808
  %v924 = vunpack.c.0.s8 %v923
  %v925 = vlaneseq
  %v926 = vshrl.u32 %v925, 7
  %v927 = vsub.s32 %v924, %v926
  %v928 = vrot.slane %v902, %v927
  %v929 = vcombine.high %v928, %v928
  %936 = vmatprep.subr.mxu0 0.0
  %937 = vmatpush1.msra.mxu0 %v26
  %938 = vmatprep.subr.mxu0 0.0
  %939 = vmatpush1.msra.mxu0 %v25
  %940 = vmatprep.subr.mxu0 0.0
  %941 = vmatpush1.msra.mxu0 %v24
  %942 = vmatprep.subr.mxu0 0.0
  %943 = vmatpush1.msra.mxu0 %v23
  %944 = vmatprep.subr.mxu0 0.0
  %945 = vmatpush1.msra.mxu0 %v22
  %946 = vmatprep.subr.mxu0 0.0
  %947 = vmatpush1.msra.mxu0 %v21
  %948 = vmatprep.subr.mxu0 0.0
  %949 = vmatpush1.msra.mxu0 %v20
  %950 = vmatprep.subr.mxu0 0.0
  %951 = vmatpush1.msra.mxu0 %v19
  %952 = vmatprep.subr.mxu0 0.0
  %953 = vmatpush1.msra.mxu0 %v18
  %954 = vmatprep.subr.mxu0 0.0
  %955 = vmatpush1.msra.mxu0 %v17
  %956 = vmatprep.subr.mxu0 0.0
  %957 = vmatpush1.msra.mxu0 %v16
  %958 = vmatprep.subr.mxu0 0.0
  %959 = vmatpush1.msra.mxu0 %v15
  %960 = vmatprep.subr.mxu0 0.0
  %961 = vmatpush1.msra.mxu0 %v14
  %962 = vmatprep.subr.mxu0 0.0
  %963 = vmatpush1.msra.mxu0 %v13
  %964 = vmatprep.subr.mxu0 0.0
  %965 = vmatpush1.msra.mxu0 %v12
  %966 = vmatprep.subr.mxu0 0.0
  %967 = vmatpush1.msra.mxu0 %v11
  %968 = vmatprep.subr.mxu0 0.0
  %969 = vmatpush2.msra.mxu0 %v42
  %970 = vmatprep.subr.mxu0 0.0
  %971 = vmatpush2.msra.mxu0 %v41
  %972 = vmatprep.subr.mxu0 0.0
  %973 = vmatpush2.msra.mxu0 %v40
  %974 = vmatprep.subr.mxu0 0.0
  %975 = vmatpush2.msra.mxu0 %v39
  %976 = vmatprep.subr.mxu0 0.0
  %977 = vmatpush2.msra.mxu0 %v38
  %978 = vmatprep.subr.mxu0 0.0
  %979 = vmatpush2.msra.mxu0 %v37
  %980 = vmatprep.subr.mxu0 0.0
  %981 = vmatpush2.msra.mxu0 %v36
  %982 = vmatprep.subr.mxu0 0.0
  %983 = vmatpush2.msra.mxu0 %v35
  %984 = vmatprep.subr.mxu0 0.0
  %985 = vmatpush2.msra.mxu0 %v34
  %986 = vmatprep.subr.mxu0 0.0
  %987 = vmatpush2.msra.mxu0 %v33
  %988 = vmatprep.subr.mxu0 0.0
  %989 = vmatpush2.msra.mxu0 %v32
  %990 = vmatprep.subr.mxu0 0.0
  %991 = vmatpush2.msra.mxu0 %v31
  %992 = vmatprep.subr.mxu0 0.0
  %993 = vmatpush2.msra.mxu0 %v30
  %994 = vmatprep.subr.mxu0 0.0
  %995 = vmatpush2.msra.mxu0 %v29
  %996 = vmatprep.subr.mxu0 0.0
  %997 = vmatpush2.msra.mxu0 %v28
  %998 = vmatprep.subr.mxu0 0.0
  %999 = vmatpush2.msra.mxu0 %v27
  %1000 = vmatprep.mubr.f32.mxu0 %v920
  %1001 = vmatmul.mubr.f32.gmra.mxu0 %v912
  %v1002 = vpop.f32.mrf.mxu0
  %v1003 = vadd.f32 0.0, %v1002
  %v1004 = vpop.f32.mrf.mxu0
  %1005 = vdwg.mxu0
  %1006 = vmatprep.subr.mxu0 0.0
  %1007 = vmatpush1.msra.mxu0 %v58
  %1008 = vmatprep.subr.mxu0 0.0
  %1009 = vmatpush1.msra.mxu0 %v57
  %1010 = vmatprep.subr.mxu0 0.0
  %1011 = vmatpush1.msra.mxu0 %v56
  %1012 = vmatprep.subr.mxu0 0.0
  %1013 = vmatpush1.msra.mxu0 %v55
  %1014 = vmatprep.subr.mxu0 0.0
  %1015 = vmatpush1.msra.mxu0 %v54
  %1016 = vmatprep.subr.mxu0 0.0
  %1017 = vmatpush1.msra.mxu0 %v53
  %1018 = vmatprep.subr.mxu0 0.0
  %1019 = vmatpush1.msra.mxu0 %v52
  %1020 = vmatprep.subr.mxu0 0.0
  %1021 = vmatpush1.msra.mxu0 %v51
  %1022 = vmatprep.subr.mxu0 0.0
  %1023 = vmatpush1.msra.mxu0 %v50
  %1024 = vmatprep.subr.mxu0 0.0
  %1025 = vmatpush1.msra.mxu0 %v49
  %1026 = vmatprep.subr.mxu0 0.0
  %1027 = vmatpush1.msra.mxu0 %v48
  %1028 = vmatprep.subr.mxu0 0.0
  %1029 = vmatpush1.msra.mxu0 %v47
  %1030 = vmatprep.subr.mxu0 0.0
  %1031 = vmatpush1.msra.mxu0 %v46
  %1032 = vmatprep.subr.mxu0 0.0
  %1033 = vmatpush1.msra.mxu0 %v45
  %1034 = vmatprep.subr.mxu0 0.0
  %1035 = vmatpush1.msra.mxu0 %v44
  %1036 = vmatprep.subr.mxu0 0.0
  %1037 = vmatpush1.msra.mxu0 %v43
  %1038 = vmatprep.subr.mxu0 0.0
  %1039 = vmatpush2.msra.mxu0 %v74
  %1040 = vmatprep.subr.mxu0 0.0
  %1041 = vmatpush2.msra.mxu0 %v73
  %1042 = vmatprep.subr.mxu0 0.0
  %1043 = vmatpush2.msra.mxu0 %v72
  %1044 = vmatprep.subr.mxu0 0.0
  %1045 = vmatpush2.msra.mxu0 %v71
  %1046 = vmatprep.subr.mxu0 0.0
  %1047 = vmatpush2.msra.mxu0 %v70
  %1048 = vmatprep.subr.mxu0 0.0
  %1049 = vmatpush2.msra.mxu0 %v69
  %1050 = vmatprep.subr.mxu0 0.0
  %1051 = vmatpush2.msra.mxu0 %v68
  %1052 = vmatprep.subr.mxu0 0.0
  %1053 = vmatpush2.msra.mxu0 %v67
  %1054 = vmatprep.subr.mxu0 0.0
  %1055 = vmatpush2.msra.mxu0 %v66
  %1056 = vmatprep.subr.mxu0 0.0
  %1057 = vmatpush2.msra.mxu0 %v65
  %1058 = vmatprep.subr.mxu0 0.0
  %1059 = vmatpush2.msra.mxu0 %v64
  %1060 = vmatprep.subr.mxu0 0.0
  %1061 = vmatpush2.msra.mxu0 %v63
  %1062 = vmatprep.subr.mxu0 0.0
  %1063 = vmatpush2.msra.mxu0 %v62
  %1064 = vmatprep.subr.mxu0 0.0
  %1065 = vmatpush2.msra.mxu0 %v61
  %1066 = vmatprep.subr.mxu0 0.0
  %1067 = vmatpush2.msra.mxu0 %v60
  %1068 = vmatprep.subr.mxu0 0.0
  %1069 = vmatpush2.msra.mxu0 %v59
  %1070 = vmatprep.mubr.f32.mxu0 %v921
  %1071 = vmatmul.mubr.f32.gmra.mxu0 %v919
  %v1072 = vpop.f32.mrf.mxu0
  %v1073 = vadd.f32 %v1003, %v1072
  %v1074 = vpop.f32.mrf.mxu0
  %1075 = vdwg.mxu0
  %1076 = vmatprep.subr.mxu0 0.0
  %1077 = vmatpush1.msra.mxu0 %v90
  %1078 = vmatprep.subr.mxu0 0.0
  %1079 = vmatpush1.msra.mxu0 %v89
  %1080 = vmatprep.subr.mxu0 0.0
  %1081 = vmatpush1.msra.mxu0 %v88
  %1082 = vmatprep.subr.mxu0 0.0
  %1083 = vmatpush1.msra.mxu0 %v87
  %1084 = vmatprep.subr.mxu0 0.0
  %1085 = vmatpush1.msra.mxu0 %v86
  %1086 = vmatprep.subr.mxu0 0.0
  %1087 = vmatpush1.msra.mxu0 %v85
  %1088 = vmatprep.subr.mxu0 0.0
  %1089 = vmatpush1.msra.mxu0 %v84
  %1090 = vmatprep.subr.mxu0 0.0
  %1091 = vmatpush1.msra.mxu0 %v83
  %1092 = vmatprep.subr.mxu0 0.0
  %1093 = vmatpush1.msra.mxu0 %v82
  %1094 = vmatprep.subr.mxu0 0.0
  %1095 = vmatpush1.msra.mxu0 %v81
  %1096 = vmatprep.subr.mxu0 0.0
  %1097 = vmatpush1.msra.mxu0 %v80
  %1098 = vmatprep.subr.mxu0 0.0
  %1099 = vmatpush1.msra.mxu0 %v79
  %1100 = vmatprep.subr.mxu0 0.0
  %1101 = vmatpush1.msra.mxu0 %v78
  %1102 = vmatprep.subr.mxu0 0.0
  %1103 = vmatpush1.msra.mxu0 %v77
  %1104 = vmatprep.subr.mxu0 0.0
  %1105 = vmatpush1.msra.mxu0 %v76
  %1106 = vmatprep.subr.mxu0 0.0
  %1107 = vmatpush1.msra.mxu0 %v75
  %1108 = vmatprep.subr.mxu0 0.0
  %1109 = vmatpush2.msra.mxu0 %v106
  %1110 = vmatprep.subr.mxu0 0.0
  %1111 = vmatpush2.msra.mxu0 %v105
  %1112 = vmatprep.subr.mxu0 0.0
  %1113 = vmatpush2.msra.mxu0 %v104
  %1114 = vmatprep.subr.mxu0 0.0
  %1115 = vmatpush2.msra.mxu0 %v103
  %1116 = vmatprep.subr.mxu0 0.0
  %1117 = vmatpush2.msra.mxu0 %v102
  %1118 = vmatprep.subr.mxu0 0.0
  %1119 = vmatpush2.msra.mxu0 %v101
  %1120 = vmatprep.subr.mxu0 0.0
  %1121 = vmatpush2.msra.mxu0 %v100
  %1122 = vmatprep.subr.mxu0 0.0
  %1123 = vmatpush2.msra.mxu0 %v99
  %1124 = vmatprep.subr.mxu0 0.0
  %1125 = vmatpush2.msra.mxu0 %v98
  %1126 = vmatprep.subr.mxu0 0.0
  %1127 = vmatpush2.msra.mxu0 %v97
  %1128 = vmatprep.subr.mxu0 0.0
  %1129 = vmatpush2.msra.mxu0 %v96
  %1130 = vmatprep.subr.mxu0 0.0
  %1131 = vmatpush2.msra.mxu0 %v95
  %1132 = vmatprep.subr.mxu0 0.0
  %1133 = vmatpush2.msra.mxu0 %v94
  %1134 = vmatprep.subr.mxu0 0.0
  %1135 = vmatpush2.msra.mxu0 %v93
  %1136 = vmatprep.subr.mxu0 0.0
  %1137 = vmatpush2.msra.mxu0 %v92
  %1138 = vmatprep.subr.mxu0 0.0
  %1139 = vmatpush2.msra.mxu0 %v91
  %1140 = vmatprep.mubr.f32.mxu0 %v929
  %1141 = vmatmul.mubr.f32.gmra.mxu0 %v928
  %v1142 = vpop.f32.mrf.mxu0
  %v1143 = vadd.f32 %v1073, %v1142
  %v1144 = vpop.f32.mrf.mxu0
  %1145 = vdwg.mxu0
  %v1146 = vsel %vm356, %v912, 0.0
  %v1147 = vsel %vm356, %v920, 0.0
  %v1148 = vadd.f32 %v1146, %v1147
  %v1149 = vsel %vm356, %v919, 0.0
  %v1150 = vadd.f32 %v1148, %v1149
  %v1151 = vsel %vm356, %v921, 0.0
  %v1152 = vadd.f32 %v1150, %v1151
  %v1153 = vsel %vm356, %v928, 0.0
  %v1154 = vadd.f32 %v1152, %v1153
  %v1155 = vsel %vm356, %v929, 0.0
  %v1156 = vadd.f32 %v1154, %v1155
  %1157 = vadd.xlane.f32.xlu0 %v1156
  %v1158 = vpop.xlane.xlu0 %1157
  %v1159 = vsel %vm109, %v1158, %v1143
  %s1160 = scalar_lea.vmem %s2, 6
  %1161 = vst.msk [vmem:[%s1160] sm:$0x3] %vm371, %v1159
  %s1162 = scalar_lea.vmem %s0, 24
  %v1163 = vld [vmem:[%s1162] sm:$0x3f]
  %v1164 = vunpack.c.l.bf16 %v1163
  %v1165 = vunpack.c.h.bf16 %v1163
  %v1168 = vcombine.high %v1164, %v1164
  %v1170 = vunpack.c.l.s4 1983009808
  %v1171 = vunpack.c.0.s8 %v1170
  %v1172 = vlaneseq
  %v1173 = vshrl.u32 %v1172, 7
  %v1174 = vsub.s32 %v1171, %v1173
  %v1175 = vrot.slane %v1164, %v1174
  %v1177 = vunpack.c.l.s4 1983009808
  %v1178 = vunpack.c.0.s8 %v1177
  %v1179 = vlaneseq
  %v1180 = vshrl.u32 %v1179, 7
  %v1181 = vsub.s32 %v1178, %v1180
  %v1182 = vrot.slane %v1168, %v1181
  %v1183 = vcombine.high %v1175, %v1175
  %v1184 = vcombine.high %v1182, %v1182
  %v1186 = vunpack.c.l.s4 1983009808
  %v1187 = vunpack.c.0.s8 %v1186
  %v1188 = vlaneseq
  %v1189 = vshrl.u32 %v1188, 7
  %v1190 = vsub.s32 %v1187, %v1189
  %v1191 = vrot.slane %v1165, %v1190
  %v1192 = vcombine.high %v1191, %v1191
  %1199 = vmatprep.subr.mxu0 0.0
  %1200 = vmatpush1.msra.mxu0 %v26
  %1201 = vmatprep.subr.mxu0 0.0
  %1202 = vmatpush1.msra.mxu0 %v25
  %1203 = vmatprep.subr.mxu0 0.0
  %1204 = vmatpush1.msra.mxu0 %v24
  %1205 = vmatprep.subr.mxu0 0.0
  %1206 = vmatpush1.msra.mxu0 %v23
  %1207 = vmatprep.subr.mxu0 0.0
  %1208 = vmatpush1.msra.mxu0 %v22
  %1209 = vmatprep.subr.mxu0 0.0
  %1210 = vmatpush1.msra.mxu0 %v21
  %1211 = vmatprep.subr.mxu0 0.0
  %1212 = vmatpush1.msra.mxu0 %v20
  %1213 = vmatprep.subr.mxu0 0.0
  %1214 = vmatpush1.msra.mxu0 %v19
  %1215 = vmatprep.subr.mxu0 0.0
  %1216 = vmatpush1.msra.mxu0 %v18
  %1217 = vmatprep.subr.mxu0 0.0
  %1218 = vmatpush1.msra.mxu0 %v17
  %1219 = vmatprep.subr.mxu0 0.0
  %1220 = vmatpush1.msra.mxu0 %v16
  %1221 = vmatprep.subr.mxu0 0.0
  %1222 = vmatpush1.msra.mxu0 %v15
  %1223 = vmatprep.subr.mxu0 0.0
  %1224 = vmatpush1.msra.mxu0 %v14
  %1225 = vmatprep.subr.mxu0 0.0
  %1226 = vmatpush1.msra.mxu0 %v13
  %1227 = vmatprep.subr.mxu0 0.0
  %1228 = vmatpush1.msra.mxu0 %v12
  %1229 = vmatprep.subr.mxu0 0.0
  %1230 = vmatpush1.msra.mxu0 %v11
  %1231 = vmatprep.subr.mxu0 0.0
  %1232 = vmatpush2.msra.mxu0 %v42
  %1233 = vmatprep.subr.mxu0 0.0
  %1234 = vmatpush2.msra.mxu0 %v41
  %1235 = vmatprep.subr.mxu0 0.0
  %1236 = vmatpush2.msra.mxu0 %v40
  %1237 = vmatprep.subr.mxu0 0.0
  %1238 = vmatpush2.msra.mxu0 %v39
  %1239 = vmatprep.subr.mxu0 0.0
  %1240 = vmatpush2.msra.mxu0 %v38
  %1241 = vmatprep.subr.mxu0 0.0
  %1242 = vmatpush2.msra.mxu0 %v37
  %1243 = vmatprep.subr.mxu0 0.0
  %1244 = vmatpush2.msra.mxu0 %v36
  %1245 = vmatprep.subr.mxu0 0.0
  %1246 = vmatpush2.msra.mxu0 %v35
  %1247 = vmatprep.subr.mxu0 0.0
  %1248 = vmatpush2.msra.mxu0 %v34
  %1249 = vmatprep.subr.mxu0 0.0
  %1250 = vmatpush2.msra.mxu0 %v33
  %1251 = vmatprep.subr.mxu0 0.0
  %1252 = vmatpush2.msra.mxu0 %v32
  %1253 = vmatprep.subr.mxu0 0.0
  %1254 = vmatpush2.msra.mxu0 %v31
  %1255 = vmatprep.subr.mxu0 0.0
  %1256 = vmatpush2.msra.mxu0 %v30
  %1257 = vmatprep.subr.mxu0 0.0
  %1258 = vmatpush2.msra.mxu0 %v29
  %1259 = vmatprep.subr.mxu0 0.0
  %1260 = vmatpush2.msra.mxu0 %v28
  %1261 = vmatprep.subr.mxu0 0.0
  %1262 = vmatpush2.msra.mxu0 %v27
  %1263 = vmatprep.mubr.f32.mxu0 %v1183
  %1264 = vmatmul.mubr.f32.gmra.mxu0 %v1175
  %v1265 = vpop.f32.mrf.mxu0
  %v1266 = vadd.f32 0.0, %v1265
  %v1267 = vpop.f32.mrf.mxu0
  %1268 = vdwg.mxu0
  %1269 = vmatprep.subr.mxu0 0.0
  %1270 = vmatpush1.msra.mxu0 %v58
  %1271 = vmatprep.subr.mxu0 0.0
  %1272 = vmatpush1.msra.mxu0 %v57
  %1273 = vmatprep.subr.mxu0 0.0
  %1274 = vmatpush1.msra.mxu0 %v56
  %1275 = vmatprep.subr.mxu0 0.0
  %1276 = vmatpush1.msra.mxu0 %v55
  %1277 = vmatprep.subr.mxu0 0.0
  %1278 = vmatpush1.msra.mxu0 %v54
  %1279 = vmatprep.subr.mxu0 0.0
  %1280 = vmatpush1.msra.mxu0 %v53
  %1281 = vmatprep.subr.mxu0 0.0
  %1282 = vmatpush1.msra.mxu0 %v52
  %1283 = vmatprep.subr.mxu0 0.0
  %1284 = vmatpush1.msra.mxu0 %v51
  %1285 = vmatprep.subr.mxu0 0.0
  %1286 = vmatpush1.msra.mxu0 %v50
  %1287 = vmatprep.subr.mxu0 0.0
  %1288 = vmatpush1.msra.mxu0 %v49
  %1289 = vmatprep.subr.mxu0 0.0
  %1290 = vmatpush1.msra.mxu0 %v48
  %1291 = vmatprep.subr.mxu0 0.0
  %1292 = vmatpush1.msra.mxu0 %v47
  %1293 = vmatprep.subr.mxu0 0.0
  %1294 = vmatpush1.msra.mxu0 %v46
  %1295 = vmatprep.subr.mxu0 0.0
  %1296 = vmatpush1.msra.mxu0 %v45
  %1297 = vmatprep.subr.mxu0 0.0
  %1298 = vmatpush1.msra.mxu0 %v44
  %1299 = vmatprep.subr.mxu0 0.0
  %1300 = vmatpush1.msra.mxu0 %v43
  %1301 = vmatprep.subr.mxu0 0.0
  %1302 = vmatpush2.msra.mxu0 %v74
  %1303 = vmatprep.subr.mxu0 0.0
  %1304 = vmatpush2.msra.mxu0 %v73
  %1305 = vmatprep.subr.mxu0 0.0
  %1306 = vmatpush2.msra.mxu0 %v72
  %1307 = vmatprep.subr.mxu0 0.0
  %1308 = vmatpush2.msra.mxu0 %v71
  %1309 = vmatprep.subr.mxu0 0.0
  %1310 = vmatpush2.msra.mxu0 %v70
  %1311 = vmatprep.subr.mxu0 0.0
  %1312 = vmatpush2.msra.mxu0 %v69
  %1313 = vmatprep.subr.mxu0 0.0
  %1314 = vmatpush2.msra.mxu0 %v68
  %1315 = vmatprep.subr.mxu0 0.0
  %1316 = vmatpush2.msra.mxu0 %v67
  %1317 = vmatprep.subr.mxu0 0.0
  %1318 = vmatpush2.msra.mxu0 %v66
  %1319 = vmatprep.subr.mxu0 0.0
  %1320 = vmatpush2.msra.mxu0 %v65
  %1321 = vmatprep.subr.mxu0 0.0
  %1322 = vmatpush2.msra.mxu0 %v64
  %1323 = vmatprep.subr.mxu0 0.0
  %1324 = vmatpush2.msra.mxu0 %v63
  %1325 = vmatprep.subr.mxu0 0.0
  %1326 = vmatpush2.msra.mxu0 %v62
  %1327 = vmatprep.subr.mxu0 0.0
  %1328 = vmatpush2.msra.mxu0 %v61
  %1329 = vmatprep.subr.mxu0 0.0
  %1330 = vmatpush2.msra.mxu0 %v60
  %1331 = vmatprep.subr.mxu0 0.0
  %1332 = vmatpush2.msra.mxu0 %v59
  %1333 = vmatprep.mubr.f32.mxu0 %v1184
  %1334 = vmatmul.mubr.f32.gmra.mxu0 %v1182
  %v1335 = vpop.f32.mrf.mxu0
  %v1336 = vadd.f32 %v1266, %v1335
  %v1337 = vpop.f32.mrf.mxu0
  %1338 = vdwg.mxu0
  %1339 = vmatprep.subr.mxu0 0.0
  %1340 = vmatpush1.msra.mxu0 %v90
  %1341 = vmatprep.subr.mxu0 0.0
  %1342 = vmatpush1.msra.mxu0 %v89
  %1343 = vmatprep.subr.mxu0 0.0
  %1344 = vmatpush1.msra.mxu0 %v88
  %1345 = vmatprep.subr.mxu0 0.0
  %1346 = vmatpush1.msra.mxu0 %v87
  %1347 = vmatprep.subr.mxu0 0.0
  %1348 = vmatpush1.msra.mxu0 %v86
  %1349 = vmatprep.subr.mxu0 0.0
  %1350 = vmatpush1.msra.mxu0 %v85
  %1351 = vmatprep.subr.mxu0 0.0
  %1352 = vmatpush1.msra.mxu0 %v84
  %1353 = vmatprep.subr.mxu0 0.0
  %1354 = vmatpush1.msra.mxu0 %v83
  %1355 = vmatprep.subr.mxu0 0.0
  %1356 = vmatpush1.msra.mxu0 %v82
  %1357 = vmatprep.subr.mxu0 0.0
  %1358 = vmatpush1.msra.mxu0 %v81
  %1359 = vmatprep.subr.mxu0 0.0
  %1360 = vmatpush1.msra.mxu0 %v80
  %1361 = vmatprep.subr.mxu0 0.0
  %1362 = vmatpush1.msra.mxu0 %v79
  %1363 = vmatprep.subr.mxu0 0.0
  %1364 = vmatpush1.msra.mxu0 %v78
  %1365 = vmatprep.subr.mxu0 0.0
  %1366 = vmatpush1.msra.mxu0 %v77
  %1367 = vmatprep.subr.mxu0 0.0
  %1368 = vmatpush1.msra.mxu0 %v76
  %1369 = vmatprep.subr.mxu0 0.0
  %1370 = vmatpush1.msra.mxu0 %v75
  %1371 = vmatprep.subr.mxu0 0.0
  %1372 = vmatpush2.msra.mxu0 %v106
  %1373 = vmatprep.subr.mxu0 0.0
  %1374 = vmatpush2.msra.mxu0 %v105
  %1375 = vmatprep.subr.mxu0 0.0
  %1376 = vmatpush2.msra.mxu0 %v104
  %1377 = vmatprep.subr.mxu0 0.0
  %1378 = vmatpush2.msra.mxu0 %v103
  %1379 = vmatprep.subr.mxu0 0.0
  %1380 = vmatpush2.msra.mxu0 %v102
  %1381 = vmatprep.subr.mxu0 0.0
  %1382 = vmatpush2.msra.mxu0 %v101
  %1383 = vmatprep.subr.mxu0 0.0
  %1384 = vmatpush2.msra.mxu0 %v100
  %1385 = vmatprep.subr.mxu0 0.0
  %1386 = vmatpush2.msra.mxu0 %v99
  %1387 = vmatprep.subr.mxu0 0.0
  %1388 = vmatpush2.msra.mxu0 %v98
  %1389 = vmatprep.subr.mxu0 0.0
  %1390 = vmatpush2.msra.mxu0 %v97
  %1391 = vmatprep.subr.mxu0 0.0
  %1392 = vmatpush2.msra.mxu0 %v96
  %1393 = vmatprep.subr.mxu0 0.0
  %1394 = vmatpush2.msra.mxu0 %v95
  %1395 = vmatprep.subr.mxu0 0.0
  %1396 = vmatpush2.msra.mxu0 %v94
  %1397 = vmatprep.subr.mxu0 0.0
  %1398 = vmatpush2.msra.mxu0 %v93
  %1399 = vmatprep.subr.mxu0 0.0
  %1400 = vmatpush2.msra.mxu0 %v92
  %1401 = vmatprep.subr.mxu0 0.0
  %1402 = vmatpush2.msra.mxu0 %v91
  %1403 = vmatprep.mubr.f32.mxu0 %v1192
  %1404 = vmatmul.mubr.f32.gmra.mxu0 %v1191
  %v1405 = vpop.f32.mrf.mxu0
  %v1406 = vadd.f32 %v1336, %v1405
  %v1407 = vpop.f32.mrf.mxu0
  %1408 = vdwg.mxu0
  %v1409 = vsel %vm356, %v1175, 0.0
  %v1410 = vsel %vm356, %v1183, 0.0
  %v1411 = vadd.f32 %v1409, %v1410
  %v1412 = vsel %vm356, %v1182, 0.0
  %v1413 = vadd.f32 %v1411, %v1412
  %v1414 = vsel %vm356, %v1184, 0.0
  %v1415 = vadd.f32 %v1413, %v1414
  %v1416 = vsel %vm356, %v1191, 0.0
  %v1417 = vadd.f32 %v1415, %v1416
  %v1418 = vsel %vm356, %v1192, 0.0
  %v1419 = vadd.f32 %v1417, %v1418
  %1420 = vadd.xlane.f32.xlu0 %v1419
  %v1421 = vpop.xlane.xlu0 %1420
  %v1422 = vsel %vm109, %v1421, %v1406
  %s1423 = scalar_lea.vmem %s2, 8
  %1424 = vst.msk [vmem:[%s1423] sm:$0x3] %vm371, %v1422
  %s1425 = scalar_lea.vmem %s0, 30
  %v1426 = vld [vmem:[%s1425] sm:$0x3f]
  %v1427 = vunpack.c.l.bf16 %v1426
  %v1428 = vunpack.c.h.bf16 %v1426
  %v1431 = vcombine.high %v1427, %v1427
  %v1433 = vunpack.c.l.s4 1983009808
  %v1434 = vunpack.c.0.s8 %v1433
  %v1435 = vlaneseq
  %v1436 = vshrl.u32 %v1435, 7
  %v1437 = vsub.s32 %v1434, %v1436
  %v1438 = vrot.slane %v1427, %v1437
  %v1440 = vunpack.c.l.s4 1983009808
  %v1441 = vunpack.c.0.s8 %v1440
  %v1442 = vlaneseq
  %v1443 = vshrl.u32 %v1442, 7
  %v1444 = vsub.s32 %v1441, %v1443
  %v1445 = vrot.slane %v1431, %v1444
  %v1446 = vcombine.high %v1438, %v1438
  %v1447 = vcombine.high %v1445, %v1445
  %v1449 = vunpack.c.l.s4 1983009808
  %v1450 = vunpack.c.0.s8 %v1449
  %v1451 = vlaneseq
  %v1452 = vshrl.u32 %v1451, 7
  %v1453 = vsub.s32 %v1450, %v1452
  %v1454 = vrot.slane %v1428, %v1453
  %v1455 = vcombine.high %v1454, %v1454
  %1462 = vmatprep.subr.mxu0 0.0
  %1463 = vmatpush1.msra.mxu0 %v26
  %1464 = vmatprep.subr.mxu0 0.0
  %1465 = vmatpush1.msra.mxu0 %v25
  %1466 = vmatprep.subr.mxu0 0.0
  %1467 = vmatpush1.msra.mxu0 %v24
  %1468 = vmatprep.subr.mxu0 0.0
  %1469 = vmatpush1.msra.mxu0 %v23
  %1470 = vmatprep.subr.mxu0 0.0
  %1471 = vmatpush1.msra.mxu0 %v22
  %1472 = vmatprep.subr.mxu0 0.0
  %1473 = vmatpush1.msra.mxu0 %v21
  %1474 = vmatprep.subr.mxu0 0.0
  %1475 = vmatpush1.msra.mxu0 %v20
  %1476 = vmatprep.subr.mxu0 0.0
  %1477 = vmatpush1.msra.mxu0 %v19
  %1478 = vmatprep.subr.mxu0 0.0
  %1479 = vmatpush1.msra.mxu0 %v18
  %1480 = vmatprep.subr.mxu0 0.0
  %1481 = vmatpush1.msra.mxu0 %v17
  %1482 = vmatprep.subr.mxu0 0.0
  %1483 = vmatpush1.msra.mxu0 %v16
  %1484 = vmatprep.subr.mxu0 0.0
  %1485 = vmatpush1.msra.mxu0 %v15
  %1486 = vmatprep.subr.mxu0 0.0
  %1487 = vmatpush1.msra.mxu0 %v14
  %1488 = vmatprep.subr.mxu0 0.0
  %1489 = vmatpush1.msra.mxu0 %v13
  %1490 = vmatprep.subr.mxu0 0.0
  %1491 = vmatpush1.msra.mxu0 %v12
  %1492 = vmatprep.subr.mxu0 0.0
  %1493 = vmatpush1.msra.mxu0 %v11
  %1494 = vmatprep.subr.mxu0 0.0
  %1495 = vmatpush2.msra.mxu0 %v42
  %1496 = vmatprep.subr.mxu0 0.0
  %1497 = vmatpush2.msra.mxu0 %v41
  %1498 = vmatprep.subr.mxu0 0.0
  %1499 = vmatpush2.msra.mxu0 %v40
  %1500 = vmatprep.subr.mxu0 0.0
  %1501 = vmatpush2.msra.mxu0 %v39
  %1502 = vmatprep.subr.mxu0 0.0
  %1503 = vmatpush2.msra.mxu0 %v38
  %1504 = vmatprep.subr.mxu0 0.0
  %1505 = vmatpush2.msra.mxu0 %v37
  %1506 = vmatprep.subr.mxu0 0.0
  %1507 = vmatpush2.msra.mxu0 %v36
  %1508 = vmatprep.subr.mxu0 0.0
  %1509 = vmatpush2.msra.mxu0 %v35
  %1510 = vmatprep.subr.mxu0 0.0
  %1511 = vmatpush2.msra.mxu0 %v34
  %1512 = vmatprep.subr.mxu0 0.0
  %1513 = vmatpush2.msra.mxu0 %v33
  %1514 = vmatprep.subr.mxu0 0.0
  %1515 = vmatpush2.msra.mxu0 %v32
  %1516 = vmatprep.subr.mxu0 0.0
  %1517 = vmatpush2.msra.mxu0 %v31
  %1518 = vmatprep.subr.mxu0 0.0
  %1519 = vmatpush2.msra.mxu0 %v30
  %1520 = vmatprep.subr.mxu0 0.0
  %1521 = vmatpush2.msra.mxu0 %v29
  %1522 = vmatprep.subr.mxu0 0.0
  %1523 = vmatpush2.msra.mxu0 %v28
  %1524 = vmatprep.subr.mxu0 0.0
  %1525 = vmatpush2.msra.mxu0 %v27
  %1526 = vmatprep.mubr.f32.mxu0 %v1446
  %1527 = vmatmul.mubr.f32.gmra.mxu0 %v1438
  %v1528 = vpop.f32.mrf.mxu0
  %v1529 = vadd.f32 0.0, %v1528
  %v1530 = vpop.f32.mrf.mxu0
  %1531 = vdwg.mxu0
  %1532 = vmatprep.subr.mxu0 0.0
  %1533 = vmatpush1.msra.mxu0 %v58
  %1534 = vmatprep.subr.mxu0 0.0
  %1535 = vmatpush1.msra.mxu0 %v57
  %1536 = vmatprep.subr.mxu0 0.0
  %1537 = vmatpush1.msra.mxu0 %v56
  %1538 = vmatprep.subr.mxu0 0.0
  %1539 = vmatpush1.msra.mxu0 %v55
  %1540 = vmatprep.subr.mxu0 0.0
  %1541 = vmatpush1.msra.mxu0 %v54
  %1542 = vmatprep.subr.mxu0 0.0
  %1543 = vmatpush1.msra.mxu0 %v53
  %1544 = vmatprep.subr.mxu0 0.0
  %1545 = vmatpush1.msra.mxu0 %v52
  %1546 = vmatprep.subr.mxu0 0.0
  %1547 = vmatpush1.msra.mxu0 %v51
  %1548 = vmatprep.subr.mxu0 0.0
  %1549 = vmatpush1.msra.mxu0 %v50
  %1550 = vmatprep.subr.mxu0 0.0
  %1551 = vmatpush1.msra.mxu0 %v49
  %1552 = vmatprep.subr.mxu0 0.0
  %1553 = vmatpush1.msra.mxu0 %v48
  %1554 = vmatprep.subr.mxu0 0.0
  %1555 = vmatpush1.msra.mxu0 %v47
  %1556 = vmatprep.subr.mxu0 0.0
  %1557 = vmatpush1.msra.mxu0 %v46
  %1558 = vmatprep.subr.mxu0 0.0
  %1559 = vmatpush1.msra.mxu0 %v45
  %1560 = vmatprep.subr.mxu0 0.0
  %1561 = vmatpush1.msra.mxu0 %v44
  %1562 = vmatprep.subr.mxu0 0.0
  %1563 = vmatpush1.msra.mxu0 %v43
  %1564 = vmatprep.subr.mxu0 0.0
  %1565 = vmatpush2.msra.mxu0 %v74
  %1566 = vmatprep.subr.mxu0 0.0
  %1567 = vmatpush2.msra.mxu0 %v73
  %1568 = vmatprep.subr.mxu0 0.0
  %1569 = vmatpush2.msra.mxu0 %v72
  %1570 = vmatprep.subr.mxu0 0.0
  %1571 = vmatpush2.msra.mxu0 %v71
  %1572 = vmatprep.subr.mxu0 0.0
  %1573 = vmatpush2.msra.mxu0 %v70
  %1574 = vmatprep.subr.mxu0 0.0
  %1575 = vmatpush2.msra.mxu0 %v69
  %1576 = vmatprep.subr.mxu0 0.0
  %1577 = vmatpush2.msra.mxu0 %v68
  %1578 = vmatprep.subr.mxu0 0.0
  %1579 = vmatpush2.msra.mxu0 %v67
  %1580 = vmatprep.subr.mxu0 0.0
  %1581 = vmatpush2.msra.mxu0 %v66
  %1582 = vmatprep.subr.mxu0 0.0
  %1583 = vmatpush2.msra.mxu0 %v65
  %1584 = vmatprep.subr.mxu0 0.0
  %1585 = vmatpush2.msra.mxu0 %v64
  %1586 = vmatprep.subr.mxu0 0.0
  %1587 = vmatpush2.msra.mxu0 %v63
  %1588 = vmatprep.subr.mxu0 0.0
  %1589 = vmatpush2.msra.mxu0 %v62
  %1590 = vmatprep.subr.mxu0 0.0
  %1591 = vmatpush2.msra.mxu0 %v61
  %1592 = vmatprep.subr.mxu0 0.0
  %1593 = vmatpush2.msra.mxu0 %v60
  %1594 = vmatprep.subr.mxu0 0.0
  %1595 = vmatpush2.msra.mxu0 %v59
  %1596 = vmatprep.mubr.f32.mxu0 %v1447
  %1597 = vmatmul.mubr.f32.gmra.mxu0 %v1445
  %v1598 = vpop.f32.mrf.mxu0
  %v1599 = vadd.f32 %v1529, %v1598
  %v1600 = vpop.f32.mrf.mxu0
  %1601 = vdwg.mxu0
  %1602 = vmatprep.subr.mxu0 0.0
  %1603 = vmatpush1.msra.mxu0 %v90
  %1604 = vmatprep.subr.mxu0 0.0
  %1605 = vmatpush1.msra.mxu0 %v89
  %1606 = vmatprep.subr.mxu0 0.0
  %1607 = vmatpush1.msra.mxu0 %v88
  %1608 = vmatprep.subr.mxu0 0.0
  %1609 = vmatpush1.msra.mxu0 %v87
  %1610 = vmatprep.subr.mxu0 0.0
  %1611 = vmatpush1.msra.mxu0 %v86
  %1612 = vmatprep.subr.mxu0 0.0
  %1613 = vmatpush1.msra.mxu0 %v85
  %1614 = vmatprep.subr.mxu0 0.0
  %1615 = vmatpush1.msra.mxu0 %v84
  %1616 = vmatprep.subr.mxu0 0.0
  %1617 = vmatpush1.msra.mxu0 %v83
  %1618 = vmatprep.subr.mxu0 0.0
  %1619 = vmatpush1.msra.mxu0 %v82
  %1620 = vmatprep.subr.mxu0 0.0
  %1621 = vmatpush1.msra.mxu0 %v81
  %1622 = vmatprep.subr.mxu0 0.0
  %1623 = vmatpush1.msra.mxu0 %v80
  %1624 = vmatprep.subr.mxu0 0.0
  %1625 = vmatpush1.msra.mxu0 %v79
  %1626 = vmatprep.subr.mxu0 0.0
  %1627 = vmatpush1.msra.mxu0 %v78
  %1628 = vmatprep.subr.mxu0 0.0
  %1629 = vmatpush1.msra.mxu0 %v77
  %1630 = vmatprep.subr.mxu0 0.0
  %1631 = vmatpush1.msra.mxu0 %v76
  %1632 = vmatprep.subr.mxu0 0.0
  %1633 = vmatpush1.msra.mxu0 %v75
  %1634 = vmatprep.subr.mxu0 0.0
  %1635 = vmatpush2.msra.mxu0 %v106
  %1636 = vmatprep.subr.mxu0 0.0
  %1637 = vmatpush2.msra.mxu0 %v105
  %1638 = vmatprep.subr.mxu0 0.0
  %1639 = vmatpush2.msra.mxu0 %v104
  %1640 = vmatprep.subr.mxu0 0.0
  %1641 = vmatpush2.msra.mxu0 %v103
  %1642 = vmatprep.subr.mxu0 0.0
  %1643 = vmatpush2.msra.mxu0 %v102
  %1644 = vmatprep.subr.mxu0 0.0
  %1645 = vmatpush2.msra.mxu0 %v101
  %1646 = vmatprep.subr.mxu0 0.0
  %1647 = vmatpush2.msra.mxu0 %v100
  %1648 = vmatprep.subr.mxu0 0.0
  %1649 = vmatpush2.msra.mxu0 %v99
  %1650 = vmatprep.subr.mxu0 0.0
  %1651 = vmatpush2.msra.mxu0 %v98
  %1652 = vmatprep.subr.mxu0 0.0
  %1653 = vmatpush2.msra.mxu0 %v97
  %1654 = vmatprep.subr.mxu0 0.0
  %1655 = vmatpush2.msra.mxu0 %v96
  %1656 = vmatprep.subr.mxu0 0.0
  %1657 = vmatpush2.msra.mxu0 %v95
  %1658 = vmatprep.subr.mxu0 0.0
  %1659 = vmatpush2.msra.mxu0 %v94
  %1660 = vmatprep.subr.mxu0 0.0
  %1661 = vmatpush2.msra.mxu0 %v93
  %1662 = vmatprep.subr.mxu0 0.0
  %1663 = vmatpush2.msra.mxu0 %v92
  %1664 = vmatprep.subr.mxu0 0.0
  %1665 = vmatpush2.msra.mxu0 %v91
  %1666 = vmatprep.mubr.f32.mxu0 %v1455
  %1667 = vmatmul.mubr.f32.gmra.mxu0 %v1454
  %v1668 = vpop.f32.mrf.mxu0
  %v1669 = vadd.f32 %v1599, %v1668
  %v1670 = vpop.f32.mrf.mxu0
  %1671 = vdwg.mxu0
  %v1672 = vsel %vm356, %v1438, 0.0
  %v1673 = vsel %vm356, %v1446, 0.0
  %v1674 = vadd.f32 %v1672, %v1673
  %v1675 = vsel %vm356, %v1445, 0.0
  %v1676 = vadd.f32 %v1674, %v1675
  %v1677 = vsel %vm356, %v1447, 0.0
  %v1678 = vadd.f32 %v1676, %v1677
  %v1679 = vsel %vm356, %v1454, 0.0
  %v1680 = vadd.f32 %v1678, %v1679
  %v1681 = vsel %vm356, %v1455, 0.0
  %v1682 = vadd.f32 %v1680, %v1681
  %1683 = vadd.xlane.f32.xlu0 %v1682
  %v1684 = vpop.xlane.xlu0 %1683
  %v1685 = vsel %vm109, %v1684, %v1669
  %s1686 = scalar_lea.vmem %s2, 10
  %1687 = vst.msk [vmem:[%s1686] sm:$0x3] %vm371, %v1685
  %s1688 = scalar_lea.vmem %s0, 36
  %v1689 = vld [vmem:[%s1688] sm:$0x3f]
  %v1690 = vunpack.c.l.bf16 %v1689
  %v1691 = vunpack.c.h.bf16 %v1689
  %v1694 = vcombine.high %v1690, %v1690
  %v1696 = vunpack.c.l.s4 1983009808
  %v1697 = vunpack.c.0.s8 %v1696
  %v1698 = vlaneseq
  %v1699 = vshrl.u32 %v1698, 7
  %v1700 = vsub.s32 %v1697, %v1699
  %v1701 = vrot.slane %v1690, %v1700
  %v1703 = vunpack.c.l.s4 1983009808
  %v1704 = vunpack.c.0.s8 %v1703
  %v1705 = vlaneseq
  %v1706 = vshrl.u32 %v1705, 7
  %v1707 = vsub.s32 %v1704, %v1706
  %v1708 = vrot.slane %v1694, %v1707
  %v1709 = vcombine.high %v1701, %v1701
  %v1710 = vcombine.high %v1708, %v1708
  %v1712 = vunpack.c.l.s4 1983009808
  %v1713 = vunpack.c.0.s8 %v1712
  %v1714 = vlaneseq
  %v1715 = vshrl.u32 %v1714, 7
  %v1716 = vsub.s32 %v1713, %v1715
  %v1717 = vrot.slane %v1691, %v1716
  %v1718 = vcombine.high %v1717, %v1717
  %1725 = vmatprep.subr.mxu0 0.0
  %1726 = vmatpush1.msra.mxu0 %v26
  %1727 = vmatprep.subr.mxu0 0.0
  %1728 = vmatpush1.msra.mxu0 %v25
  %1729 = vmatprep.subr.mxu0 0.0
  %1730 = vmatpush1.msra.mxu0 %v24
  %1731 = vmatprep.subr.mxu0 0.0
  %1732 = vmatpush1.msra.mxu0 %v23
  %1733 = vmatprep.subr.mxu0 0.0
  %1734 = vmatpush1.msra.mxu0 %v22
  %1735 = vmatprep.subr.mxu0 0.0
  %1736 = vmatpush1.msra.mxu0 %v21
  %1737 = vmatprep.subr.mxu0 0.0
  %1738 = vmatpush1.msra.mxu0 %v20
  %1739 = vmatprep.subr.mxu0 0.0
  %1740 = vmatpush1.msra.mxu0 %v19
  %1741 = vmatprep.subr.mxu0 0.0
  %1742 = vmatpush1.msra.mxu0 %v18
  %1743 = vmatprep.subr.mxu0 0.0
  %1744 = vmatpush1.msra.mxu0 %v17
  %1745 = vmatprep.subr.mxu0 0.0
  %1746 = vmatpush1.msra.mxu0 %v16
  %1747 = vmatprep.subr.mxu0 0.0
  %1748 = vmatpush1.msra.mxu0 %v15
  %1749 = vmatprep.subr.mxu0 0.0
  %1750 = vmatpush1.msra.mxu0 %v14
  %1751 = vmatprep.subr.mxu0 0.0
  %1752 = vmatpush1.msra.mxu0 %v13
  %1753 = vmatprep.subr.mxu0 0.0
  %1754 = vmatpush1.msra.mxu0 %v12
  %1755 = vmatprep.subr.mxu0 0.0
  %1756 = vmatpush1.msra.mxu0 %v11
  %1757 = vmatprep.subr.mxu0 0.0
  %1758 = vmatpush2.msra.mxu0 %v42
  %1759 = vmatprep.subr.mxu0 0.0
  %1760 = vmatpush2.msra.mxu0 %v41
  %1761 = vmatprep.subr.mxu0 0.0
  %1762 = vmatpush2.msra.mxu0 %v40
  %1763 = vmatprep.subr.mxu0 0.0
  %1764 = vmatpush2.msra.mxu0 %v39
  %1765 = vmatprep.subr.mxu0 0.0
  %1766 = vmatpush2.msra.mxu0 %v38
  %1767 = vmatprep.subr.mxu0 0.0
  %1768 = vmatpush2.msra.mxu0 %v37
  %1769 = vmatprep.subr.mxu0 0.0
  %1770 = vmatpush2.msra.mxu0 %v36
  %1771 = vmatprep.subr.mxu0 0.0
  %1772 = vmatpush2.msra.mxu0 %v35
  %1773 = vmatprep.subr.mxu0 0.0
  %1774 = vmatpush2.msra.mxu0 %v34
  %1775 = vmatprep.subr.mxu0 0.0
  %1776 = vmatpush2.msra.mxu0 %v33
  %1777 = vmatprep.subr.mxu0 0.0
  %1778 = vmatpush2.msra.mxu0 %v32
  %1779 = vmatprep.subr.mxu0 0.0
  %1780 = vmatpush2.msra.mxu0 %v31
  %1781 = vmatprep.subr.mxu0 0.0
  %1782 = vmatpush2.msra.mxu0 %v30
  %1783 = vmatprep.subr.mxu0 0.0
  %1784 = vmatpush2.msra.mxu0 %v29
  %1785 = vmatprep.subr.mxu0 0.0
  %1786 = vmatpush2.msra.mxu0 %v28
  %1787 = vmatprep.subr.mxu0 0.0
  %1788 = vmatpush2.msra.mxu0 %v27
  %1789 = vmatprep.mubr.f32.mxu0 %v1709
  %1790 = vmatmul.mubr.f32.gmra.mxu0 %v1701
  %v1791 = vpop.f32.mrf.mxu0
  %v1792 = vadd.f32 0.0, %v1791
  %v1793 = vpop.f32.mrf.mxu0
  %1794 = vdwg.mxu0
  %1795 = vmatprep.subr.mxu0 0.0
  %1796 = vmatpush1.msra.mxu0 %v58
  %1797 = vmatprep.subr.mxu0 0.0
  %1798 = vmatpush1.msra.mxu0 %v57
  %1799 = vmatprep.subr.mxu0 0.0
  %1800 = vmatpush1.msra.mxu0 %v56
  %1801 = vmatprep.subr.mxu0 0.0
  %1802 = vmatpush1.msra.mxu0 %v55
  %1803 = vmatprep.subr.mxu0 0.0
  %1804 = vmatpush1.msra.mxu0 %v54
  %1805 = vmatprep.subr.mxu0 0.0
  %1806 = vmatpush1.msra.mxu0 %v53
  %1807 = vmatprep.subr.mxu0 0.0
  %1808 = vmatpush1.msra.mxu0 %v52
  %1809 = vmatprep.subr.mxu0 0.0
  %1810 = vmatpush1.msra.mxu0 %v51
  %1811 = vmatprep.subr.mxu0 0.0
  %1812 = vmatpush1.msra.mxu0 %v50
  %1813 = vmatprep.subr.mxu0 0.0
  %1814 = vmatpush1.msra.mxu0 %v49
  %1815 = vmatprep.subr.mxu0 0.0
  %1816 = vmatpush1.msra.mxu0 %v48
  %1817 = vmatprep.subr.mxu0 0.0
  %1818 = vmatpush1.msra.mxu0 %v47
  %1819 = vmatprep.subr.mxu0 0.0
  %1820 = vmatpush1.msra.mxu0 %v46
  %1821 = vmatprep.subr.mxu0 0.0
  %1822 = vmatpush1.msra.mxu0 %v45
  %1823 = vmatprep.subr.mxu0 0.0
  %1824 = vmatpush1.msra.mxu0 %v44
  %1825 = vmatprep.subr.mxu0 0.0
  %1826 = vmatpush1.msra.mxu0 %v43
  %1827 = vmatprep.subr.mxu0 0.0
  %1828 = vmatpush2.msra.mxu0 %v74
  %1829 = vmatprep.subr.mxu0 0.0
  %1830 = vmatpush2.msra.mxu0 %v73
  %1831 = vmatprep.subr.mxu0 0.0
  %1832 = vmatpush2.msra.mxu0 %v72
  %1833 = vmatprep.subr.mxu0 0.0
  %1834 = vmatpush2.msra.mxu0 %v71
  %1835 = vmatprep.subr.mxu0 0.0
  %1836 = vmatpush2.msra.mxu0 %v70
  %1837 = vmatprep.subr.mxu0 0.0
  %1838 = vmatpush2.msra.mxu0 %v69
  %1839 = vmatprep.subr.mxu0 0.0
  %1840 = vmatpush2.msra.mxu0 %v68
  %1841 = vmatprep.subr.mxu0 0.0
  %1842 = vmatpush2.msra.mxu0 %v67
  %1843 = vmatprep.subr.mxu0 0.0
  %1844 = vmatpush2.msra.mxu0 %v66
  %1845 = vmatprep.subr.mxu0 0.0
  %1846 = vmatpush2.msra.mxu0 %v65
  %1847 = vmatprep.subr.mxu0 0.0
  %1848 = vmatpush2.msra.mxu0 %v64
  %1849 = vmatprep.subr.mxu0 0.0
  %1850 = vmatpush2.msra.mxu0 %v63
  %1851 = vmatprep.subr.mxu0 0.0
  %1852 = vmatpush2.msra.mxu0 %v62
  %1853 = vmatprep.subr.mxu0 0.0
  %1854 = vmatpush2.msra.mxu0 %v61
  %1855 = vmatprep.subr.mxu0 0.0
  %1856 = vmatpush2.msra.mxu0 %v60
  %1857 = vmatprep.subr.mxu0 0.0
  %1858 = vmatpush2.msra.mxu0 %v59
  %1859 = vmatprep.mubr.f32.mxu0 %v1710
  %1860 = vmatmul.mubr.f32.gmra.mxu0 %v1708
  %v1861 = vpop.f32.mrf.mxu0
  %v1862 = vadd.f32 %v1792, %v1861
  %v1863 = vpop.f32.mrf.mxu0
  %1864 = vdwg.mxu0
  %1865 = vmatprep.subr.mxu0 0.0
  %1866 = vmatpush1.msra.mxu0 %v90
  %1867 = vmatprep.subr.mxu0 0.0
  %1868 = vmatpush1.msra.mxu0 %v89
  %1869 = vmatprep.subr.mxu0 0.0
  %1870 = vmatpush1.msra.mxu0 %v88
  %1871 = vmatprep.subr.mxu0 0.0
  %1872 = vmatpush1.msra.mxu0 %v87
  %1873 = vmatprep.subr.mxu0 0.0
  %1874 = vmatpush1.msra.mxu0 %v86
  %1875 = vmatprep.subr.mxu0 0.0
  %1876 = vmatpush1.msra.mxu0 %v85
  %1877 = vmatprep.subr.mxu0 0.0
  %1878 = vmatpush1.msra.mxu0 %v84
  %1879 = vmatprep.subr.mxu0 0.0
  %1880 = vmatpush1.msra.mxu0 %v83
  %1881 = vmatprep.subr.mxu0 0.0
  %1882 = vmatpush1.msra.mxu0 %v82
  %1883 = vmatprep.subr.mxu0 0.0
  %1884 = vmatpush1.msra.mxu0 %v81
  %1885 = vmatprep.subr.mxu0 0.0
  %1886 = vmatpush1.msra.mxu0 %v80
  %1887 = vmatprep.subr.mxu0 0.0
  %1888 = vmatpush1.msra.mxu0 %v79
  %1889 = vmatprep.subr.mxu0 0.0
  %1890 = vmatpush1.msra.mxu0 %v78
  %1891 = vmatprep.subr.mxu0 0.0
  %1892 = vmatpush1.msra.mxu0 %v77
  %1893 = vmatprep.subr.mxu0 0.0
  %1894 = vmatpush1.msra.mxu0 %v76
  %1895 = vmatprep.subr.mxu0 0.0
  %1896 = vmatpush1.msra.mxu0 %v75
  %1897 = vmatprep.subr.mxu0 0.0
  %1898 = vmatpush2.msra.mxu0 %v106
  %1899 = vmatprep.subr.mxu0 0.0
  %1900 = vmatpush2.msra.mxu0 %v105
  %1901 = vmatprep.subr.mxu0 0.0
  %1902 = vmatpush2.msra.mxu0 %v104
  %1903 = vmatprep.subr.mxu0 0.0
  %1904 = vmatpush2.msra.mxu0 %v103
  %1905 = vmatprep.subr.mxu0 0.0
  %1906 = vmatpush2.msra.mxu0 %v102
  %1907 = vmatprep.subr.mxu0 0.0
  %1908 = vmatpush2.msra.mxu0 %v101
  %1909 = vmatprep.subr.mxu0 0.0
  %1910 = vmatpush2.msra.mxu0 %v100
  %1911 = vmatprep.subr.mxu0 0.0
  %1912 = vmatpush2.msra.mxu0 %v99
  %1913 = vmatprep.subr.mxu0 0.0
  %1914 = vmatpush2.msra.mxu0 %v98
  %1915 = vmatprep.subr.mxu0 0.0
  %1916 = vmatpush2.msra.mxu0 %v97
  %1917 = vmatprep.subr.mxu0 0.0
  %1918 = vmatpush2.msra.mxu0 %v96
  %1919 = vmatprep.subr.mxu0 0.0
  %1920 = vmatpush2.msra.mxu0 %v95
  %1921 = vmatprep.subr.mxu0 0.0
  %1922 = vmatpush2.msra.mxu0 %v94
  %1923 = vmatprep.subr.mxu0 0.0
  %1924 = vmatpush2.msra.mxu0 %v93
  %1925 = vmatprep.subr.mxu0 0.0
  %1926 = vmatpush2.msra.mxu0 %v92
  %1927 = vmatprep.subr.mxu0 0.0
  %1928 = vmatpush2.msra.mxu0 %v91
  %1929 = vmatprep.mubr.f32.mxu0 %v1718
  %1930 = vmatmul.mubr.f32.gmra.mxu0 %v1717
  %v1931 = vpop.f32.mrf.mxu0
  %v1932 = vadd.f32 %v1862, %v1931
  %v1933 = vpop.f32.mrf.mxu0
  %1934 = vdwg.mxu0
  %v1935 = vsel %vm356, %v1701, 0.0
  %v1936 = vsel %vm356, %v1709, 0.0
  %v1937 = vadd.f32 %v1935, %v1936
  %v1938 = vsel %vm356, %v1708, 0.0
  %v1939 = vadd.f32 %v1937, %v1938
  %v1940 = vsel %vm356, %v1710, 0.0
  %v1941 = vadd.f32 %v1939, %v1940
  %v1942 = vsel %vm356, %v1717, 0.0
  %v1943 = vadd.f32 %v1941, %v1942
  %v1944 = vsel %vm356, %v1718, 0.0
  %v1945 = vadd.f32 %v1943, %v1944
  %1946 = vadd.xlane.f32.xlu0 %v1945
  %v1947 = vpop.xlane.xlu0 %1946
  %v1948 = vsel %vm109, %v1947, %v1932
  %s1949 = scalar_lea.vmem %s2, 12
  %1950 = vst.msk [vmem:[%s1949] sm:$0x3] %vm371, %v1948
  %s1951 = scalar_lea.vmem %s0, 42
  %v1952 = vld [vmem:[%s1951] sm:$0x3f]
  %v1953 = vunpack.c.l.bf16 %v1952
  %v1954 = vunpack.c.h.bf16 %v1952
  %v1957 = vcombine.high %v1953, %v1953
  %v1959 = vunpack.c.l.s4 1983009808
  %v1960 = vunpack.c.0.s8 %v1959
  %v1961 = vlaneseq
  %v1962 = vshrl.u32 %v1961, 7
  %v1963 = vsub.s32 %v1960, %v1962
  %v1964 = vrot.slane %v1953, %v1963
  %v1966 = vunpack.c.l.s4 1983009808
  %v1967 = vunpack.c.0.s8 %v1966
  %v1968 = vlaneseq
  %v1969 = vshrl.u32 %v1968, 7
  %v1970 = vsub.s32 %v1967, %v1969
  %v1971 = vrot.slane %v1957, %v1970
  %v1972 = vcombine.high %v1964, %v1964
  %v1973 = vcombine.high %v1971, %v1971
  %v1975 = vunpack.c.l.s4 1983009808
  %v1976 = vunpack.c.0.s8 %v1975
  %v1977 = vlaneseq
  %v1978 = vshrl.u32 %v1977, 7
  %v1979 = vsub.s32 %v1976, %v1978
  %v1980 = vrot.slane %v1954, %v1979
  %v1981 = vcombine.high %v1980, %v1980
  %1988 = vmatprep.subr.mxu0 0.0
  %1989 = vmatpush1.msra.mxu0 %v26
  %1990 = vmatprep.subr.mxu0 0.0
  %1991 = vmatpush1.msra.mxu0 %v25
  %1992 = vmatprep.subr.mxu0 0.0
  %1993 = vmatpush1.msra.mxu0 %v24
  %1994 = vmatprep.subr.mxu0 0.0
  %1995 = vmatpush1.msra.mxu0 %v23
  %1996 = vmatprep.subr.mxu0 0.0
  %1997 = vmatpush1.msra.mxu0 %v22
  %1998 = vmatprep.subr.mxu0 0.0
  %1999 = vmatpush1.msra.mxu0 %v21
  %2000 = vmatprep.subr.mxu0 0.0
  %2001 = vmatpush1.msra.mxu0 %v20
  %2002 = vmatprep.subr.mxu0 0.0
  %2003 = vmatpush1.msra.mxu0 %v19
  %2004 = vmatprep.subr.mxu0 0.0
  %2005 = vmatpush1.msra.mxu0 %v18
  %2006 = vmatprep.subr.mxu0 0.0
  %2007 = vmatpush1.msra.mxu0 %v17
  %2008 = vmatprep.subr.mxu0 0.0
  %2009 = vmatpush1.msra.mxu0 %v16
  %2010 = vmatprep.subr.mxu0 0.0
  %2011 = vmatpush1.msra.mxu0 %v15
  %2012 = vmatprep.subr.mxu0 0.0
  %2013 = vmatpush1.msra.mxu0 %v14
  %2014 = vmatprep.subr.mxu0 0.0
  %2015 = vmatpush1.msra.mxu0 %v13
  %2016 = vmatprep.subr.mxu0 0.0
  %2017 = vmatpush1.msra.mxu0 %v12
  %2018 = vmatprep.subr.mxu0 0.0
  %2019 = vmatpush1.msra.mxu0 %v11
  %2020 = vmatprep.subr.mxu0 0.0
  %2021 = vmatpush2.msra.mxu0 %v42
  %2022 = vmatprep.subr.mxu0 0.0
  %2023 = vmatpush2.msra.mxu0 %v41
  %2024 = vmatprep.subr.mxu0 0.0
  %2025 = vmatpush2.msra.mxu0 %v40
  %2026 = vmatprep.subr.mxu0 0.0
  %2027 = vmatpush2.msra.mxu0 %v39
  %2028 = vmatprep.subr.mxu0 0.0
  %2029 = vmatpush2.msra.mxu0 %v38
  %2030 = vmatprep.subr.mxu0 0.0
  %2031 = vmatpush2.msra.mxu0 %v37
  %2032 = vmatprep.subr.mxu0 0.0
  %2033 = vmatpush2.msra.mxu0 %v36
  %2034 = vmatprep.subr.mxu0 0.0
  %2035 = vmatpush2.msra.mxu0 %v35
  %2036 = vmatprep.subr.mxu0 0.0
  %2037 = vmatpush2.msra.mxu0 %v34
  %2038 = vmatprep.subr.mxu0 0.0
  %2039 = vmatpush2.msra.mxu0 %v33
  %2040 = vmatprep.subr.mxu0 0.0
  %2041 = vmatpush2.msra.mxu0 %v32
  %2042 = vmatprep.subr.mxu0 0.0
  %2043 = vmatpush2.msra.mxu0 %v31
  %2044 = vmatprep.subr.mxu0 0.0
  %2045 = vmatpush2.msra.mxu0 %v30
  %2046 = vmatprep.subr.mxu0 0.0
  %2047 = vmatpush2.msra.mxu0 %v29
  %2048 = vmatprep.subr.mxu0 0.0
  %2049 = vmatpush2.msra.mxu0 %v28
  %2050 = vmatprep.subr.mxu0 0.0
  %2051 = vmatpush2.msra.mxu0 %v27
  %2052 = vmatprep.mubr.f32.mxu0 %v1972
  %2053 = vmatmul.mubr.f32.gmra.mxu0 %v1964
  %v2054 = vpop.f32.mrf.mxu0
  %v2055 = vadd.f32 0.0, %v2054
  %v2056 = vpop.f32.mrf.mxu0
  %2057 = vdwg.mxu0
  %2058 = vmatprep.subr.mxu0 0.0
  %2059 = vmatpush1.msra.mxu0 %v58
  %2060 = vmatprep.subr.mxu0 0.0
  %2061 = vmatpush1.msra.mxu0 %v57
  %2062 = vmatprep.subr.mxu0 0.0
  %2063 = vmatpush1.msra.mxu0 %v56
  %2064 = vmatprep.subr.mxu0 0.0
  %2065 = vmatpush1.msra.mxu0 %v55
  %2066 = vmatprep.subr.mxu0 0.0
  %2067 = vmatpush1.msra.mxu0 %v54
  %2068 = vmatprep.subr.mxu0 0.0
  %2069 = vmatpush1.msra.mxu0 %v53
  %2070 = vmatprep.subr.mxu0 0.0
  %2071 = vmatpush1.msra.mxu0 %v52
  %2072 = vmatprep.subr.mxu0 0.0
  %2073 = vmatpush1.msra.mxu0 %v51
  %2074 = vmatprep.subr.mxu0 0.0
  %2075 = vmatpush1.msra.mxu0 %v50
  %2076 = vmatprep.subr.mxu0 0.0
  %2077 = vmatpush1.msra.mxu0 %v49
  %2078 = vmatprep.subr.mxu0 0.0
  %2079 = vmatpush1.msra.mxu0 %v48
  %2080 = vmatprep.subr.mxu0 0.0
  %2081 = vmatpush1.msra.mxu0 %v47
  %2082 = vmatprep.subr.mxu0 0.0
  %2083 = vmatpush1.msra.mxu0 %v46
  %2084 = vmatprep.subr.mxu0 0.0
  %2085 = vmatpush1.msra.mxu0 %v45
  %2086 = vmatprep.subr.mxu0 0.0
  %2087 = vmatpush1.msra.mxu0 %v44
  %2088 = vmatprep.subr.mxu0 0.0
  %2089 = vmatpush1.msra.mxu0 %v43
  %2090 = vmatprep.subr.mxu0 0.0
  %2091 = vmatpush2.msra.mxu0 %v74
  %2092 = vmatprep.subr.mxu0 0.0
  %2093 = vmatpush2.msra.mxu0 %v73
  %2094 = vmatprep.subr.mxu0 0.0
  %2095 = vmatpush2.msra.mxu0 %v72
  %2096 = vmatprep.subr.mxu0 0.0
  %2097 = vmatpush2.msra.mxu0 %v71
  %2098 = vmatprep.subr.mxu0 0.0
  %2099 = vmatpush2.msra.mxu0 %v70
  %2100 = vmatprep.subr.mxu0 0.0
  %2101 = vmatpush2.msra.mxu0 %v69
  %2102 = vmatprep.subr.mxu0 0.0
  %2103 = vmatpush2.msra.mxu0 %v68
  %2104 = vmatprep.subr.mxu0 0.0
  %2105 = vmatpush2.msra.mxu0 %v67
  %2106 = vmatprep.subr.mxu0 0.0
  %2107 = vmatpush2.msra.mxu0 %v66
  %2108 = vmatprep.subr.mxu0 0.0
  %2109 = vmatpush2.msra.mxu0 %v65
  %2110 = vmatprep.subr.mxu0 0.0
  %2111 = vmatpush2.msra.mxu0 %v64
  %2112 = vmatprep.subr.mxu0 0.0
  %2113 = vmatpush2.msra.mxu0 %v63
  %2114 = vmatprep.subr.mxu0 0.0
  %2115 = vmatpush2.msra.mxu0 %v62
  %2116 = vmatprep.subr.mxu0 0.0
  %2117 = vmatpush2.msra.mxu0 %v61
  %2118 = vmatprep.subr.mxu0 0.0
  %2119 = vmatpush2.msra.mxu0 %v60
  %2120 = vmatprep.subr.mxu0 0.0
  %2121 = vmatpush2.msra.mxu0 %v59
  %2122 = vmatprep.mubr.f32.mxu0 %v1973
  %2123 = vmatmul.mubr.f32.gmra.mxu0 %v1971
  %v2124 = vpop.f32.mrf.mxu0
  %v2125 = vadd.f32 %v2055, %v2124
  %v2126 = vpop.f32.mrf.mxu0
  %2127 = vdwg.mxu0
  %2128 = vmatprep.subr.mxu0 0.0
  %2129 = vmatpush1.msra.mxu0 %v90
  %2130 = vmatprep.subr.mxu0 0.0
  %2131 = vmatpush1.msra.mxu0 %v89
  %2132 = vmatprep.subr.mxu0 0.0
  %2133 = vmatpush1.msra.mxu0 %v88
  %2134 = vmatprep.subr.mxu0 0.0
  %2135 = vmatpush1.msra.mxu0 %v87
  %2136 = vmatprep.subr.mxu0 0.0
  %2137 = vmatpush1.msra.mxu0 %v86
  %2138 = vmatprep.subr.mxu0 0.0
  %2139 = vmatpush1.msra.mxu0 %v85
  %2140 = vmatprep.subr.mxu0 0.0
  %2141 = vmatpush1.msra.mxu0 %v84
  %2142 = vmatprep.subr.mxu0 0.0
  %2143 = vmatpush1.msra.mxu0 %v83
  %2144 = vmatprep.subr.mxu0 0.0
  %2145 = vmatpush1.msra.mxu0 %v82
  %2146 = vmatprep.subr.mxu0 0.0
  %2147 = vmatpush1.msra.mxu0 %v81
  %2148 = vmatprep.subr.mxu0 0.0
  %2149 = vmatpush1.msra.mxu0 %v80
  %2150 = vmatprep.subr.mxu0 0.0
  %2151 = vmatpush1.msra.mxu0 %v79
  %2152 = vmatprep.subr.mxu0 0.0
  %2153 = vmatpush1.msra.mxu0 %v78
  %2154 = vmatprep.subr.mxu0 0.0
  %2155 = vmatpush1.msra.mxu0 %v77
  %2156 = vmatprep.subr.mxu0 0.0
  %2157 = vmatpush1.msra.mxu0 %v76
  %2158 = vmatprep.subr.mxu0 0.0
  %2159 = vmatpush1.msra.mxu0 %v75
  %2160 = vmatprep.subr.mxu0 0.0
  %2161 = vmatpush2.msra.mxu0 %v106
  %2162 = vmatprep.subr.mxu0 0.0
  %2163 = vmatpush2.msra.mxu0 %v105
  %2164 = vmatprep.subr.mxu0 0.0
  %2165 = vmatpush2.msra.mxu0 %v104
  %2166 = vmatprep.subr.mxu0 0.0
  %2167 = vmatpush2.msra.mxu0 %v103
  %2168 = vmatprep.subr.mxu0 0.0
  %2169 = vmatpush2.msra.mxu0 %v102
  %2170 = vmatprep.subr.mxu0 0.0
  %2171 = vmatpush2.msra.mxu0 %v101
  %2172 = vmatprep.subr.mxu0 0.0
  %2173 = vmatpush2.msra.mxu0 %v100
  %2174 = vmatprep.subr.mxu0 0.0
  %2175 = vmatpush2.msra.mxu0 %v99
  %2176 = vmatprep.subr.mxu0 0.0
  %2177 = vmatpush2.msra.mxu0 %v98
  %2178 = vmatprep.subr.mxu0 0.0
  %2179 = vmatpush2.msra.mxu0 %v97
  %2180 = vmatprep.subr.mxu0 0.0
  %2181 = vmatpush2.msra.mxu0 %v96
  %2182 = vmatprep.subr.mxu0 0.0
  %2183 = vmatpush2.msra.mxu0 %v95
  %2184 = vmatprep.subr.mxu0 0.0
  %2185 = vmatpush2.msra.mxu0 %v94
  %2186 = vmatprep.subr.mxu0 0.0
  %2187 = vmatpush2.msra.mxu0 %v93
  %2188 = vmatprep.subr.mxu0 0.0
  %2189 = vmatpush2.msra.mxu0 %v92
  %2190 = vmatprep.subr.mxu0 0.0
  %2191 = vmatpush2.msra.mxu0 %v91
  %2192 = vmatprep.mubr.f32.mxu0 %v1981
  %2193 = vmatmul.mubr.f32.gmra.mxu0 %v1980
  %v2194 = vpop.f32.mrf.mxu0
  %v2195 = vadd.f32 %v2125, %v2194
  %v2196 = vpop.f32.mrf.mxu0
  %2197 = vdwg.mxu0
  %v2198 = vsel %vm356, %v1964, 0.0
  %v2199 = vsel %vm356, %v1972, 0.0
  %v2200 = vadd.f32 %v2198, %v2199
  %v2201 = vsel %vm356, %v1971, 0.0
  %v2202 = vadd.f32 %v2200, %v2201
  %v2203 = vsel %vm356, %v1973, 0.0
  %v2204 = vadd.f32 %v2202, %v2203
  %v2205 = vsel %vm356, %v1980, 0.0
  %v2206 = vadd.f32 %v2204, %v2205
  %v2207 = vsel %vm356, %v1981, 0.0
  %v2208 = vadd.f32 %v2206, %v2207
  %2209 = vadd.xlane.f32.xlu0 %v2208
  %v2210 = vpop.xlane.xlu0 %2209
  %v2211 = vsel %vm109, %v2210, %v2195
  %s2212 = scalar_lea.vmem %s2, 14
  %2213 = vst.msk [vmem:[%s2212] sm:$0x3] %vm371, %v2211
  %s2214 = scalar_lea.vmem %s0, 48
  %v2215 = vld [vmem:[%s2214] sm:$0x3f]
  %v2216 = vunpack.c.l.bf16 %v2215
  %v2217 = vunpack.c.h.bf16 %v2215
  %v2220 = vcombine.high %v2216, %v2216
  %v2222 = vunpack.c.l.s4 1983009808
  %v2223 = vunpack.c.0.s8 %v2222
  %v2224 = vlaneseq
  %v2225 = vshrl.u32 %v2224, 7
  %v2226 = vsub.s32 %v2223, %v2225
  %v2227 = vrot.slane %v2216, %v2226
  %v2229 = vunpack.c.l.s4 1983009808
  %v2230 = vunpack.c.0.s8 %v2229
  %v2231 = vlaneseq
  %v2232 = vshrl.u32 %v2231, 7
  %v2233 = vsub.s32 %v2230, %v2232
  %v2234 = vrot.slane %v2220, %v2233
  %v2235 = vcombine.high %v2227, %v2227
  %v2236 = vcombine.high %v2234, %v2234
  %v2238 = vunpack.c.l.s4 1983009808
  %v2239 = vunpack.c.0.s8 %v2238
  %v2240 = vlaneseq
  %v2241 = vshrl.u32 %v2240, 7
  %v2242 = vsub.s32 %v2239, %v2241
  %v2243 = vrot.slane %v2217, %v2242
  %v2244 = vcombine.high %v2243, %v2243
  %2251 = vmatprep.subr.mxu0 0.0
  %2252 = vmatpush1.msra.mxu0 %v26
  %2253 = vmatprep.subr.mxu0 0.0
  %2254 = vmatpush1.msra.mxu0 %v25
  %2255 = vmatprep.subr.mxu0 0.0
  %2256 = vmatpush1.msra.mxu0 %v24
  %2257 = vmatprep.subr.mxu0 0.0
  %2258 = vmatpush1.msra.mxu0 %v23
  %2259 = vmatprep.subr.mxu0 0.0
  %2260 = vmatpush1.msra.mxu0 %v22
  %2261 = vmatprep.subr.mxu0 0.0
  %2262 = vmatpush1.msra.mxu0 %v21
  %2263 = vmatprep.subr.mxu0 0.0
  %2264 = vmatpush1.msra.mxu0 %v20
  %2265 = vmatprep.subr.mxu0 0.0
  %2266 = vmatpush1.msra.mxu0 %v19
  %2267 = vmatprep.subr.mxu0 0.0
  %2268 = vmatpush1.msra.mxu0 %v18
  %2269 = vmatprep.subr.mxu0 0.0
  %2270 = vmatpush1.msra.mxu0 %v17
  %2271 = vmatprep.subr.mxu0 0.0
  %2272 = vmatpush1.msra.mxu0 %v16
  %2273 = vmatprep.subr.mxu0 0.0
  %2274 = vmatpush1.msra.mxu0 %v15
  %2275 = vmatprep.subr.mxu0 0.0
  %2276 = vmatpush1.msra.mxu0 %v14
  %2277 = vmatprep.subr.mxu0 0.0
  %2278 = vmatpush1.msra.mxu0 %v13
  %2279 = vmatprep.subr.mxu0 0.0
  %2280 = vmatpush1.msra.mxu0 %v12
  %2281 = vmatprep.subr.mxu0 0.0
  %2282 = vmatpush1.msra.mxu0 %v11
  %2283 = vmatprep.subr.mxu0 0.0
  %2284 = vmatpush2.msra.mxu0 %v42
  %2285 = vmatprep.subr.mxu0 0.0
  %2286 = vmatpush2.msra.mxu0 %v41
  %2287 = vmatprep.subr.mxu0 0.0
  %2288 = vmatpush2.msra.mxu0 %v40
  %2289 = vmatprep.subr.mxu0 0.0
  %2290 = vmatpush2.msra.mxu0 %v39
  %2291 = vmatprep.subr.mxu0 0.0
  %2292 = vmatpush2.msra.mxu0 %v38
  %2293 = vmatprep.subr.mxu0 0.0
  %2294 = vmatpush2.msra.mxu0 %v37
  %2295 = vmatprep.subr.mxu0 0.0
  %2296 = vmatpush2.msra.mxu0 %v36
  %2297 = vmatprep.subr.mxu0 0.0
  %2298 = vmatpush2.msra.mxu0 %v35
  %2299 = vmatprep.subr.mxu0 0.0
  %2300 = vmatpush2.msra.mxu0 %v34
  %2301 = vmatprep.subr.mxu0 0.0
  %2302 = vmatpush2.msra.mxu0 %v33
  %2303 = vmatprep.subr.mxu0 0.0
  %2304 = vmatpush2.msra.mxu0 %v32
  %2305 = vmatprep.subr.mxu0 0.0
  %2306 = vmatpush2.msra.mxu0 %v31
  %2307 = vmatprep.subr.mxu0 0.0
  %2308 = vmatpush2.msra.mxu0 %v30
  %2309 = vmatprep.subr.mxu0 0.0
  %2310 = vmatpush2.msra.mxu0 %v29
  %2311 = vmatprep.subr.mxu0 0.0
  %2312 = vmatpush2.msra.mxu0 %v28
  %2313 = vmatprep.subr.mxu0 0.0
  %2314 = vmatpush2.msra.mxu0 %v27
  %2315 = vmatprep.mubr.f32.mxu0 %v2235
  %2316 = vmatmul.mubr.f32.gmra.mxu0 %v2227
  %v2317 = vpop.f32.mrf.mxu0
  %v2318 = vadd.f32 0.0, %v2317
  %v2319 = vpop.f32.mrf.mxu0
  %2320 = vdwg.mxu0
  %2321 = vmatprep.subr.mxu0 0.0
  %2322 = vmatpush1.msra.mxu0 %v58
  %2323 = vmatprep.subr.mxu0 0.0
  %2324 = vmatpush1.msra.mxu0 %v57
  %2325 = vmatprep.subr.mxu0 0.0
  %2326 = vmatpush1.msra.mxu0 %v56
  %2327 = vmatprep.subr.mxu0 0.0
  %2328 = vmatpush1.msra.mxu0 %v55
  %2329 = vmatprep.subr.mxu0 0.0
  %2330 = vmatpush1.msra.mxu0 %v54
  %2331 = vmatprep.subr.mxu0 0.0
  %2332 = vmatpush1.msra.mxu0 %v53
  %2333 = vmatprep.subr.mxu0 0.0
  %2334 = vmatpush1.msra.mxu0 %v52
  %2335 = vmatprep.subr.mxu0 0.0
  %2336 = vmatpush1.msra.mxu0 %v51
  %2337 = vmatprep.subr.mxu0 0.0
  %2338 = vmatpush1.msra.mxu0 %v50
  %2339 = vmatprep.subr.mxu0 0.0
  %2340 = vmatpush1.msra.mxu0 %v49
  %2341 = vmatprep.subr.mxu0 0.0
  %2342 = vmatpush1.msra.mxu0 %v48
  %2343 = vmatprep.subr.mxu0 0.0
  %2344 = vmatpush1.msra.mxu0 %v47
  %2345 = vmatprep.subr.mxu0 0.0
  %2346 = vmatpush1.msra.mxu0 %v46
  %2347 = vmatprep.subr.mxu0 0.0
  %2348 = vmatpush1.msra.mxu0 %v45
  %2349 = vmatprep.subr.mxu0 0.0
  %2350 = vmatpush1.msra.mxu0 %v44
  %2351 = vmatprep.subr.mxu0 0.0
  %2352 = vmatpush1.msra.mxu0 %v43
  %2353 = vmatprep.subr.mxu0 0.0
  %2354 = vmatpush2.msra.mxu0 %v74
  %2355 = vmatprep.subr.mxu0 0.0
  %2356 = vmatpush2.msra.mxu0 %v73
  %2357 = vmatprep.subr.mxu0 0.0
  %2358 = vmatpush2.msra.mxu0 %v72
  %2359 = vmatprep.subr.mxu0 0.0
  %2360 = vmatpush2.msra.mxu0 %v71
  %2361 = vmatprep.subr.mxu0 0.0
  %2362 = vmatpush2.msra.mxu0 %v70
  %2363 = vmatprep.subr.mxu0 0.0
  %2364 = vmatpush2.msra.mxu0 %v69
  %2365 = vmatprep.subr.mxu0 0.0
  %2366 = vmatpush2.msra.mxu0 %v68
  %2367 = vmatprep.subr.mxu0 0.0
  %2368 = vmatpush2.msra.mxu0 %v67
  %2369 = vmatprep.subr.mxu0 0.0
  %2370 = vmatpush2.msra.mxu0 %v66
  %2371 = vmatprep.subr.mxu0 0.0
  %2372 = vmatpush2.msra.mxu0 %v65
  %2373 = vmatprep.subr.mxu0 0.0
  %2374 = vmatpush2.msra.mxu0 %v64
  %2375 = vmatprep.subr.mxu0 0.0
  %2376 = vmatpush2.msra.mxu0 %v63
  %2377 = vmatprep.subr.mxu0 0.0
  %2378 = vmatpush2.msra.mxu0 %v62
  %2379 = vmatprep.subr.mxu0 0.0
  %2380 = vmatpush2.msra.mxu0 %v61
  %2381 = vmatprep.subr.mxu0 0.0
  %2382 = vmatpush2.msra.mxu0 %v60
  %2383 = vmatprep.subr.mxu0 0.0
  %2384 = vmatpush2.msra.mxu0 %v59
  %2385 = vmatprep.mubr.f32.mxu0 %v2236
  %2386 = vmatmul.mubr.f32.gmra.mxu0 %v2234
  %v2387 = vpop.f32.mrf.mxu0
  %v2388 = vadd.f32 %v2318, %v2387
  %v2389 = vpop.f32.mrf.mxu0
  %2390 = vdwg.mxu0
  %2391 = vmatprep.subr.mxu0 0.0
  %2392 = vmatpush1.msra.mxu0 %v90
  %2393 = vmatprep.subr.mxu0 0.0
  %2394 = vmatpush1.msra.mxu0 %v89
  %2395 = vmatprep.subr.mxu0 0.0
  %2396 = vmatpush1.msra.mxu0 %v88
  %2397 = vmatprep.subr.mxu0 0.0
  %2398 = vmatpush1.msra.mxu0 %v87
  %2399 = vmatprep.subr.mxu0 0.0
  %2400 = vmatpush1.msra.mxu0 %v86
  %2401 = vmatprep.subr.mxu0 0.0
  %2402 = vmatpush1.msra.mxu0 %v85
  %2403 = vmatprep.subr.mxu0 0.0
  %2404 = vmatpush1.msra.mxu0 %v84
  %2405 = vmatprep.subr.mxu0 0.0
  %2406 = vmatpush1.msra.mxu0 %v83
  %2407 = vmatprep.subr.mxu0 0.0
  %2408 = vmatpush1.msra.mxu0 %v82
  %2409 = vmatprep.subr.mxu0 0.0
  %2410 = vmatpush1.msra.mxu0 %v81
  %2411 = vmatprep.subr.mxu0 0.0
  %2412 = vmatpush1.msra.mxu0 %v80
  %2413 = vmatprep.subr.mxu0 0.0
  %2414 = vmatpush1.msra.mxu0 %v79
  %2415 = vmatprep.subr.mxu0 0.0
  %2416 = vmatpush1.msra.mxu0 %v78
  %2417 = vmatprep.subr.mxu0 0.0
  %2418 = vmatpush1.msra.mxu0 %v77
  %2419 = vmatprep.subr.mxu0 0.0
  %2420 = vmatpush1.msra.mxu0 %v76
  %2421 = vmatprep.subr.mxu0 0.0
  %2422 = vmatpush1.msra.mxu0 %v75
  %2423 = vmatprep.subr.mxu0 0.0
  %2424 = vmatpush2.msra.mxu0 %v106
  %2425 = vmatprep.subr.mxu0 0.0
  %2426 = vmatpush2.msra.mxu0 %v105
  %2427 = vmatprep.subr.mxu0 0.0
  %2428 = vmatpush2.msra.mxu0 %v104
  %2429 = vmatprep.subr.mxu0 0.0
  %2430 = vmatpush2.msra.mxu0 %v103
  %2431 = vmatprep.subr.mxu0 0.0
  %2432 = vmatpush2.msra.mxu0 %v102
  %2433 = vmatprep.subr.mxu0 0.0
  %2434 = vmatpush2.msra.mxu0 %v101
  %2435 = vmatprep.subr.mxu0 0.0
  %2436 = vmatpush2.msra.mxu0 %v100
  %2437 = vmatprep.subr.mxu0 0.0
  %2438 = vmatpush2.msra.mxu0 %v99
  %2439 = vmatprep.subr.mxu0 0.0
  %2440 = vmatpush2.msra.mxu0 %v98
  %2441 = vmatprep.subr.mxu0 0.0
  %2442 = vmatpush2.msra.mxu0 %v97
  %2443 = vmatprep.subr.mxu0 0.0
  %2444 = vmatpush2.msra.mxu0 %v96
  %2445 = vmatprep.subr.mxu0 0.0
  %2446 = vmatpush2.msra.mxu0 %v95
  %2447 = vmatprep.subr.mxu0 0.0
  %2448 = vmatpush2.msra.mxu0 %v94
  %2449 = vmatprep.subr.mxu0 0.0
  %2450 = vmatpush2.msra.mxu0 %v93
  %2451 = vmatprep.subr.mxu0 0.0
  %2452 = vmatpush2.msra.mxu0 %v92
  %2453 = vmatprep.subr.mxu0 0.0
  %2454 = vmatpush2.msra.mxu0 %v91
  %2455 = vmatprep.mubr.f32.mxu0 %v2244
  %2456 = vmatmul.mubr.f32.gmra.mxu0 %v2243
  %v2457 = vpop.f32.mrf.mxu0
  %v2458 = vadd.f32 %v2388, %v2457
  %v2459 = vpop.f32.mrf.mxu0
  %2460 = vdwg.mxu0
  %v2461 = vsel %vm356, %v2227, 0.0
  %v2462 = vsel %vm356, %v2235, 0.0
  %v2463 = vadd.f32 %v2461, %v2462
  %v2464 = vsel %vm356, %v2234, 0.0
  %v2465 = vadd.f32 %v2463, %v2464
  %v2466 = vsel %vm356, %v2236, 0.0
  %v2467 = vadd.f32 %v2465, %v2466
  %v2468 = vsel %vm356, %v2243, 0.0
  %v2469 = vadd.f32 %v2467, %v2468
  %v2470 = vsel %vm356, %v2244, 0.0
  %v2471 = vadd.f32 %v2469, %v2470
  %2472 = vadd.xlane.f32.xlu0 %v2471
  %v2473 = vpop.xlane.xlu0 %2472
  %v2474 = vsel %vm109, %v2473, %v2458
  %s2475 = scalar_lea.vmem %s2, 16
  %2476 = vst.msk [vmem:[%s2475] sm:$0x3] %vm371, %v2474
  %s2477 = scalar_lea.vmem %s0, 54
  %v2478 = vld [vmem:[%s2477] sm:$0x3f]
  %v2479 = vunpack.c.l.bf16 %v2478
  %v2480 = vunpack.c.h.bf16 %v2478
  %v2483 = vcombine.high %v2479, %v2479
  %v2485 = vunpack.c.l.s4 1983009808
  %v2486 = vunpack.c.0.s8 %v2485
  %v2487 = vlaneseq
  %v2488 = vshrl.u32 %v2487, 7
  %v2489 = vsub.s32 %v2486, %v2488
  %v2490 = vrot.slane %v2479, %v2489
  %v2492 = vunpack.c.l.s4 1983009808
  %v2493 = vunpack.c.0.s8 %v2492
  %v2494 = vlaneseq
  %v2495 = vshrl.u32 %v2494, 7
  %v2496 = vsub.s32 %v2493, %v2495
  %v2497 = vrot.slane %v2483, %v2496
  %v2498 = vcombine.high %v2490, %v2490
  %v2499 = vcombine.high %v2497, %v2497
  %v2501 = vunpack.c.l.s4 1983009808
  %v2502 = vunpack.c.0.s8 %v2501
  %v2503 = vlaneseq
  %v2504 = vshrl.u32 %v2503, 7
  %v2505 = vsub.s32 %v2502, %v2504
  %v2506 = vrot.slane %v2480, %v2505
  %v2507 = vcombine.high %v2506, %v2506
  %2514 = vmatprep.subr.mxu0 0.0
  %2515 = vmatpush1.msra.mxu0 %v26
  %2516 = vmatprep.subr.mxu0 0.0
  %2517 = vmatpush1.msra.mxu0 %v25
  %2518 = vmatprep.subr.mxu0 0.0
  %2519 = vmatpush1.msra.mxu0 %v24
  %2520 = vmatprep.subr.mxu0 0.0
  %2521 = vmatpush1.msra.mxu0 %v23
  %2522 = vmatprep.subr.mxu0 0.0
  %2523 = vmatpush1.msra.mxu0 %v22
  %2524 = vmatprep.subr.mxu0 0.0
  %2525 = vmatpush1.msra.mxu0 %v21
  %2526 = vmatprep.subr.mxu0 0.0
  %2527 = vmatpush1.msra.mxu0 %v20
  %2528 = vmatprep.subr.mxu0 0.0
  %2529 = vmatpush1.msra.mxu0 %v19
  %2530 = vmatprep.subr.mxu0 0.0
  %2531 = vmatpush1.msra.mxu0 %v18
  %2532 = vmatprep.subr.mxu0 0.0
  %2533 = vmatpush1.msra.mxu0 %v17
  %2534 = vmatprep.subr.mxu0 0.0
  %2535 = vmatpush1.msra.mxu0 %v16
  %2536 = vmatprep.subr.mxu0 0.0
  %2537 = vmatpush1.msra.mxu0 %v15
  %2538 = vmatprep.subr.mxu0 0.0
  %2539 = vmatpush1.msra.mxu0 %v14
  %2540 = vmatprep.subr.mxu0 0.0
  %2541 = vmatpush1.msra.mxu0 %v13
  %2542 = vmatprep.subr.mxu0 0.0
  %2543 = vmatpush1.msra.mxu0 %v12
  %2544 = vmatprep.subr.mxu0 0.0
  %2545 = vmatpush1.msra.mxu0 %v11
  %2546 = vmatprep.subr.mxu0 0.0
  %2547 = vmatpush2.msra.mxu0 %v42
  %2548 = vmatprep.subr.mxu0 0.0
  %2549 = vmatpush2.msra.mxu0 %v41
  %2550 = vmatprep.subr.mxu0 0.0
  %2551 = vmatpush2.msra.mxu0 %v40
  %2552 = vmatprep.subr.mxu0 0.0
  %2553 = vmatpush2.msra.mxu0 %v39
  %2554 = vmatprep.subr.mxu0 0.0
  %2555 = vmatpush2.msra.mxu0 %v38
  %2556 = vmatprep.subr.mxu0 0.0
  %2557 = vmatpush2.msra.mxu0 %v37
  %2558 = vmatprep.subr.mxu0 0.0
  %2559 = vmatpush2.msra.mxu0 %v36
  %2560 = vmatprep.subr.mxu0 0.0
  %2561 = vmatpush2.msra.mxu0 %v35
  %2562 = vmatprep.subr.mxu0 0.0
  %2563 = vmatpush2.msra.mxu0 %v34
  %2564 = vmatprep.subr.mxu0 0.0
  %2565 = vmatpush2.msra.mxu0 %v33
  %2566 = vmatprep.subr.mxu0 0.0
  %2567 = vmatpush2.msra.mxu0 %v32
  %2568 = vmatprep.subr.mxu0 0.0
  %2569 = vmatpush2.msra.mxu0 %v31
  %2570 = vmatprep.subr.mxu0 0.0
  %2571 = vmatpush2.msra.mxu0 %v30
  %2572 = vmatprep.subr.mxu0 0.0
  %2573 = vmatpush2.msra.mxu0 %v29
  %2574 = vmatprep.subr.mxu0 0.0
  %2575 = vmatpush2.msra.mxu0 %v28
  %2576 = vmatprep.subr.mxu0 0.0
  %2577 = vmatpush2.msra.mxu0 %v27
  %2578 = vmatprep.mubr.f32.mxu0 %v2498
  %2579 = vmatmul.mubr.f32.gmra.mxu0 %v2490
  %v2580 = vpop.f32.mrf.mxu0
  %v2581 = vadd.f32 0.0, %v2580
  %v2582 = vpop.f32.mrf.mxu0
  %2583 = vdwg.mxu0
  %2584 = vmatprep.subr.mxu0 0.0
  %2585 = vmatpush1.msra.mxu0 %v58
  %2586 = vmatprep.subr.mxu0 0.0
  %2587 = vmatpush1.msra.mxu0 %v57
  %2588 = vmatprep.subr.mxu0 0.0
  %2589 = vmatpush1.msra.mxu0 %v56
  %2590 = vmatprep.subr.mxu0 0.0
  %2591 = vmatpush1.msra.mxu0 %v55
  %2592 = vmatprep.subr.mxu0 0.0
  %2593 = vmatpush1.msra.mxu0 %v54
  %2594 = vmatprep.subr.mxu0 0.0
  %2595 = vmatpush1.msra.mxu0 %v53
  %2596 = vmatprep.subr.mxu0 0.0
  %2597 = vmatpush1.msra.mxu0 %v52
  %2598 = vmatprep.subr.mxu0 0.0
  %2599 = vmatpush1.msra.mxu0 %v51
  %2600 = vmatprep.subr.mxu0 0.0
  %2601 = vmatpush1.msra.mxu0 %v50
  %2602 = vmatprep.subr.mxu0 0.0
  %2603 = vmatpush1.msra.mxu0 %v49
  %2604 = vmatprep.subr.mxu0 0.0
  %2605 = vmatpush1.msra.mxu0 %v48
  %2606 = vmatprep.subr.mxu0 0.0
  %2607 = vmatpush1.msra.mxu0 %v47
  %2608 = vmatprep.subr.mxu0 0.0
  %2609 = vmatpush1.msra.mxu0 %v46
  %2610 = vmatprep.subr.mxu0 0.0
  %2611 = vmatpush1.msra.mxu0 %v45
  %2612 = vmatprep.subr.mxu0 0.0
  %2613 = vmatpush1.msra.mxu0 %v44
  %2614 = vmatprep.subr.mxu0 0.0
  %2615 = vmatpush1.msra.mxu0 %v43
  %2616 = vmatprep.subr.mxu0 0.0
  %2617 = vmatpush2.msra.mxu0 %v74
  %2618 = vmatprep.subr.mxu0 0.0
  %2619 = vmatpush2.msra.mxu0 %v73
  %2620 = vmatprep.subr.mxu0 0.0
  %2621 = vmatpush2.msra.mxu0 %v72
  %2622 = vmatprep.subr.mxu0 0.0
  %2623 = vmatpush2.msra.mxu0 %v71
  %2624 = vmatprep.subr.mxu0 0.0
  %2625 = vmatpush2.msra.mxu0 %v70
  %2626 = vmatprep.subr.mxu0 0.0
  %2627 = vmatpush2.msra.mxu0 %v69
  %2628 = vmatprep.subr.mxu0 0.0
  %2629 = vmatpush2.msra.mxu0 %v68
  %2630 = vmatprep.subr.mxu0 0.0
  %2631 = vmatpush2.msra.mxu0 %v67
  %2632 = vmatprep.subr.mxu0 0.0
  %2633 = vmatpush2.msra.mxu0 %v66
  %2634 = vmatprep.subr.mxu0 0.0
  %2635 = vmatpush2.msra.mxu0 %v65
  %2636 = vmatprep.subr.mxu0 0.0
  %2637 = vmatpush2.msra.mxu0 %v64
  %2638 = vmatprep.subr.mxu0 0.0
  %2639 = vmatpush2.msra.mxu0 %v63
  %2640 = vmatprep.subr.mxu0 0.0
  %2641 = vmatpush2.msra.mxu0 %v62
  %2642 = vmatprep.subr.mxu0 0.0
  %2643 = vmatpush2.msra.mxu0 %v61
  %2644 = vmatprep.subr.mxu0 0.0
  %2645 = vmatpush2.msra.mxu0 %v60
  %2646 = vmatprep.subr.mxu0 0.0
  %2647 = vmatpush2.msra.mxu0 %v59
  %2648 = vmatprep.mubr.f32.mxu0 %v2499
  %2649 = vmatmul.mubr.f32.gmra.mxu0 %v2497
  %v2650 = vpop.f32.mrf.mxu0
  %v2651 = vadd.f32 %v2581, %v2650
  %v2652 = vpop.f32.mrf.mxu0
  %2653 = vdwg.mxu0
  %2654 = vmatprep.subr.mxu0 0.0
  %2655 = vmatpush1.msra.mxu0 %v90
  %2656 = vmatprep.subr.mxu0 0.0
  %2657 = vmatpush1.msra.mxu0 %v89
  %2658 = vmatprep.subr.mxu0 0.0
  %2659 = vmatpush1.msra.mxu0 %v88
  %2660 = vmatprep.subr.mxu0 0.0
  %2661 = vmatpush1.msra.mxu0 %v87
  %2662 = vmatprep.subr.mxu0 0.0
  %2663 = vmatpush1.msra.mxu0 %v86
  %2664 = vmatprep.subr.mxu0 0.0
  %2665 = vmatpush1.msra.mxu0 %v85
  %2666 = vmatprep.subr.mxu0 0.0
  %2667 = vmatpush1.msra.mxu0 %v84
  %2668 = vmatprep.subr.mxu0 0.0
  %2669 = vmatpush1.msra.mxu0 %v83
  %2670 = vmatprep.subr.mxu0 0.0
  %2671 = vmatpush1.msra.mxu0 %v82
  %2672 = vmatprep.subr.mxu0 0.0
  %2673 = vmatpush1.msra.mxu0 %v81
  %2674 = vmatprep.subr.mxu0 0.0
  %2675 = vmatpush1.msra.mxu0 %v80
  %2676 = vmatprep.subr.mxu0 0.0
  %2677 = vmatpush1.msra.mxu0 %v79
  %2678 = vmatprep.subr.mxu0 0.0
  %2679 = vmatpush1.msra.mxu0 %v78
  %2680 = vmatprep.subr.mxu0 0.0
  %2681 = vmatpush1.msra.mxu0 %v77
  %2682 = vmatprep.subr.mxu0 0.0
  %2683 = vmatpush1.msra.mxu0 %v76
  %2684 = vmatprep.subr.mxu0 0.0
  %2685 = vmatpush1.msra.mxu0 %v75
  %2686 = vmatprep.subr.mxu0 0.0
  %2687 = vmatpush2.msra.mxu0 %v106
  %2688 = vmatprep.subr.mxu0 0.0
  %2689 = vmatpush2.msra.mxu0 %v105
  %2690 = vmatprep.subr.mxu0 0.0
  %2691 = vmatpush2.msra.mxu0 %v104
  %2692 = vmatprep.subr.mxu0 0.0
  %2693 = vmatpush2.msra.mxu0 %v103
  %2694 = vmatprep.subr.mxu0 0.0
  %2695 = vmatpush2.msra.mxu0 %v102
  %2696 = vmatprep.subr.mxu0 0.0
  %2697 = vmatpush2.msra.mxu0 %v101
  %2698 = vmatprep.subr.mxu0 0.0
  %2699 = vmatpush2.msra.mxu0 %v100
  %2700 = vmatprep.subr.mxu0 0.0
  %2701 = vmatpush2.msra.mxu0 %v99
  %2702 = vmatprep.subr.mxu0 0.0
  %2703 = vmatpush2.msra.mxu0 %v98
  %2704 = vmatprep.subr.mxu0 0.0
  %2705 = vmatpush2.msra.mxu0 %v97
  %2706 = vmatprep.subr.mxu0 0.0
  %2707 = vmatpush2.msra.mxu0 %v96
  %2708 = vmatprep.subr.mxu0 0.0
  %2709 = vmatpush2.msra.mxu0 %v95
  %2710 = vmatprep.subr.mxu0 0.0
  %2711 = vmatpush2.msra.mxu0 %v94
  %2712 = vmatprep.subr.mxu0 0.0
  %2713 = vmatpush2.msra.mxu0 %v93
  %2714 = vmatprep.subr.mxu0 0.0
  %2715 = vmatpush2.msra.mxu0 %v92
  %2716 = vmatprep.subr.mxu0 0.0
  %2717 = vmatpush2.msra.mxu0 %v91
  %2718 = vmatprep.mubr.f32.mxu0 %v2507
  %2719 = vmatmul.mubr.f32.gmra.mxu0 %v2506
  %v2720 = vpop.f32.mrf.mxu0
  %v2721 = vadd.f32 %v2651, %v2720
  %v2722 = vpop.f32.mrf.mxu0
  %2723 = vdwg.mxu0
  %v2724 = vsel %vm356, %v2490, 0.0
  %v2725 = vsel %vm356, %v2498, 0.0
  %v2726 = vadd.f32 %v2724, %v2725
  %v2727 = vsel %vm356, %v2497, 0.0
  %v2728 = vadd.f32 %v2726, %v2727
  %v2729 = vsel %vm356, %v2499, 0.0
  %v2730 = vadd.f32 %v2728, %v2729
  %v2731 = vsel %vm356, %v2506, 0.0
  %v2732 = vadd.f32 %v2730, %v2731
  %v2733 = vsel %vm356, %v2507, 0.0
  %v2734 = vadd.f32 %v2732, %v2733
  %2735 = vadd.xlane.f32.xlu0 %v2734
  %v2736 = vpop.xlane.xlu0 %2735
  %v2737 = vsel %vm109, %v2736, %v2721
  %s2738 = scalar_lea.vmem %s2, 18
  %2739 = vst.msk [vmem:[%s2738] sm:$0x3] %vm371, %v2737
  %s2740 = scalar_lea.vmem %s0, 60
  %v2741 = vld [vmem:[%s2740] sm:$0x3f]
  %v2742 = vunpack.c.l.bf16 %v2741
  %v2743 = vunpack.c.h.bf16 %v2741
  %v2746 = vcombine.high %v2742, %v2742
  %v2748 = vunpack.c.l.s4 1983009808
  %v2749 = vunpack.c.0.s8 %v2748
  %v2750 = vlaneseq
  %v2751 = vshrl.u32 %v2750, 7
  %v2752 = vsub.s32 %v2749, %v2751
  %v2753 = vrot.slane %v2742, %v2752
  %v2755 = vunpack.c.l.s4 1983009808
  %v2756 = vunpack.c.0.s8 %v2755
  %v2757 = vlaneseq
  %v2758 = vshrl.u32 %v2757, 7
  %v2759 = vsub.s32 %v2756, %v2758
  %v2760 = vrot.slane %v2746, %v2759
  %v2761 = vcombine.high %v2753, %v2753
  %v2762 = vcombine.high %v2760, %v2760
  %v2764 = vunpack.c.l.s4 1983009808
  %v2765 = vunpack.c.0.s8 %v2764
  %v2766 = vlaneseq
  %v2767 = vshrl.u32 %v2766, 7
  %v2768 = vsub.s32 %v2765, %v2767
  %v2769 = vrot.slane %v2743, %v2768
  %v2770 = vcombine.high %v2769, %v2769
  %2777 = vmatprep.subr.mxu0 0.0
  %2778 = vmatpush1.msra.mxu0 %v26
  %2779 = vmatprep.subr.mxu0 0.0
  %2780 = vmatpush1.msra.mxu0 %v25
  %2781 = vmatprep.subr.mxu0 0.0
  %2782 = vmatpush1.msra.mxu0 %v24
  %2783 = vmatprep.subr.mxu0 0.0
  %2784 = vmatpush1.msra.mxu0 %v23
  %2785 = vmatprep.subr.mxu0 0.0
  %2786 = vmatpush1.msra.mxu0 %v22
  %2787 = vmatprep.subr.mxu0 0.0
  %2788 = vmatpush1.msra.mxu0 %v21
  %2789 = vmatprep.subr.mxu0 0.0
  %2790 = vmatpush1.msra.mxu0 %v20
  %2791 = vmatprep.subr.mxu0 0.0
  %2792 = vmatpush1.msra.mxu0 %v19
  %2793 = vmatprep.subr.mxu0 0.0
  %2794 = vmatpush1.msra.mxu0 %v18
  %2795 = vmatprep.subr.mxu0 0.0
  %2796 = vmatpush1.msra.mxu0 %v17
  %2797 = vmatprep.subr.mxu0 0.0
  %2798 = vmatpush1.msra.mxu0 %v16
  %2799 = vmatprep.subr.mxu0 0.0
  %2800 = vmatpush1.msra.mxu0 %v15
  %2801 = vmatprep.subr.mxu0 0.0
  %2802 = vmatpush1.msra.mxu0 %v14
  %2803 = vmatprep.subr.mxu0 0.0
  %2804 = vmatpush1.msra.mxu0 %v13
  %2805 = vmatprep.subr.mxu0 0.0
  %2806 = vmatpush1.msra.mxu0 %v12
  %2807 = vmatprep.subr.mxu0 0.0
  %2808 = vmatpush1.msra.mxu0 %v11
  %2809 = vmatprep.subr.mxu0 0.0
  %2810 = vmatpush2.msra.mxu0 %v42
  %2811 = vmatprep.subr.mxu0 0.0
  %2812 = vmatpush2.msra.mxu0 %v41
  %2813 = vmatprep.subr.mxu0 0.0
  %2814 = vmatpush2.msra.mxu0 %v40
  %2815 = vmatprep.subr.mxu0 0.0
  %2816 = vmatpush2.msra.mxu0 %v39
  %2817 = vmatprep.subr.mxu0 0.0
  %2818 = vmatpush2.msra.mxu0 %v38
  %2819 = vmatprep.subr.mxu0 0.0
  %2820 = vmatpush2.msra.mxu0 %v37
  %2821 = vmatprep.subr.mxu0 0.0
  %2822 = vmatpush2.msra.mxu0 %v36
  %2823 = vmatprep.subr.mxu0 0.0
  %2824 = vmatpush2.msra.mxu0 %v35
  %2825 = vmatprep.subr.mxu0 0.0
  %2826 = vmatpush2.msra.mxu0 %v34
  %2827 = vmatprep.subr.mxu0 0.0
  %2828 = vmatpush2.msra.mxu0 %v33
  %2829 = vmatprep.subr.mxu0 0.0
  %2830 = vmatpush2.msra.mxu0 %v32
  %2831 = vmatprep.subr.mxu0 0.0
  %2832 = vmatpush2.msra.mxu0 %v31
  %2833 = vmatprep.subr.mxu0 0.0
  %2834 = vmatpush2.msra.mxu0 %v30
  %2835 = vmatprep.subr.mxu0 0.0
  %2836 = vmatpush2.msra.mxu0 %v29
  %2837 = vmatprep.subr.mxu0 0.0
  %2838 = vmatpush2.msra.mxu0 %v28
  %2839 = vmatprep.subr.mxu0 0.0
  %2840 = vmatpush2.msra.mxu0 %v27
  %2841 = vmatprep.mubr.f32.mxu0 %v2761
  %2842 = vmatmul.mubr.f32.gmra.mxu0 %v2753
  %v2843 = vpop.f32.mrf.mxu0
  %v2844 = vadd.f32 0.0, %v2843
  %v2845 = vpop.f32.mrf.mxu0
  %2846 = vdwg.mxu0
  %2847 = vmatprep.subr.mxu0 0.0
  %2848 = vmatpush1.msra.mxu0 %v58
  %2849 = vmatprep.subr.mxu0 0.0
  %2850 = vmatpush1.msra.mxu0 %v57
  %2851 = vmatprep.subr.mxu0 0.0
  %2852 = vmatpush1.msra.mxu0 %v56
  %2853 = vmatprep.subr.mxu0 0.0
  %2854 = vmatpush1.msra.mxu0 %v55
  %2855 = vmatprep.subr.mxu0 0.0
  %2856 = vmatpush1.msra.mxu0 %v54
  %2857 = vmatprep.subr.mxu0 0.0
  %2858 = vmatpush1.msra.mxu0 %v53
  %2859 = vmatprep.subr.mxu0 0.0
  %2860 = vmatpush1.msra.mxu0 %v52
  %2861 = vmatprep.subr.mxu0 0.0
  %2862 = vmatpush1.msra.mxu0 %v51
  %2863 = vmatprep.subr.mxu0 0.0
  %2864 = vmatpush1.msra.mxu0 %v50
  %2865 = vmatprep.subr.mxu0 0.0
  %2866 = vmatpush1.msra.mxu0 %v49
  %2867 = vmatprep.subr.mxu0 0.0
  %2868 = vmatpush1.msra.mxu0 %v48
  %2869 = vmatprep.subr.mxu0 0.0
  %2870 = vmatpush1.msra.mxu0 %v47
  %2871 = vmatprep.subr.mxu0 0.0
  %2872 = vmatpush1.msra.mxu0 %v46
  %2873 = vmatprep.subr.mxu0 0.0
  %2874 = vmatpush1.msra.mxu0 %v45
  %2875 = vmatprep.subr.mxu0 0.0
  %2876 = vmatpush1.msra.mxu0 %v44
  %2877 = vmatprep.subr.mxu0 0.0
  %2878 = vmatpush1.msra.mxu0 %v43
  %2879 = vmatprep.subr.mxu0 0.0
  %2880 = vmatpush2.msra.mxu0 %v74
  %2881 = vmatprep.subr.mxu0 0.0
  %2882 = vmatpush2.msra.mxu0 %v73
  %2883 = vmatprep.subr.mxu0 0.0
  %2884 = vmatpush2.msra.mxu0 %v72
  %2885 = vmatprep.subr.mxu0 0.0
  %2886 = vmatpush2.msra.mxu0 %v71
  %2887 = vmatprep.subr.mxu0 0.0
  %2888 = vmatpush2.msra.mxu0 %v70
  %2889 = vmatprep.subr.mxu0 0.0
  %2890 = vmatpush2.msra.mxu0 %v69
  %2891 = vmatprep.subr.mxu0 0.0
  %2892 = vmatpush2.msra.mxu0 %v68
  %2893 = vmatprep.subr.mxu0 0.0
  %2894 = vmatpush2.msra.mxu0 %v67
  %2895 = vmatprep.subr.mxu0 0.0
  %2896 = vmatpush2.msra.mxu0 %v66
  %2897 = vmatprep.subr.mxu0 0.0
  %2898 = vmatpush2.msra.mxu0 %v65
  %2899 = vmatprep.subr.mxu0 0.0
  %2900 = vmatpush2.msra.mxu0 %v64
  %2901 = vmatprep.subr.mxu0 0.0
  %2902 = vmatpush2.msra.mxu0 %v63
  %2903 = vmatprep.subr.mxu0 0.0
  %2904 = vmatpush2.msra.mxu0 %v62
  %2905 = vmatprep.subr.mxu0 0.0
  %2906 = vmatpush2.msra.mxu0 %v61
  %2907 = vmatprep.subr.mxu0 0.0
  %2908 = vmatpush2.msra.mxu0 %v60
  %2909 = vmatprep.subr.mxu0 0.0
  %2910 = vmatpush2.msra.mxu0 %v59
  %2911 = vmatprep.mubr.f32.mxu0 %v2762
  %2912 = vmatmul.mubr.f32.gmra.mxu0 %v2760
  %v2913 = vpop.f32.mrf.mxu0
  %v2914 = vadd.f32 %v2844, %v2913
  %v2915 = vpop.f32.mrf.mxu0
  %2916 = vdwg.mxu0
  %2917 = vmatprep.subr.mxu0 0.0
  %2918 = vmatpush1.msra.mxu0 %v90
  %2919 = vmatprep.subr.mxu0 0.0
  %2920 = vmatpush1.msra.mxu0 %v89
  %2921 = vmatprep.subr.mxu0 0.0
  %2922 = vmatpush1.msra.mxu0 %v88
  %2923 = vmatprep.subr.mxu0 0.0
  %2924 = vmatpush1.msra.mxu0 %v87
  %2925 = vmatprep.subr.mxu0 0.0
  %2926 = vmatpush1.msra.mxu0 %v86
  %2927 = vmatprep.subr.mxu0 0.0
  %2928 = vmatpush1.msra.mxu0 %v85
  %2929 = vmatprep.subr.mxu0 0.0
  %2930 = vmatpush1.msra.mxu0 %v84
  %2931 = vmatprep.subr.mxu0 0.0
  %2932 = vmatpush1.msra.mxu0 %v83
  %2933 = vmatprep.subr.mxu0 0.0
  %2934 = vmatpush1.msra.mxu0 %v82
  %2935 = vmatprep.subr.mxu0 0.0
  %2936 = vmatpush1.msra.mxu0 %v81
  %2937 = vmatprep.subr.mxu0 0.0
  %2938 = vmatpush1.msra.mxu0 %v80
  %2939 = vmatprep.subr.mxu0 0.0
  %2940 = vmatpush1.msra.mxu0 %v79
  %2941 = vmatprep.subr.mxu0 0.0
  %2942 = vmatpush1.msra.mxu0 %v78
  %2943 = vmatprep.subr.mxu0 0.0
  %2944 = vmatpush1.msra.mxu0 %v77
  %2945 = vmatprep.subr.mxu0 0.0
  %2946 = vmatpush1.msra.mxu0 %v76
  %2947 = vmatprep.subr.mxu0 0.0
  %2948 = vmatpush1.msra.mxu0 %v75
  %2949 = vmatprep.subr.mxu0 0.0
  %2950 = vmatpush2.msra.mxu0 %v106
  %2951 = vmatprep.subr.mxu0 0.0
  %2952 = vmatpush2.msra.mxu0 %v105
  %2953 = vmatprep.subr.mxu0 0.0
  %2954 = vmatpush2.msra.mxu0 %v104
  %2955 = vmatprep.subr.mxu0 0.0
  %2956 = vmatpush2.msra.mxu0 %v103
  %2957 = vmatprep.subr.mxu0 0.0
  %2958 = vmatpush2.msra.mxu0 %v102
  %2959 = vmatprep.subr.mxu0 0.0
  %2960 = vmatpush2.msra.mxu0 %v101
  %2961 = vmatprep.subr.mxu0 0.0
  %2962 = vmatpush2.msra.mxu0 %v100
  %2963 = vmatprep.subr.mxu0 0.0
  %2964 = vmatpush2.msra.mxu0 %v99
  %2965 = vmatprep.subr.mxu0 0.0
  %2966 = vmatpush2.msra.mxu0 %v98
  %2967 = vmatprep.subr.mxu0 0.0
  %2968 = vmatpush2.msra.mxu0 %v97
  %2969 = vmatprep.subr.mxu0 0.0
  %2970 = vmatpush2.msra.mxu0 %v96
  %2971 = vmatprep.subr.mxu0 0.0
  %2972 = vmatpush2.msra.mxu0 %v95
  %2973 = vmatprep.subr.mxu0 0.0
  %2974 = vmatpush2.msra.mxu0 %v94
  %2975 = vmatprep.subr.mxu0 0.0
  %2976 = vmatpush2.msra.mxu0 %v93
  %2977 = vmatprep.subr.mxu0 0.0
  %2978 = vmatpush2.msra.mxu0 %v92
  %2979 = vmatprep.subr.mxu0 0.0
  %2980 = vmatpush2.msra.mxu0 %v91
  %2981 = vmatprep.mubr.f32.mxu0 %v2770
  %2982 = vmatmul.mubr.f32.gmra.mxu0 %v2769
  %v2983 = vpop.f32.mrf.mxu0
  %v2984 = vadd.f32 %v2914, %v2983
  %v2985 = vpop.f32.mrf.mxu0
  %2986 = vdwg.mxu0
  %v2987 = vsel %vm356, %v2753, 0.0
  %v2988 = vsel %vm356, %v2761, 0.0
  %v2989 = vadd.f32 %v2987, %v2988
  %v2990 = vsel %vm356, %v2760, 0.0
  %v2991 = vadd.f32 %v2989, %v2990
  %v2992 = vsel %vm356, %v2762, 0.0
  %v2993 = vadd.f32 %v2991, %v2992
  %v2994 = vsel %vm356, %v2769, 0.0
  %v2995 = vadd.f32 %v2993, %v2994
  %v2996 = vsel %vm356, %v2770, 0.0
  %v2997 = vadd.f32 %v2995, %v2996
  %2998 = vadd.xlane.f32.xlu0 %v2997
  %v2999 = vpop.xlane.xlu0 %2998
  %v3000 = vsel %vm109, %v2999, %v2984
  %s3001 = scalar_lea.vmem %s2, 20
  %3002 = vst.msk [vmem:[%s3001] sm:$0x3] %vm371, %v3000
  %s3003 = scalar_lea.vmem %s0, 66
  %v3004 = vld [vmem:[%s3003] sm:$0x3f]
  %v3005 = vunpack.c.l.bf16 %v3004
  %v3006 = vunpack.c.h.bf16 %v3004
  %v3009 = vcombine.high %v3005, %v3005
  %v3011 = vunpack.c.l.s4 1983009808
  %v3012 = vunpack.c.0.s8 %v3011
  %v3013 = vlaneseq
  %v3014 = vshrl.u32 %v3013, 7
  %v3015 = vsub.s32 %v3012, %v3014
  %v3016 = vrot.slane %v3005, %v3015
  %v3018 = vunpack.c.l.s4 1983009808
  %v3019 = vunpack.c.0.s8 %v3018
  %v3020 = vlaneseq
  %v3021 = vshrl.u32 %v3020, 7
  %v3022 = vsub.s32 %v3019, %v3021
  %v3023 = vrot.slane %v3009, %v3022
  %v3024 = vcombine.high %v3016, %v3016
  %v3025 = vcombine.high %v3023, %v3023
  %v3027 = vunpack.c.l.s4 1983009808
  %v3028 = vunpack.c.0.s8 %v3027
  %v3029 = vlaneseq
  %v3030 = vshrl.u32 %v3029, 7
  %v3031 = vsub.s32 %v3028, %v3030
  %v3032 = vrot.slane %v3006, %v3031
  %v3033 = vcombine.high %v3032, %v3032
  %3040 = vmatprep.subr.mxu0 0.0
  %3041 = vmatpush1.msra.mxu0 %v26
  %3042 = vmatprep.subr.mxu0 0.0
  %3043 = vmatpush1.msra.mxu0 %v25
  %3044 = vmatprep.subr.mxu0 0.0
  %3045 = vmatpush1.msra.mxu0 %v24
  %3046 = vmatprep.subr.mxu0 0.0
  %3047 = vmatpush1.msra.mxu0 %v23
  %3048 = vmatprep.subr.mxu0 0.0
  %3049 = vmatpush1.msra.mxu0 %v22
  %3050 = vmatprep.subr.mxu0 0.0
  %3051 = vmatpush1.msra.mxu0 %v21
  %3052 = vmatprep.subr.mxu0 0.0
  %3053 = vmatpush1.msra.mxu0 %v20
  %3054 = vmatprep.subr.mxu0 0.0
  %3055 = vmatpush1.msra.mxu0 %v19
  %3056 = vmatprep.subr.mxu0 0.0
  %3057 = vmatpush1.msra.mxu0 %v18
  %3058 = vmatprep.subr.mxu0 0.0
  %3059 = vmatpush1.msra.mxu0 %v17
  %3060 = vmatprep.subr.mxu0 0.0
  %3061 = vmatpush1.msra.mxu0 %v16
  %3062 = vmatprep.subr.mxu0 0.0
  %3063 = vmatpush1.msra.mxu0 %v15
  %3064 = vmatprep.subr.mxu0 0.0
  %3065 = vmatpush1.msra.mxu0 %v14
  %3066 = vmatprep.subr.mxu0 0.0
  %3067 = vmatpush1.msra.mxu0 %v13
  %3068 = vmatprep.subr.mxu0 0.0
  %3069 = vmatpush1.msra.mxu0 %v12
  %3070 = vmatprep.subr.mxu0 0.0
  %3071 = vmatpush1.msra.mxu0 %v11
  %3072 = vmatprep.subr.mxu0 0.0
  %3073 = vmatpush2.msra.mxu0 %v42
  %3074 = vmatprep.subr.mxu0 0.0
  %3075 = vmatpush2.msra.mxu0 %v41
  %3076 = vmatprep.subr.mxu0 0.0
  %3077 = vmatpush2.msra.mxu0 %v40
  %3078 = vmatprep.subr.mxu0 0.0
  %3079 = vmatpush2.msra.mxu0 %v39
  %3080 = vmatprep.subr.mxu0 0.0
  %3081 = vmatpush2.msra.mxu0 %v38
  %3082 = vmatprep.subr.mxu0 0.0
  %3083 = vmatpush2.msra.mxu0 %v37
  %3084 = vmatprep.subr.mxu0 0.0
  %3085 = vmatpush2.msra.mxu0 %v36
  %3086 = vmatprep.subr.mxu0 0.0
  %3087 = vmatpush2.msra.mxu0 %v35
  %3088 = vmatprep.subr.mxu0 0.0
  %3089 = vmatpush2.msra.mxu0 %v34
  %3090 = vmatprep.subr.mxu0 0.0
  %3091 = vmatpush2.msra.mxu0 %v33
  %3092 = vmatprep.subr.mxu0 0.0
  %3093 = vmatpush2.msra.mxu0 %v32
  %3094 = vmatprep.subr.mxu0 0.0
  %3095 = vmatpush2.msra.mxu0 %v31
  %3096 = vmatprep.subr.mxu0 0.0
  %3097 = vmatpush2.msra.mxu0 %v30
  %3098 = vmatprep.subr.mxu0 0.0
  %3099 = vmatpush2.msra.mxu0 %v29
  %3100 = vmatprep.subr.mxu0 0.0
  %3101 = vmatpush2.msra.mxu0 %v28
  %3102 = vmatprep.subr.mxu0 0.0
  %3103 = vmatpush2.msra.mxu0 %v27
  %3104 = vmatprep.mubr.f32.mxu0 %v3024
  %3105 = vmatmul.mubr.f32.gmra.mxu0 %v3016
  %v3106 = vpop.f32.mrf.mxu0
  %v3107 = vadd.f32 0.0, %v3106
  %v3108 = vpop.f32.mrf.mxu0
  %3109 = vdwg.mxu0
  %3110 = vmatprep.subr.mxu0 0.0
  %3111 = vmatpush1.msra.mxu0 %v58
  %3112 = vmatprep.subr.mxu0 0.0
  %3113 = vmatpush1.msra.mxu0 %v57
  %3114 = vmatprep.subr.mxu0 0.0
  %3115 = vmatpush1.msra.mxu0 %v56
  %3116 = vmatprep.subr.mxu0 0.0
  %3117 = vmatpush1.msra.mxu0 %v55
  %3118 = vmatprep.subr.mxu0 0.0
  %3119 = vmatpush1.msra.mxu0 %v54
  %3120 = vmatprep.subr.mxu0 0.0
  %3121 = vmatpush1.msra.mxu0 %v53
  %3122 = vmatprep.subr.mxu0 0.0
  %3123 = vmatpush1.msra.mxu0 %v52
  %3124 = vmatprep.subr.mxu0 0.0
  %3125 = vmatpush1.msra.mxu0 %v51
  %3126 = vmatprep.subr.mxu0 0.0
  %3127 = vmatpush1.msra.mxu0 %v50
  %3128 = vmatprep.subr.mxu0 0.0
  %3129 = vmatpush1.msra.mxu0 %v49
  %3130 = vmatprep.subr.mxu0 0.0
  %3131 = vmatpush1.msra.mxu0 %v48
  %3132 = vmatprep.subr.mxu0 0.0
  %3133 = vmatpush1.msra.mxu0 %v47
  %3134 = vmatprep.subr.mxu0 0.0
  %3135 = vmatpush1.msra.mxu0 %v46
  %3136 = vmatprep.subr.mxu0 0.0
  %3137 = vmatpush1.msra.mxu0 %v45
  %3138 = vmatprep.subr.mxu0 0.0
  %3139 = vmatpush1.msra.mxu0 %v44
  %3140 = vmatprep.subr.mxu0 0.0
  %3141 = vmatpush1.msra.mxu0 %v43
  %3142 = vmatprep.subr.mxu0 0.0
  %3143 = vmatpush2.msra.mxu0 %v74
  %3144 = vmatprep.subr.mxu0 0.0
  %3145 = vmatpush2.msra.mxu0 %v73
  %3146 = vmatprep.subr.mxu0 0.0
  %3147 = vmatpush2.msra.mxu0 %v72
  %3148 = vmatprep.subr.mxu0 0.0
  %3149 = vmatpush2.msra.mxu0 %v71
  %3150 = vmatprep.subr.mxu0 0.0
  %3151 = vmatpush2.msra.mxu0 %v70
  %3152 = vmatprep.subr.mxu0 0.0
  %3153 = vmatpush2.msra.mxu0 %v69
  %3154 = vmatprep.subr.mxu0 0.0
  %3155 = vmatpush2.msra.mxu0 %v68
  %3156 = vmatprep.subr.mxu0 0.0
  %3157 = vmatpush2.msra.mxu0 %v67
  %3158 = vmatprep.subr.mxu0 0.0
  %3159 = vmatpush2.msra.mxu0 %v66
  %3160 = vmatprep.subr.mxu0 0.0
  %3161 = vmatpush2.msra.mxu0 %v65
  %3162 = vmatprep.subr.mxu0 0.0
  %3163 = vmatpush2.msra.mxu0 %v64
  %3164 = vmatprep.subr.mxu0 0.0
  %3165 = vmatpush2.msra.mxu0 %v63
  %3166 = vmatprep.subr.mxu0 0.0
  %3167 = vmatpush2.msra.mxu0 %v62
  %3168 = vmatprep.subr.mxu0 0.0
  %3169 = vmatpush2.msra.mxu0 %v61
  %3170 = vmatprep.subr.mxu0 0.0
  %3171 = vmatpush2.msra.mxu0 %v60
  %3172 = vmatprep.subr.mxu0 0.0
  %3173 = vmatpush2.msra.mxu0 %v59
  %3174 = vmatprep.mubr.f32.mxu0 %v3025
  %3175 = vmatmul.mubr.f32.gmra.mxu0 %v3023
  %v3176 = vpop.f32.mrf.mxu0
  %v3177 = vadd.f32 %v3107, %v3176
  %v3178 = vpop.f32.mrf.mxu0
  %3179 = vdwg.mxu0
  %3180 = vmatprep.subr.mxu0 0.0
  %3181 = vmatpush1.msra.mxu0 %v90
  %3182 = vmatprep.subr.mxu0 0.0
  %3183 = vmatpush1.msra.mxu0 %v89
  %3184 = vmatprep.subr.mxu0 0.0
  %3185 = vmatpush1.msra.mxu0 %v88
  %3186 = vmatprep.subr.mxu0 0.0
  %3187 = vmatpush1.msra.mxu0 %v87
  %3188 = vmatprep.subr.mxu0 0.0
  %3189 = vmatpush1.msra.mxu0 %v86
  %3190 = vmatprep.subr.mxu0 0.0
  %3191 = vmatpush1.msra.mxu0 %v85
  %3192 = vmatprep.subr.mxu0 0.0
  %3193 = vmatpush1.msra.mxu0 %v84
  %3194 = vmatprep.subr.mxu0 0.0
  %3195 = vmatpush1.msra.mxu0 %v83
  %3196 = vmatprep.subr.mxu0 0.0
  %3197 = vmatpush1.msra.mxu0 %v82
  %3198 = vmatprep.subr.mxu0 0.0
  %3199 = vmatpush1.msra.mxu0 %v81
  %3200 = vmatprep.subr.mxu0 0.0
  %3201 = vmatpush1.msra.mxu0 %v80
  %3202 = vmatprep.subr.mxu0 0.0
  %3203 = vmatpush1.msra.mxu0 %v79
  %3204 = vmatprep.subr.mxu0 0.0
  %3205 = vmatpush1.msra.mxu0 %v78
  %3206 = vmatprep.subr.mxu0 0.0
  %3207 = vmatpush1.msra.mxu0 %v77
  %3208 = vmatprep.subr.mxu0 0.0
  %3209 = vmatpush1.msra.mxu0 %v76
  %3210 = vmatprep.subr.mxu0 0.0
  %3211 = vmatpush1.msra.mxu0 %v75
  %3212 = vmatprep.subr.mxu0 0.0
  %3213 = vmatpush2.msra.mxu0 %v106
  %3214 = vmatprep.subr.mxu0 0.0
  %3215 = vmatpush2.msra.mxu0 %v105
  %3216 = vmatprep.subr.mxu0 0.0
  %3217 = vmatpush2.msra.mxu0 %v104
  %3218 = vmatprep.subr.mxu0 0.0
  %3219 = vmatpush2.msra.mxu0 %v103
  %3220 = vmatprep.subr.mxu0 0.0
  %3221 = vmatpush2.msra.mxu0 %v102
  %3222 = vmatprep.subr.mxu0 0.0
  %3223 = vmatpush2.msra.mxu0 %v101
  %3224 = vmatprep.subr.mxu0 0.0
  %3225 = vmatpush2.msra.mxu0 %v100
  %3226 = vmatprep.subr.mxu0 0.0
  %3227 = vmatpush2.msra.mxu0 %v99
  %3228 = vmatprep.subr.mxu0 0.0
  %3229 = vmatpush2.msra.mxu0 %v98
  %3230 = vmatprep.subr.mxu0 0.0
  %3231 = vmatpush2.msra.mxu0 %v97
  %3232 = vmatprep.subr.mxu0 0.0
  %3233 = vmatpush2.msra.mxu0 %v96
  %3234 = vmatprep.subr.mxu0 0.0
  %3235 = vmatpush2.msra.mxu0 %v95
  %3236 = vmatprep.subr.mxu0 0.0
  %3237 = vmatpush2.msra.mxu0 %v94
  %3238 = vmatprep.subr.mxu0 0.0
  %3239 = vmatpush2.msra.mxu0 %v93
  %3240 = vmatprep.subr.mxu0 0.0
  %3241 = vmatpush2.msra.mxu0 %v92
  %3242 = vmatprep.subr.mxu0 0.0
  %3243 = vmatpush2.msra.mxu0 %v91
  %3244 = vmatprep.mubr.f32.mxu0 %v3033
  %3245 = vmatmul.mubr.f32.gmra.mxu0 %v3032
  %v3246 = vpop.f32.mrf.mxu0
  %v3247 = vadd.f32 %v3177, %v3246
  %v3248 = vpop.f32.mrf.mxu0
  %3249 = vdwg.mxu0
  %v3250 = vsel %vm356, %v3016, 0.0
  %v3251 = vsel %vm356, %v3024, 0.0
  %v3252 = vadd.f32 %v3250, %v3251
  %v3253 = vsel %vm356, %v3023, 0.0
  %v3254 = vadd.f32 %v3252, %v3253
  %v3255 = vsel %vm356, %v3025, 0.0
  %v3256 = vadd.f32 %v3254, %v3255
  %v3257 = vsel %vm356, %v3032, 0.0
  %v3258 = vadd.f32 %v3256, %v3257
  %v3259 = vsel %vm356, %v3033, 0.0
  %v3260 = vadd.f32 %v3258, %v3259
  %3261 = vadd.xlane.f32.xlu0 %v3260
  %v3262 = vpop.xlane.xlu0 %3261
  %v3263 = vsel %vm109, %v3262, %v3247
  %s3264 = scalar_lea.vmem %s2, 22
  %3265 = vst.msk [vmem:[%s3264] sm:$0x3] %vm371, %v3263
  %s3266 = scalar_lea.vmem %s0, 72
  %v3267 = vld [vmem:[%s3266] sm:$0x3f]
  %v3268 = vunpack.c.l.bf16 %v3267
  %v3269 = vunpack.c.h.bf16 %v3267
  %v3272 = vcombine.high %v3268, %v3268
  %v3274 = vunpack.c.l.s4 1983009808
  %v3275 = vunpack.c.0.s8 %v3274
  %v3276 = vlaneseq
  %v3277 = vshrl.u32 %v3276, 7
  %v3278 = vsub.s32 %v3275, %v3277
  %v3279 = vrot.slane %v3268, %v3278
  %v3281 = vunpack.c.l.s4 1983009808
  %v3282 = vunpack.c.0.s8 %v3281
  %v3283 = vlaneseq
  %v3284 = vshrl.u32 %v3283, 7
  %v3285 = vsub.s32 %v3282, %v3284
  %v3286 = vrot.slane %v3272, %v3285
  %v3287 = vcombine.high %v3279, %v3279
  %v3288 = vcombine.high %v3286, %v3286
  %v3290 = vunpack.c.l.s4 1983009808
  %v3291 = vunpack.c.0.s8 %v3290
  %v3292 = vlaneseq
  %v3293 = vshrl.u32 %v3292, 7
  %v3294 = vsub.s32 %v3291, %v3293
  %v3295 = vrot.slane %v3269, %v3294
  %v3296 = vcombine.high %v3295, %v3295
  %3303 = vmatprep.subr.mxu0 0.0
  %3304 = vmatpush1.msra.mxu0 %v26
  %3305 = vmatprep.subr.mxu0 0.0
  %3306 = vmatpush1.msra.mxu0 %v25
  %3307 = vmatprep.subr.mxu0 0.0
  %3308 = vmatpush1.msra.mxu0 %v24
  %3309 = vmatprep.subr.mxu0 0.0
  %3310 = vmatpush1.msra.mxu0 %v23
  %3311 = vmatprep.subr.mxu0 0.0
  %3312 = vmatpush1.msra.mxu0 %v22
  %3313 = vmatprep.subr.mxu0 0.0
  %3314 = vmatpush1.msra.mxu0 %v21
  %3315 = vmatprep.subr.mxu0 0.0
  %3316 = vmatpush1.msra.mxu0 %v20
  %3317 = vmatprep.subr.mxu0 0.0
  %3318 = vmatpush1.msra.mxu0 %v19
  %3319 = vmatprep.subr.mxu0 0.0
  %3320 = vmatpush1.msra.mxu0 %v18
  %3321 = vmatprep.subr.mxu0 0.0
  %3322 = vmatpush1.msra.mxu0 %v17
  %3323 = vmatprep.subr.mxu0 0.0
  %3324 = vmatpush1.msra.mxu0 %v16
  %3325 = vmatprep.subr.mxu0 0.0
  %3326 = vmatpush1.msra.mxu0 %v15
  %3327 = vmatprep.subr.mxu0 0.0
  %3328 = vmatpush1.msra.mxu0 %v14
  %3329 = vmatprep.subr.mxu0 0.0
  %3330 = vmatpush1.msra.mxu0 %v13
  %3331 = vmatprep.subr.mxu0 0.0
  %3332 = vmatpush1.msra.mxu0 %v12
  %3333 = vmatprep.subr.mxu0 0.0
  %3334 = vmatpush1.msra.mxu0 %v11
  %3335 = vmatprep.subr.mxu0 0.0
  %3336 = vmatpush2.msra.mxu0 %v42
  %3337 = vmatprep.subr.mxu0 0.0
  %3338 = vmatpush2.msra.mxu0 %v41
  %3339 = vmatprep.subr.mxu0 0.0
  %3340 = vmatpush2.msra.mxu0 %v40
  %3341 = vmatprep.subr.mxu0 0.0
  %3342 = vmatpush2.msra.mxu0 %v39
  %3343 = vmatprep.subr.mxu0 0.0
  %3344 = vmatpush2.msra.mxu0 %v38
  %3345 = vmatprep.subr.mxu0 0.0
  %3346 = vmatpush2.msra.mxu0 %v37
  %3347 = vmatprep.subr.mxu0 0.0
  %3348 = vmatpush2.msra.mxu0 %v36
  %3349 = vmatprep.subr.mxu0 0.0
  %3350 = vmatpush2.msra.mxu0 %v35
  %3351 = vmatprep.subr.mxu0 0.0
  %3352 = vmatpush2.msra.mxu0 %v34
  %3353 = vmatprep.subr.mxu0 0.0
  %3354 = vmatpush2.msra.mxu0 %v33
  %3355 = vmatprep.subr.mxu0 0.0
  %3356 = vmatpush2.msra.mxu0 %v32
  %3357 = vmatprep.subr.mxu0 0.0
  %3358 = vmatpush2.msra.mxu0 %v31
  %3359 = vmatprep.subr.mxu0 0.0
  %3360 = vmatpush2.msra.mxu0 %v30
  %3361 = vmatprep.subr.mxu0 0.0
  %3362 = vmatpush2.msra.mxu0 %v29
  %3363 = vmatprep.subr.mxu0 0.0
  %3364 = vmatpush2.msra.mxu0 %v28
  %3365 = vmatprep.subr.mxu0 0.0
  %3366 = vmatpush2.msra.mxu0 %v27
  %3367 = vmatprep.mubr.f32.mxu0 %v3287
  %3368 = vmatmul.mubr.f32.gmra.mxu0 %v3279
  %v3369 = vpop.f32.mrf.mxu0
  %v3370 = vadd.f32 0.0, %v3369
  %v3371 = vpop.f32.mrf.mxu0
  %3372 = vdwg.mxu0
  %3373 = vmatprep.subr.mxu0 0.0
  %3374 = vmatpush1.msra.mxu0 %v58
  %3375 = vmatprep.subr.mxu0 0.0
  %3376 = vmatpush1.msra.mxu0 %v57
  %3377 = vmatprep.subr.mxu0 0.0
  %3378 = vmatpush1.msra.mxu0 %v56
  %3379 = vmatprep.subr.mxu0 0.0
  %3380 = vmatpush1.msra.mxu0 %v55
  %3381 = vmatprep.subr.mxu0 0.0
  %3382 = vmatpush1.msra.mxu0 %v54
  %3383 = vmatprep.subr.mxu0 0.0
  %3384 = vmatpush1.msra.mxu0 %v53
  %3385 = vmatprep.subr.mxu0 0.0
  %3386 = vmatpush1.msra.mxu0 %v52
  %3387 = vmatprep.subr.mxu0 0.0
  %3388 = vmatpush1.msra.mxu0 %v51
  %3389 = vmatprep.subr.mxu0 0.0
  %3390 = vmatpush1.msra.mxu0 %v50
  %3391 = vmatprep.subr.mxu0 0.0
  %3392 = vmatpush1.msra.mxu0 %v49
  %3393 = vmatprep.subr.mxu0 0.0
  %3394 = vmatpush1.msra.mxu0 %v48
  %3395 = vmatprep.subr.mxu0 0.0
  %3396 = vmatpush1.msra.mxu0 %v47
  %3397 = vmatprep.subr.mxu0 0.0
  %3398 = vmatpush1.msra.mxu0 %v46
  %3399 = vmatprep.subr.mxu0 0.0
  %3400 = vmatpush1.msra.mxu0 %v45
  %3401 = vmatprep.subr.mxu0 0.0
  %3402 = vmatpush1.msra.mxu0 %v44
  %3403 = vmatprep.subr.mxu0 0.0
  %3404 = vmatpush1.msra.mxu0 %v43
  %3405 = vmatprep.subr.mxu0 0.0
  %3406 = vmatpush2.msra.mxu0 %v74
  %3407 = vmatprep.subr.mxu0 0.0
  %3408 = vmatpush2.msra.mxu0 %v73
  %3409 = vmatprep.subr.mxu0 0.0
  %3410 = vmatpush2.msra.mxu0 %v72
  %3411 = vmatprep.subr.mxu0 0.0
  %3412 = vmatpush2.msra.mxu0 %v71
  %3413 = vmatprep.subr.mxu0 0.0
  %3414 = vmatpush2.msra.mxu0 %v70
  %3415 = vmatprep.subr.mxu0 0.0
  %3416 = vmatpush2.msra.mxu0 %v69
  %3417 = vmatprep.subr.mxu0 0.0
  %3418 = vmatpush2.msra.mxu0 %v68
  %3419 = vmatprep.subr.mxu0 0.0
  %3420 = vmatpush2.msra.mxu0 %v67
  %3421 = vmatprep.subr.mxu0 0.0
  %3422 = vmatpush2.msra.mxu0 %v66
  %3423 = vmatprep.subr.mxu0 0.0
  %3424 = vmatpush2.msra.mxu0 %v65
  %3425 = vmatprep.subr.mxu0 0.0
  %3426 = vmatpush2.msra.mxu0 %v64
  %3427 = vmatprep.subr.mxu0 0.0
  %3428 = vmatpush2.msra.mxu0 %v63
  %3429 = vmatprep.subr.mxu0 0.0
  %3430 = vmatpush2.msra.mxu0 %v62
  %3431 = vmatprep.subr.mxu0 0.0
  %3432 = vmatpush2.msra.mxu0 %v61
  %3433 = vmatprep.subr.mxu0 0.0
  %3434 = vmatpush2.msra.mxu0 %v60
  %3435 = vmatprep.subr.mxu0 0.0
  %3436 = vmatpush2.msra.mxu0 %v59
  %3437 = vmatprep.mubr.f32.mxu0 %v3288
  %3438 = vmatmul.mubr.f32.gmra.mxu0 %v3286
  %v3439 = vpop.f32.mrf.mxu0
  %v3440 = vadd.f32 %v3370, %v3439
  %v3441 = vpop.f32.mrf.mxu0
  %3442 = vdwg.mxu0
  %3443 = vmatprep.subr.mxu0 0.0
  %3444 = vmatpush1.msra.mxu0 %v90
  %3445 = vmatprep.subr.mxu0 0.0
  %3446 = vmatpush1.msra.mxu0 %v89
  %3447 = vmatprep.subr.mxu0 0.0
  %3448 = vmatpush1.msra.mxu0 %v88
  %3449 = vmatprep.subr.mxu0 0.0
  %3450 = vmatpush1.msra.mxu0 %v87
  %3451 = vmatprep.subr.mxu0 0.0
  %3452 = vmatpush1.msra.mxu0 %v86
  %3453 = vmatprep.subr.mxu0 0.0
  %3454 = vmatpush1.msra.mxu0 %v85
  %3455 = vmatprep.subr.mxu0 0.0
  %3456 = vmatpush1.msra.mxu0 %v84
  %3457 = vmatprep.subr.mxu0 0.0
  %3458 = vmatpush1.msra.mxu0 %v83
  %3459 = vmatprep.subr.mxu0 0.0
  %3460 = vmatpush1.msra.mxu0 %v82
  %3461 = vmatprep.subr.mxu0 0.0
  %3462 = vmatpush1.msra.mxu0 %v81
  %3463 = vmatprep.subr.mxu0 0.0
  %3464 = vmatpush1.msra.mxu0 %v80
  %3465 = vmatprep.subr.mxu0 0.0
  %3466 = vmatpush1.msra.mxu0 %v79
  %3467 = vmatprep.subr.mxu0 0.0
  %3468 = vmatpush1.msra.mxu0 %v78
  %3469 = vmatprep.subr.mxu0 0.0
  %3470 = vmatpush1.msra.mxu0 %v77
  %3471 = vmatprep.subr.mxu0 0.0
  %3472 = vmatpush1.msra.mxu0 %v76
  %3473 = vmatprep.subr.mxu0 0.0
  %3474 = vmatpush1.msra.mxu0 %v75
  %3475 = vmatprep.subr.mxu0 0.0
  %3476 = vmatpush2.msra.mxu0 %v106
  %3477 = vmatprep.subr.mxu0 0.0
  %3478 = vmatpush2.msra.mxu0 %v105
  %3479 = vmatprep.subr.mxu0 0.0
  %3480 = vmatpush2.msra.mxu0 %v104
  %3481 = vmatprep.subr.mxu0 0.0
  %3482 = vmatpush2.msra.mxu0 %v103
  %3483 = vmatprep.subr.mxu0 0.0
  %3484 = vmatpush2.msra.mxu0 %v102
  %3485 = vmatprep.subr.mxu0 0.0
  %3486 = vmatpush2.msra.mxu0 %v101
  %3487 = vmatprep.subr.mxu0 0.0
  %3488 = vmatpush2.msra.mxu0 %v100
  %3489 = vmatprep.subr.mxu0 0.0
  %3490 = vmatpush2.msra.mxu0 %v99
  %3491 = vmatprep.subr.mxu0 0.0
  %3492 = vmatpush2.msra.mxu0 %v98
  %3493 = vmatprep.subr.mxu0 0.0
  %3494 = vmatpush2.msra.mxu0 %v97
  %3495 = vmatprep.subr.mxu0 0.0
  %3496 = vmatpush2.msra.mxu0 %v96
  %3497 = vmatprep.subr.mxu0 0.0
  %3498 = vmatpush2.msra.mxu0 %v95
  %3499 = vmatprep.subr.mxu0 0.0
  %3500 = vmatpush2.msra.mxu0 %v94
  %3501 = vmatprep.subr.mxu0 0.0
  %3502 = vmatpush2.msra.mxu0 %v93
  %3503 = vmatprep.subr.mxu0 0.0
  %3504 = vmatpush2.msra.mxu0 %v92
  %3505 = vmatprep.subr.mxu0 0.0
  %3506 = vmatpush2.msra.mxu0 %v91
  %3507 = vmatprep.mubr.f32.mxu0 %v3296
  %3508 = vmatmul.mubr.f32.gmra.mxu0 %v3295
  %v3509 = vpop.f32.mrf.mxu0
  %v3510 = vadd.f32 %v3440, %v3509
  %v3511 = vpop.f32.mrf.mxu0
  %3512 = vdwg.mxu0
  %v3513 = vsel %vm356, %v3279, 0.0
  %v3514 = vsel %vm356, %v3287, 0.0
  %v3515 = vadd.f32 %v3513, %v3514
  %v3516 = vsel %vm356, %v3286, 0.0
  %v3517 = vadd.f32 %v3515, %v3516
  %v3518 = vsel %vm356, %v3288, 0.0
  %v3519 = vadd.f32 %v3517, %v3518
  %v3520 = vsel %vm356, %v3295, 0.0
  %v3521 = vadd.f32 %v3519, %v3520
  %v3522 = vsel %vm356, %v3296, 0.0
  %v3523 = vadd.f32 %v3521, %v3522
  %3524 = vadd.xlane.f32.xlu0 %v3523
  %v3525 = vpop.xlane.xlu0 %3524
  %v3526 = vsel %vm109, %v3525, %v3510
  %s3527 = scalar_lea.vmem %s2, 24
  %3528 = vst.msk [vmem:[%s3527] sm:$0x3] %vm371, %v3526
  // Predicated region
  $region10: #{tpu_custom_call.1} parent=0 // pred_check
    _
  $region11: #{tpu_custom_call.1} parent=0 // pred_check_branch
    %3530 = sbr.rel (0) target = $region13
  $region12: #{tpu_custom_call.1} parent=0 // pred_region
    _
  $region13: #{tpu_custom_call.1} parent=0 // pred_fallthru
    _
  // Predicated region
  $region14: #{tpu_custom_call.1} parent=0 // pred_check
    _
  $region15: #{tpu_custom_call.1} parent=0 // pred_check_branch
    %3532 = sbr.rel (0) target = $region17
  $region16: #{tpu_custom_call.1} parent=0 // pred_region
    _
  $region17: #{tpu_custom_call.1} parent=0 // pred_fallthru
    _

</llo_original>
